<compile_context>
chip_gen: v7x
topology: tpu7x:2x2x1
jax: 0.10.0
libtpu: 0.0.40
codegen_flags: <defaults>
</compile_context>

<pallas_src>
import jax
import jax.numpy as jnp
from jax import lax
from jax.experimental import pallas as pl
from jax.experimental.pallas import tpu as pltpu

C = 2048            # CBAM gate_channels (ResNet-50 feature dim)
RED = 16            # CBAM reduction ratio
CH = C // RED       # 128 hidden units in the shared MLP
H = W = 7           # spatial size after F.interpolate(size=(7, 7))
HW = H * W          # 49
K = 7               # SpatialGate conv kernel size
PAD = 3             # SpatialGate conv padding

CK = 512            # channel chunk processed per accumulation step inside the kernel
NCK = C // CK       # 4 chunks
TILE_N_MAX = 128    # batch rows per grid step


def _round_up(x, m):
    return ((x + m - 1) // m) * m


def _choose_tile_n(n):
    """Pick a batch tile that satisfies bf16 (16,128) tiling without padding inputs."""
    if n < 16:
        return n                                  # full-dim block (single grid step)
    half = -(-n // 2)                             # aim for >= 2 grid steps (v7x: 2 TCs)
    return max(16, min(TILE_N_MAX, _round_up(half, 16)))


# --------------------------------------------------------------------------------
# Fused kernel: ChannelGate MLP + SpatialGate (precomputed weight sums) + the three
# factored MSE partial sums for a (tile_n, C) tile of batch rows.
# --------------------------------------------------------------------------------
def attention_loss_kernel(n_ref, xf_ref, yf_ref, yhf_ref,
                          w1_ref, b1_ref, w2_ref, b2_ref, sw_ref, out_ref):
    tile_n = xf_ref.shape[0]

    # ChannelGate shared MLP, hidden layer.  Avg/max pools of the spatially-constant
    # y_hat map both equal the feature vector, so the MLP runs once; the 2x from summing
    # both pool paths is folded into w2/b2 on the host.
    h = jnp.dot(yhf_ref[...], w1_ref[...], preferred_element_type=jnp.float32) + b1_ref[...]
    h = jnp.maximum(h, 0.0).astype(jnp.bfloat16)          # (T, CH) bf16 for the 2nd MXU pass

    zero = jnp.zeros((tile_n, 1), jnp.float32)
    a1 = zero
    a2 = zero
    a3 = zero
    csum = zero
    cmax = jnp.full((tile_n, 1), -jnp.inf, jnp.float32)

    # Channel-chunked accumulation: keeps elementwise temporaries at (T, CK) instead of
    # (T, 2048) so they stay close to vreg/VMEM capacity (cuts spill/store traffic).
    for k in range(NCK):
        lo, hi = k * CK, (k + 1) * CK
        logits = (jnp.dot(h, w2_ref[:, lo:hi], preferred_element_type=jnp.float32)
                  + b2_ref[:, lo:hi])
        chs = jax.nn.sigmoid(logits)                      # channel scale (T, CK), f32
        yh = yhf_ref[:, lo:hi].astype(jnp.float32)
        g = yh * chs                                      # channel-gated features
        dy = yh - yf_ref[:, lo:hi].astype(jnp.float32)    # diffs in f32 (precision)
        dx = yh - xf_ref[:, lo:hi].astype(jnp.float32)
        t1 = dy * g
        t2 = dx * g
        a1 = a1 + jnp.sum(t1 * t1, axis=1, keepdims=True)
        a2 = a2 + jnp.sum(t2 * t2, axis=1, keepdims=True)
        a3 = a3 + jnp.sum(dy * dy, axis=1, keepdims=True)
        csum = csum + jnp.sum(g, axis=1, keepdims=True)
        cmax = jnp.maximum(cmax, jnp.max(g, axis=1, keepdims=True))

    cmean = csum * (1.0 / C)

    # SpatialGate 7x7 conv + folded eval-mode BN collapsed to a per-position affine
    # (the gated map is spatially constant).  sw rows: 0 = a*wsum_max, 1 = a*wsum_mean,
    # 2 = BN bias (set to -30 on lanes >= 49 so sigmoid ~ 0 masks the padding lanes).
    sw = sw_ref[...]                                      # (8, 128)
    conv_bn = cmax * sw[0:1, :] + cmean * sw[1:2, :] + sw[2:3, :]   # (T, 128)
    sp = jax.nn.sigmoid(conv_bn)
    spsum = jnp.sum(sp * sp, axis=1, keepdims=True)       # (T, 1) = sum_p sp[p]^2

    # Mask rows of the ragged last tile (inputs are NOT padded in HBM).
    rows = pl.program_id(0) * tile_n + lax.broadcasted_iota(jnp.int32, (tile_n, 1), 0)
    valid = rows < n_ref[0]
    s1 = jnp.sum(jnp.where(valid, a1 * spsum, 0.0), axis=0, keepdims=True)   # (1, 1)
    s2 = jnp.sum(jnp.where(valid, a2 * spsum, 0.0), axis=0, keepdims=True)
    s3 = jnp.sum(jnp.where(valid, a3 * jnp.float32(HW), 0.0), axis=0, keepdims=True)

    # One (8, 128) partial-sum block per grid step: sublane 0, lanes 0/1/2 hold the three
    # summed-square partials; everything else is zero.
    sub = lax.broadcasted_iota(jnp.int32, (8, 128), 0)
    lane = lax.broadcasted_iota(jnp.int32, (8, 128), 1)
    out_ref[...] = (jnp.where((sub == 0) & (lane == 0), s1, 0.0)
                    + jnp.where((sub == 0) & (lane == 1), s2, 0.0)
                    + jnp.where((sub == 0) & (lane == 2), s3, 0.0))


def attention_mse_partials(n_arr, x_feats, y_feats, yh_feats,
                           w1, b1, w2, b2, spatial_w, tile_n, grid_n):
    feat_spec = pl.BlockSpec((tile_n, C), lambda b, n_s: (b, 0))

    def const_spec(shape):
        return pl.BlockSpec(shape, lambda b, n_s: (0, 0))

    return pl.pallas_call(
        attention_loss_kernel,
        out_shape=jax.ShapeDtypeStruct((grid_n * 8, 128), jnp.float32),
        grid_spec=pltpu.PrefetchScalarGridSpec(
            num_scalar_prefetch=1,          # n (actual batch size) lands in SMEM
            grid=(grid_n,),
            in_specs=[feat_spec, feat_spec, feat_spec,
                      const_spec((C, CH)), const_spec((1, CH)),
                      const_spec((CH, C)), const_spec((1, C)),
                      const_spec((8, 128))],
            out_specs=pl.BlockSpec((8, 128), lambda b, n_s: (b, 0)),
        ),
        compiler_params=pltpu.CompilerParams(
            dimension_semantics=("parallel",),
            vmem_limit_bytes=32 * 1024 * 1024,
        ),
    )(n_arr, x_feats, y_feats, yh_feats, w1, b1, w2, b2, spatial_w)


# --------------------------------------------------------------------------------
# Host-side precomputation: per-position valid conv-weight sums with the eval-mode BN
# affine folded in (valid because the compressed map is spatially constant, so each
# in-bounds tap sees the same value and zero-padding only drops taps).  Lanes >= 49 get
# a -30 bias so sigmoid(conv_bn) ~ 0 there (no in-kernel lane mask needed).
# --------------------------------------------------------------------------------
def fold_spatial_params(conv_w, bn_ab):
    pos = jnp.arange(HW)
    pi = pos // W
    pj = pos % W
    offs = jnp.arange(K) - PAD
    ii = pi[:, None, None] + offs[None, :, None]       # (HW, K, 1)
    jj = pj[:, None, None] + offs[None, None, :]       # (HW, 1, K)
    valid = ((ii >= 0) & (ii < H) & (jj >= 0) & (jj < W)).astype(jnp.float32)
    valid = valid.reshape(HW, K * K)                   # (HW, 49)
    wsum = valid @ conv_w.T                            # (HW, 2): col0 -> max ch, col1 -> mean ch
    a = bn_ab[0]
    b = bn_ab[1]
    row_max = jnp.zeros((128,), jnp.float32).at[:HW].set(a * wsum[:, 0])
    row_mean = jnp.zeros((128,), jnp.float32).at[:HW].set(a * wsum[:, 1])
    lanes = jnp.arange(128)
    row_bias = jnp.where(lanes < HW, b, jnp.float32(-30.0)).astype(jnp.float32)
    out = jnp.zeros((8, 128), jnp.float32)
    return out.at[0].set(row_max).at[1].set(row_mean).at[2].set(row_bias)


# --------------------------------------------------------------------------------
# Parameters (deterministic, synthetic) and the full forward.
# --------------------------------------------------------------------------------
def cbam_params(key):
    k1, k2, k3 = jax.random.split(key, 3)
    w1 = jax.random.normal(k1, (C, CH), jnp.float32) * 0.02    # Linear(C, C//r).weight^T
    b1 = jnp.zeros((1, CH), jnp.float32)
    w2 = jax.random.normal(k2, (CH, C), jnp.float32) * 0.02    # Linear(C//r, C).weight^T
    b2 = jnp.zeros((1, C), jnp.float32)
    conv_w = jax.random.normal(k3, (2, K * K), jnp.float32) * 0.05  # Conv2d(2,1,7,bias=False)
    # BatchNorm2d(1) eval mode: gamma=1, beta=0, running_mean=0, running_var=1, eps=1e-5
    gamma, beta, rmean, rvar, eps = 1.0, 0.0, 0.0, 1.0, 1e-5
    a = gamma / jnp.sqrt(jnp.float32(rvar + eps))
    bn_ab = jnp.array([a, beta - a * rmean], jnp.float32)
    return dict(w1=w1, b1=b1, w2=w2, b2=b2, conv_w=conv_w, bn_ab=bn_ab)


@jax.jit
def attention_loss(y_hat_feats, y_feats, x_feats, params):
    n = y_hat_feats.shape[0]
    tile_n = _choose_tile_n(n)
    grid_n = -(-n // tile_n)

    # Stream the three (N, 2048) feature tensors and the MXU weights as bf16 (halves HBM
    # traffic / input VMEM; bf16-native MXU).  Diffs/reductions are f32 in-kernel.
    xf = x_feats.astype(jnp.bfloat16)
    yf = y_feats.astype(jnp.bfloat16)
    yhf = y_hat_feats.astype(jnp.bfloat16)
    w1 = params["w1"].astype(jnp.bfloat16)
    b1 = params["b1"]
    w2 = (2.0 * params["w2"]).astype(jnp.bfloat16)   # fold avg+max pool factor of 2
    b2 = 2.0 * params["b2"]
    spatial_w = fold_spatial_params(params["conv_w"], params["bn_ab"])

    n_arr = jnp.array([n], jnp.int32)
    partials = attention_mse_partials(n_arr, xf, yf, yhf, w1, b1, w2, b2,
                                      spatial_w, tile_n, grid_n)

    sums = jnp.sum(partials[:, :3], axis=0)          # (3,) — one nonzero row per grid step
    denom = jnp.float32(n * C * HW)
    mse_yhat_y = sums[0] / denom     # F.mse_loss(y_hat_attention, y_attention)
    mse_yhat_x = sums[1] / denom     # F.mse_loss(y_hat_attention, x_attention)
    mse_feats = sums[2] / denom      # F.mse_loss(y_hat_feats_map, y_feats_map)
    loss_cbam = mse_yhat_y + mse_yhat_x
    sim_improvement = mse_feats - mse_yhat_y
    return loss_cbam, sim_improvement


def extract_feats_stub(img, proj):
    # TODO(synk): stand-in for extract_feats (interpolate->frozen ResNet-50->normalize->
    # squeeze); the pretrained backbone checkpoint has no self-contained Pallas equivalent.
    n = img.shape[0]
    v = img.reshape(n, -1) @ proj
    v = v / jnp.linalg.norm(v, axis=1, keepdims=True)
    return v.astype(jnp.bfloat16)


if __name__ == "__main__":
    key = jax.random.PRNGKey(0)
    kp, kproj, kx, ky, kyh = jax.random.split(key, 5)
    params = cbam_params(kp)

    # Small example images (PyTorch forward takes NCHW images; x is single channel,
    # repeat_interleave(3) only matters for the stubbed ResNet backbone).
    N, IC, IH, IW = 2, 1, 16, 16
    x = jax.random.normal(kx, (N, IC, IH, IW), jnp.float32)
    y = jax.random.normal(ky, (N, IC, IH, IW), jnp.float32)
    y_hat = jax.random.normal(kyh, (N, IC, IH, IW), jnp.float32)

    proj = jax.random.normal(kproj, (IC * IH * IW, C), jnp.float32) * 0.1
    x_feats = extract_feats_stub(x, proj)
    y_feats = extract_feats_stub(y, proj)
    y_hat_feats = extract_feats_stub(y_hat, proj)

    loss_cbam, sim_improvement = attention_loss(y_hat_feats, y_feats, x_feats, params)
    loss_cbam = jax.block_until_ready(loss_cbam)
    sim_improvement = jax.block_until_ready(sim_improvement)
    id_logs = {"sim_improvement": float(sim_improvement)}
    _result = (float(loss_cbam), float(sim_improvement), id_logs)
    print("KERNEL_OK")
</pallas_src>

<mosaic_0001>
module attributes {stable_mosaic.version = 11 : i64} {
  func.func @attention_loss_kernel(%arg0: i32, %arg1: memref<1xi32, #tpu.memory_space<smem>>, %arg2: memref<2x2048xbf16, #tpu.memory_space<vmem>>, %arg3: memref<2x2048xbf16, #tpu.memory_space<vmem>>, %arg4: memref<2x2048xbf16, #tpu.memory_space<vmem>>, %arg5: memref<2048x128xbf16, #tpu.memory_space<vmem>>, %arg6: memref<1x128xf32, #tpu.memory_space<vmem>>, %arg7: memref<128x2048xbf16, #tpu.memory_space<vmem>>, %arg8: memref<1x2048xf32, #tpu.memory_space<vmem>>, %arg9: memref<8x128xf32, #tpu.memory_space<vmem>>, %arg10: memref<8x128xf32, #tpu.memory_space<vmem>>) attributes {dimension_semantics = [#tpu.dimension_semantics<parallel>], iteration_bounds = array<i64: 1>, scalar_prefetch = 1 : i64, scratch_operands = 0 : i64, tpu.core_type = #tpu.core_type<tc>, window_params = [{transform_indices = @transform_0, window_bounds = array<i64: 2, 2048>}, {transform_indices = @transform_1, window_bounds = array<i64: 2, 2048>}, {transform_indices = @transform_2, window_bounds = array<i64: 2, 2048>}, {pipeline_mode = #tpu.pipeline_mode<synchronous>, transform_indices = @transform_3, window_bounds = array<i64: 2048, 128>}, {pipeline_mode = #tpu.pipeline_mode<synchronous>, transform_indices = @transform_4, window_bounds = array<i64: 1, 128>}, {pipeline_mode = #tpu.pipeline_mode<synchronous>, transform_indices = @transform_5, window_bounds = array<i64: 128, 2048>}, {pipeline_mode = #tpu.pipeline_mode<synchronous>, transform_indices = @transform_6, window_bounds = array<i64: 1, 2048>}, {pipeline_mode = #tpu.pipeline_mode<synchronous>, transform_indices = @transform_7, window_bounds = array<i64: 8, 128>}, {transform_indices = @transform_8, window_bounds = array<i64: 8, 128>}]} {
    %c0 = arith.constant 0 : index
    %c0_0 = arith.constant 0 : index
    %0 = vector.load %arg4[%c0, %c0_0] : memref<2x2048xbf16, #tpu.memory_space<vmem>>, vector<2x2048xbf16>
    %c0_1 = arith.constant 0 : index
    %c0_2 = arith.constant 0 : index
    %1 = vector.load %arg5[%c0_1, %c0_2] : memref<2048x128xbf16, #tpu.memory_space<vmem>>, vector<2048x128xbf16>
    %cst = arith.constant dense<0.000000e+00> : vector<2x128xf32>
    %2 = tpu.matmul %0, %1, %cst {dimension_numbers = #tpu.dot_dimension_numbers<[1], [0], [0], [1], [0, 0, 1, 1], [], []>} : vector<2x2048xbf16>, vector<2048x128xbf16>, vector<2x128xf32> -> vector<2x128xf32>
    %c0_3 = arith.constant 0 : index
    %c0_4 = arith.constant 0 : index
    %3 = vector.load %arg6[%c0_3, %c0_4] : memref<1x128xf32, #tpu.memory_space<vmem>>, vector<1x128xf32>
    %4 = vector.broadcast %3 : vector<1x128xf32> to vector<2x128xf32>
    %5 = arith.addf %2, %4 : vector<2x128xf32>
    %cst_5 = arith.constant 0.000000e+00 : f32
    %6 = vector.broadcast %cst_5 : f32 to vector<2x128xf32>
    %7 = arith.maximumf %5, %6 : vector<2x128xf32>
    %8 = arith.truncf %7 : vector<2x128xf32> to vector<2x128xbf16>
    %cst_6 = arith.constant 0.000000e+00 : f32
    %9 = vector.broadcast %cst_6 : f32 to vector<2x1xf32>
    %cst_7 = arith.constant 0xFF800000 : f32
    %10 = vector.broadcast %cst_7 : f32 to vector<2x1xf32>
    %c0_8 = arith.constant 0 : index
    %c0_9 = arith.constant 0 : index
    %11 = vector.load %arg7[%c0_8, %c0_9] : memref<128x2048xbf16, #tpu.memory_space<vmem>>, vector<128x512xbf16>
    %cst_10 = arith.constant dense<0.000000e+00> : vector<2x512xf32>
    %12 = tpu.matmul %8, %11, %cst_10 {dimension_numbers = #tpu.dot_dimension_numbers<[1], [0], [0], [1], [0, 0, 1, 1], [], []>} : vector<2x128xbf16>, vector<128x512xbf16>, vector<2x512xf32> -> vector<2x512xf32>
    %c0_11 = arith.constant 0 : index
    %c0_12 = arith.constant 0 : index
    %13 = vector.load %arg8[%c0_11, %c0_12] : memref<1x2048xf32, #tpu.memory_space<vmem>>, vector<1x512xf32>
    %14 = vector.broadcast %13 : vector<1x512xf32> to vector<2x512xf32>
    %15 = arith.addf %12, %14 : vector<2x512xf32>
    %16 = arith.negf %15 : vector<2x512xf32>
    %17 = math.exp %16 : vector<2x512xf32>
    %cst_13 = arith.constant 1.000000e+00 : f32
    %18 = vector.broadcast %cst_13 : f32 to vector<2x512xf32>
    %19 = arith.addf %18, %17 : vector<2x512xf32>
    %20 = arith.divf %18, %19 : vector<2x512xf32>
    %c0_14 = arith.constant 0 : index
    %c0_15 = arith.constant 0 : index
    %21 = vector.load %arg4[%c0_14, %c0_15] : memref<2x2048xbf16, #tpu.memory_space<vmem>>, vector<2x512xbf16>
    %22 = arith.extf %21 : vector<2x512xbf16> to vector<2x512xf32>
    %23 = arith.mulf %22, %20 : vector<2x512xf32>
    %c0_16 = arith.constant 0 : index
    %c0_17 = arith.constant 0 : index
    %24 = vector.load %arg3[%c0_16, %c0_17] : memref<2x2048xbf16, #tpu.memory_space<vmem>>, vector<2x512xbf16>
    %25 = arith.extf %24 : vector<2x512xbf16> to vector<2x512xf32>
    %26 = arith.subf %22, %25 : vector<2x512xf32>
    %c0_18 = arith.constant 0 : index
    %c0_19 = arith.constant 0 : index
    %27 = vector.load %arg2[%c0_18, %c0_19] : memref<2x2048xbf16, #tpu.memory_space<vmem>>, vector<2x512xbf16>
    %28 = arith.extf %27 : vector<2x512xbf16> to vector<2x512xf32>
    %29 = arith.subf %22, %28 : vector<2x512xf32>
    %30 = arith.mulf %26, %23 : vector<2x512xf32>
    %31 = arith.mulf %29, %23 : vector<2x512xf32>
    %32 = arith.mulf %30, %30 : vector<2x512xf32>
    %cst_20 = arith.constant dense<0.000000e+00> : vector<2xf32>
    %33 = vector.multi_reduction <add>, %32, %cst_20 [1] : vector<2x512xf32> to vector<2xf32>
    %34 = vector.shape_cast %33 : vector<2xf32> to vector<2x1xf32>
    %35 = arith.addf %9, %34 : vector<2x1xf32>
    %36 = arith.mulf %31, %31 : vector<2x512xf32>
    %cst_21 = arith.constant dense<0.000000e+00> : vector<2xf32>
    %37 = vector.multi_reduction <add>, %36, %cst_21 [1] : vector<2x512xf32> to vector<2xf32>
    %38 = vector.shape_cast %37 : vector<2xf32> to vector<2x1xf32>
    %39 = arith.addf %9, %38 : vector<2x1xf32>
    %40 = arith.mulf %26, %26 : vector<2x512xf32>
    %cst_22 = arith.constant dense<0.000000e+00> : vector<2xf32>
    %41 = vector.multi_reduction <add>, %40, %cst_22 [1] : vector<2x512xf32> to vector<2xf32>
    %42 = vector.shape_cast %41 : vector<2xf32> to vector<2x1xf32>
    %43 = arith.addf %9, %42 : vector<2x1xf32>
    %cst_23 = arith.constant dense<0.000000e+00> : vector<2xf32>
    %44 = vector.multi_reduction <add>, %23, %cst_23 [1] : vector<2x512xf32> to vector<2xf32>
    %45 = vector.shape_cast %44 : vector<2xf32> to vector<2x1xf32>
    %46 = arith.addf %9, %45 : vector<2x1xf32>
    %cst_24 = arith.constant dense<0xFF800000> : vector<2xf32>
    %47 = vector.multi_reduction <maximumf>, %23, %cst_24 [1] : vector<2x512xf32> to vector<2xf32>
    %48 = vector.shape_cast %47 : vector<2xf32> to vector<2x1xf32>
    %49 = arith.maximumf %10, %48 : vector<2x1xf32>
    %c0_25 = arith.constant 0 : index
    %c512 = arith.constant 512 : index
    %50 = vector.load %arg7[%c0_25, %c512] : memref<128x2048xbf16, #tpu.memory_space<vmem>>, vector<128x512xbf16>
    %cst_26 = arith.constant dense<0.000000e+00> : vector<2x512xf32>
    %51 = tpu.matmul %8, %50, %cst_26 {dimension_numbers = #tpu.dot_dimension_numbers<[1], [0], [0], [1], [0, 0, 1, 1], [], []>} : vector<2x128xbf16>, vector<128x512xbf16>, vector<2x512xf32> -> vector<2x512xf32>
    %c0_27 = arith.constant 0 : index
    %c512_28 = arith.constant 512 : index
    %52 = vector.load %arg8[%c0_27, %c512_28] : memref<1x2048xf32, #tpu.memory_space<vmem>>, vector<1x512xf32>
    %53 = vector.broadcast %52 : vector<1x512xf32> to vector<2x512xf32>
    %54 = arith.addf %51, %53 : vector<2x512xf32>
    %55 = arith.negf %54 : vector<2x512xf32>
    %56 = math.exp %55 : vector<2x512xf32>
    %cst_29 = arith.constant 1.000000e+00 : f32
    %57 = vector.broadcast %cst_29 : f32 to vector<2x512xf32>
    %58 = arith.addf %57, %56 : vector<2x512xf32>
    %59 = arith.divf %57, %58 : vector<2x512xf32>
    %c0_30 = arith.constant 0 : index
    %c512_31 = arith.constant 512 : index
    %60 = vector.load %arg4[%c0_30, %c512_31] : memref<2x2048xbf16, #tpu.memory_space<vmem>>, vector<2x512xbf16>
    %61 = arith.extf %60 : vector<2x512xbf16> to vector<2x512xf32>
    %62 = arith.mulf %61, %59 : vector<2x512xf32>
    %c0_32 = arith.constant 0 : index
    %c512_33 = arith.constant 512 : index
    %63 = vector.load %arg3[%c0_32, %c512_33] : memref<2x2048xbf16, #tpu.memory_space<vmem>>, vector<2x512xbf16>
    %64 = arith.extf %63 : vector<2x512xbf16> to vector<2x512xf32>
    %65 = arith.subf %61, %64 : vector<2x512xf32>
    %c0_34 = arith.constant 0 : index
    %c512_35 = arith.constant 512 : index
    %66 = vector.load %arg2[%c0_34, %c512_35] : memref<2x2048xbf16, #tpu.memory_space<vmem>>, vector<2x512xbf16>
    %67 = arith.extf %66 : vector<2x512xbf16> to vector<2x512xf32>
    %68 = arith.subf %61, %67 : vector<2x512xf32>
    %69 = arith.mulf %65, %62 : vector<2x512xf32>
    %70 = arith.mulf %68, %62 : vector<2x512xf32>
    %71 = arith.mulf %69, %69 : vector<2x512xf32>
    %cst_36 = arith.constant dense<0.000000e+00> : vector<2xf32>
    %72 = vector.multi_reduction <add>, %71, %cst_36 [1] : vector<2x512xf32> to vector<2xf32>
    %73 = vector.shape_cast %72 : vector<2xf32> to vector<2x1xf32>
    %74 = arith.addf %35, %73 : vector<2x1xf32>
    %75 = arith.mulf %70, %70 : vector<2x512xf32>
    %cst_37 = arith.constant dense<0.000000e+00> : vector<2xf32>
    %76 = vector.multi_reduction <add>, %75, %cst_37 [1] : vector<2x512xf32> to vector<2xf32>
    %77 = vector.shape_cast %76 : vector<2xf32> to vector<2x1xf32>
    %78 = arith.addf %39, %77 : vector<2x1xf32>
    %79 = arith.mulf %65, %65 : vector<2x512xf32>
    %cst_38 = arith.constant dense<0.000000e+00> : vector<2xf32>
    %80 = vector.multi_reduction <add>, %79, %cst_38 [1] : vector<2x512xf32> to vector<2xf32>
    %81 = vector.shape_cast %80 : vector<2xf32> to vector<2x1xf32>
    %82 = arith.addf %43, %81 : vector<2x1xf32>
    %cst_39 = arith.constant dense<0.000000e+00> : vector<2xf32>
    %83 = vector.multi_reduction <add>, %62, %cst_39 [1] : vector<2x512xf32> to vector<2xf32>
    %84 = vector.shape_cast %83 : vector<2xf32> to vector<2x1xf32>
    %85 = arith.addf %46, %84 : vector<2x1xf32>
    %cst_40 = arith.constant dense<0xFF800000> : vector<2xf32>
    %86 = vector.multi_reduction <maximumf>, %62, %cst_40 [1] : vector<2x512xf32> to vector<2xf32>
    %87 = vector.shape_cast %86 : vector<2xf32> to vector<2x1xf32>
    %88 = arith.maximumf %49, %87 : vector<2x1xf32>
    %c0_41 = arith.constant 0 : index
    %c1024 = arith.constant 1024 : index
    %89 = vector.load %arg7[%c0_41, %c1024] : memref<128x2048xbf16, #tpu.memory_space<vmem>>, vector<128x512xbf16>
    %cst_42 = arith.constant dense<0.000000e+00> : vector<2x512xf32>
    %90 = tpu.matmul %8, %89, %cst_42 {dimension_numbers = #tpu.dot_dimension_numbers<[1], [0], [0], [1], [0, 0, 1, 1], [], []>} : vector<2x128xbf16>, vector<128x512xbf16>, vector<2x512xf32> -> vector<2x512xf32>
    %c0_43 = arith.constant 0 : index
    %c1024_44 = arith.constant 1024 : index
    %91 = vector.load %arg8[%c0_43, %c1024_44] : memref<1x2048xf32, #tpu.memory_space<vmem>>, vector<1x512xf32>
    %92 = vector.broadcast %91 : vector<1x512xf32> to vector<2x512xf32>
    %93 = arith.addf %90, %92 : vector<2x512xf32>
    %94 = arith.negf %93 : vector<2x512xf32>
    %95 = math.exp %94 : vector<2x512xf32>
    %cst_45 = arith.constant 1.000000e+00 : f32
    %96 = vector.broadcast %cst_45 : f32 to vector<2x512xf32>
    %97 = arith.addf %96, %95 : vector<2x512xf32>
    %98 = arith.divf %96, %97 : vector<2x512xf32>
    %c0_46 = arith.constant 0 : index
    %c1024_47 = arith.constant 1024 : index
    %99 = vector.load %arg4[%c0_46, %c1024_47] : memref<2x2048xbf16, #tpu.memory_space<vmem>>, vector<2x512xbf16>
    %100 = arith.extf %99 : vector<2x512xbf16> to vector<2x512xf32>
    %101 = arith.mulf %100, %98 : vector<2x512xf32>
    %c0_48 = arith.constant 0 : index
    %c1024_49 = arith.constant 1024 : index
    %102 = vector.load %arg3[%c0_48, %c1024_49] : memref<2x2048xbf16, #tpu.memory_space<vmem>>, vector<2x512xbf16>
    %103 = arith.extf %102 : vector<2x512xbf16> to vector<2x512xf32>
    %104 = arith.subf %100, %103 : vector<2x512xf32>
    %c0_50 = arith.constant 0 : index
    %c1024_51 = arith.constant 1024 : index
    %105 = vector.load %arg2[%c0_50, %c1024_51] : memref<2x2048xbf16, #tpu.memory_space<vmem>>, vector<2x512xbf16>
    %106 = arith.extf %105 : vector<2x512xbf16> to vector<2x512xf32>
    %107 = arith.subf %100, %106 : vector<2x512xf32>
    %108 = arith.mulf %104, %101 : vector<2x512xf32>
    %109 = arith.mulf %107, %101 : vector<2x512xf32>
    %110 = arith.mulf %108, %108 : vector<2x512xf32>
    %cst_52 = arith.constant dense<0.000000e+00> : vector<2xf32>
    %111 = vector.multi_reduction <add>, %110, %cst_52 [1] : vector<2x512xf32> to vector<2xf32>
    %112 = vector.shape_cast %111 : vector<2xf32> to vector<2x1xf32>
    %113 = arith.addf %74, %112 : vector<2x1xf32>
    %114 = arith.mulf %109, %109 : vector<2x512xf32>
    %cst_53 = arith.constant dense<0.000000e+00> : vector<2xf32>
    %115 = vector.multi_reduction <add>, %114, %cst_53 [1] : vector<2x512xf32> to vector<2xf32>
    %116 = vector.shape_cast %115 : vector<2xf32> to vector<2x1xf32>
    %117 = arith.addf %78, %116 : vector<2x1xf32>
    %118 = arith.mulf %104, %104 : vector<2x512xf32>
    %cst_54 = arith.constant dense<0.000000e+00> : vector<2xf32>
    %119 = vector.multi_reduction <add>, %118, %cst_54 [1] : vector<2x512xf32> to vector<2xf32>
    %120 = vector.shape_cast %119 : vector<2xf32> to vector<2x1xf32>
    %121 = arith.addf %82, %120 : vector<2x1xf32>
    %cst_55 = arith.constant dense<0.000000e+00> : vector<2xf32>
    %122 = vector.multi_reduction <add>, %101, %cst_55 [1] : vector<2x512xf32> to vector<2xf32>
    %123 = vector.shape_cast %122 : vector<2xf32> to vector<2x1xf32>
    %124 = arith.addf %85, %123 : vector<2x1xf32>
    %cst_56 = arith.constant dense<0xFF800000> : vector<2xf32>
    %125 = vector.multi_reduction <maximumf>, %101, %cst_56 [1] : vector<2x512xf32> to vector<2xf32>
    %126 = vector.shape_cast %125 : vector<2xf32> to vector<2x1xf32>
    %127 = arith.maximumf %88, %126 : vector<2x1xf32>
    %c0_57 = arith.constant 0 : index
    %c1536 = arith.constant 1536 : index
    %128 = vector.load %arg7[%c0_57, %c1536] : memref<128x2048xbf16, #tpu.memory_space<vmem>>, vector<128x512xbf16>
    %cst_58 = arith.constant dense<0.000000e+00> : vector<2x512xf32>
    %129 = tpu.matmul %8, %128, %cst_58 {dimension_numbers = #tpu.dot_dimension_numbers<[1], [0], [0], [1], [0, 0, 1, 1], [], []>} : vector<2x128xbf16>, vector<128x512xbf16>, vector<2x512xf32> -> vector<2x512xf32>
    %c0_59 = arith.constant 0 : index
    %c1536_60 = arith.constant 1536 : index
    %130 = vector.load %arg8[%c0_59, %c1536_60] : memref<1x2048xf32, #tpu.memory_space<vmem>>, vector<1x512xf32>
    %131 = vector.broadcast %130 : vector<1x512xf32> to vector<2x512xf32>
    %132 = arith.addf %129, %131 : vector<2x512xf32>
    %133 = arith.negf %132 : vector<2x512xf32>
    %134 = math.exp %133 : vector<2x512xf32>
    %cst_61 = arith.constant 1.000000e+00 : f32
    %135 = vector.broadcast %cst_61 : f32 to vector<2x512xf32>
    %136 = arith.addf %135, %134 : vector<2x512xf32>
    %137 = arith.divf %135, %136 : vector<2x512xf32>
    %c0_62 = arith.constant 0 : index
    %c1536_63 = arith.constant 1536 : index
    %138 = vector.load %arg4[%c0_62, %c1536_63] : memref<2x2048xbf16, #tpu.memory_space<vmem>>, vector<2x512xbf16>
    %139 = arith.extf %138 : vector<2x512xbf16> to vector<2x512xf32>
    %140 = arith.mulf %139, %137 : vector<2x512xf32>
    %c0_64 = arith.constant 0 : index
    %c1536_65 = arith.constant 1536 : index
    %141 = vector.load %arg3[%c0_64, %c1536_65] : memref<2x2048xbf16, #tpu.memory_space<vmem>>, vector<2x512xbf16>
    %142 = arith.extf %141 : vector<2x512xbf16> to vector<2x512xf32>
    %143 = arith.subf %139, %142 : vector<2x512xf32>
    %c0_66 = arith.constant 0 : index
    %c1536_67 = arith.constant 1536 : index
    %144 = vector.load %arg2[%c0_66, %c1536_67] : memref<2x2048xbf16, #tpu.memory_space<vmem>>, vector<2x512xbf16>
    %145 = arith.extf %144 : vector<2x512xbf16> to vector<2x512xf32>
    %146 = arith.subf %139, %145 : vector<2x512xf32>
    %147 = arith.mulf %143, %140 : vector<2x512xf32>
    %148 = arith.mulf %146, %140 : vector<2x512xf32>
    %149 = arith.mulf %147, %147 : vector<2x512xf32>
    %cst_68 = arith.constant dense<0.000000e+00> : vector<2xf32>
    %150 = vector.multi_reduction <add>, %149, %cst_68 [1] : vector<2x512xf32> to vector<2xf32>
    %151 = vector.shape_cast %150 : vector<2xf32> to vector<2x1xf32>
    %152 = arith.addf %113, %151 : vector<2x1xf32>
    %153 = arith.mulf %148, %148 : vector<2x512xf32>
    %cst_69 = arith.constant dense<0.000000e+00> : vector<2xf32>
    %154 = vector.multi_reduction <add>, %153, %cst_69 [1] : vector<2x512xf32> to vector<2xf32>
    %155 = vector.shape_cast %154 : vector<2xf32> to vector<2x1xf32>
    %156 = arith.addf %117, %155 : vector<2x1xf32>
    %157 = arith.mulf %143, %143 : vector<2x512xf32>
    %cst_70 = arith.constant dense<0.000000e+00> : vector<2xf32>
    %158 = vector.multi_reduction <add>, %157, %cst_70 [1] : vector<2x512xf32> to vector<2xf32>
    %159 = vector.shape_cast %158 : vector<2xf32> to vector<2x1xf32>
    %160 = arith.addf %121, %159 : vector<2x1xf32>
    %cst_71 = arith.constant dense<0.000000e+00> : vector<2xf32>
    %161 = vector.multi_reduction <add>, %140, %cst_71 [1] : vector<2x512xf32> to vector<2xf32>
    %162 = vector.shape_cast %161 : vector<2xf32> to vector<2x1xf32>
    %163 = arith.addf %124, %162 : vector<2x1xf32>
    %cst_72 = arith.constant dense<0xFF800000> : vector<2xf32>
    %164 = vector.multi_reduction <maximumf>, %140, %cst_72 [1] : vector<2x512xf32> to vector<2xf32>
    %165 = vector.shape_cast %164 : vector<2xf32> to vector<2x1xf32>
    %166 = arith.maximumf %127, %165 : vector<2x1xf32>
    %cst_73 = arith.constant 4.8828125E-4 : f32
    %167 = vector.broadcast %cst_73 : f32 to vector<2x1xf32>
    %168 = arith.mulf %163, %167 : vector<2x1xf32>
    %c0_74 = arith.constant 0 : index
    %c0_75 = arith.constant 0 : index
    %169 = vector.load %arg9[%c0_74, %c0_75] : memref<8x128xf32, #tpu.memory_space<vmem>>, vector<8x128xf32>
    %170 = vector.extract_strided_slice %169 {offsets = [0, 0], sizes = [1, 128], strides = [1, 1]} : vector<8x128xf32> to vector<1x128xf32>
    %171 = vector.broadcast %166 : vector<2x1xf32> to vector<2x128xf32>
    %172 = vector.broadcast %170 : vector<1x128xf32> to vector<2x128xf32>
    %173 = arith.mulf %171, %172 : vector<2x128xf32>
    %174 = vector.extract_strided_slice %169 {offsets = [1, 0], sizes = [1, 128], strides = [1, 1]} : vector<8x128xf32> to vector<1x128xf32>
    %175 = vector.broadcast %168 : vector<2x1xf32> to vector<2x128xf32>
    %176 = vector.broadcast %174 : vector<1x128xf32> to vector<2x128xf32>
    %177 = arith.mulf %175, %176 : vector<2x128xf32>
    %178 = arith.addf %173, %177 : vector<2x128xf32>
    %179 = vector.extract_strided_slice %169 {offsets = [2, 0], sizes = [1, 128], strides = [1, 1]} : vector<8x128xf32> to vector<1x128xf32>
    %180 = vector.broadcast %179 : vector<1x128xf32> to vector<2x128xf32>
    %181 = arith.addf %178, %180 : vector<2x128xf32>
    %182 = arith.negf %181 : vector<2x128xf32>
    %183 = math.exp %182 : vector<2x128xf32>
    %cst_76 = arith.constant 1.000000e+00 : f32
    %184 = vector.broadcast %cst_76 : f32 to vector<2x128xf32>
    %185 = arith.addf %184, %183 : vector<2x128xf32>
    %186 = arith.divf %184, %185 : vector<2x128xf32>
    %187 = arith.mulf %186, %186 : vector<2x128xf32>
    %cst_77 = arith.constant dense<0.000000e+00> : vector<2xf32>
    %188 = vector.multi_reduction <add>, %187, %cst_77 [1] : vector<2x128xf32> to vector<2xf32>
    %189 = vector.shape_cast %188 : vector<2xf32> to vector<2x1xf32>
    %c2_i32 = arith.constant 2 : i32
    %190 = arith.muli %arg0, %c2_i32 : i32
    %191 = tpu.iota {dimensions = array<i32: 0>} : vector<2x1xi32>
    %192 = vector.broadcast %190 : i32 to vector<2x1xi32>
    %193 = arith.addi %192, %191 : vector<2x1xi32>
    %c0_78 = arith.constant 0 : index
    %194 = memref.load %arg1[%c0_78] : memref<1xi32, #tpu.memory_space<smem>>
    %195 = vector.broadcast %194 : i32 to vector<2x1xi32>
    %196 = arith.cmpi slt, %193, %195 : vector<2x1xi32>
    %197 = arith.mulf %152, %189 : vector<2x1xf32>
    %cst_79 = arith.constant 0.000000e+00 : f32
    %198 = vector.broadcast %cst_79 : f32 to vector<2x1xf32>
    %199 = arith.select %196, %197, %198 : vector<2x1xi1>, vector<2x1xf32>
    %cst_80 = arith.constant dense<0.000000e+00> : vector<1xf32>
    %200 = vector.multi_reduction <add>, %199, %cst_80 [0] : vector<2x1xf32> to vector<1xf32>
    %201 = vector.shape_cast %200 : vector<1xf32> to vector<1x1xf32>
    %202 = arith.mulf %156, %189 : vector<2x1xf32>
    %cst_81 = arith.constant 0.000000e+00 : f32
    %203 = vector.broadcast %cst_81 : f32 to vector<2x1xf32>
    %204 = arith.select %196, %202, %203 : vector<2x1xi1>, vector<2x1xf32>
    %cst_82 = arith.constant dense<0.000000e+00> : vector<1xf32>
    %205 = vector.multi_reduction <add>, %204, %cst_82 [0] : vector<2x1xf32> to vector<1xf32>
    %206 = vector.shape_cast %205 : vector<1xf32> to vector<1x1xf32>
    %cst_83 = arith.constant 4.900000e+01 : f32
    %207 = vector.broadcast %cst_83 : f32 to vector<2x1xf32>
    %208 = arith.mulf %160, %207 : vector<2x1xf32>
    %cst_84 = arith.constant 0.000000e+00 : f32
    %209 = vector.broadcast %cst_84 : f32 to vector<2x1xf32>
    %210 = arith.select %196, %208, %209 : vector<2x1xi1>, vector<2x1xf32>
    %cst_85 = arith.constant dense<0.000000e+00> : vector<1xf32>
    %211 = vector.multi_reduction <add>, %210, %cst_85 [0] : vector<2x1xf32> to vector<1xf32>
    %212 = vector.shape_cast %211 : vector<1xf32> to vector<1x1xf32>
    %213 = tpu.iota {dimensions = array<i32: 0>} : vector<8x128xi32>
    %214 = tpu.iota {dimensions = array<i32: 1>} : vector<8x128xi32>
    %c0_i32 = arith.constant 0 : i32
    %215 = vector.broadcast %c0_i32 : i32 to vector<8x128xi32>
    %216 = arith.cmpi eq, %213, %215 : vector<8x128xi32>
    %c0_i32_86 = arith.constant 0 : i32
    %217 = vector.broadcast %c0_i32_86 : i32 to vector<8x128xi32>
    %218 = arith.cmpi eq, %214, %217 : vector<8x128xi32>
    %219 = arith.andi %216, %218 : vector<8x128xi1>
    %cst_87 = arith.constant 0.000000e+00 : f32
    %220 = vector.shape_cast %201 : vector<1x1xf32> to vector<1x1xf32>
    %221 = vector.broadcast %220 : vector<1x1xf32> to vector<8x128xf32>
    %222 = vector.broadcast %cst_87 : f32 to vector<8x128xf32>
    %223 = arith.select %219, %221, %222 : vector<8x128xi1>, vector<8x128xf32>
    %c0_i32_88 = arith.constant 0 : i32
    %224 = vector.broadcast %c0_i32_88 : i32 to vector<8x128xi32>
    %225 = arith.cmpi eq, %213, %224 : vector<8x128xi32>
    %c1_i32 = arith.constant 1 : i32
    %226 = vector.broadcast %c1_i32 : i32 to vector<8x128xi32>
    %227 = arith.cmpi eq, %214, %226 : vector<8x128xi32>
    %228 = arith.andi %225, %227 : vector<8x128xi1>
    %cst_89 = arith.constant 0.000000e+00 : f32
    %229 = vector.shape_cast %206 : vector<1x1xf32> to vector<1x1xf32>
    %230 = vector.broadcast %229 : vector<1x1xf32> to vector<8x128xf32>
    %231 = vector.broadcast %cst_89 : f32 to vector<8x128xf32>
    %232 = arith.select %228, %230, %231 : vector<8x128xi1>, vector<8x128xf32>
    %233 = arith.addf %223, %232 : vector<8x128xf32>
    %c0_i32_90 = arith.constant 0 : i32
    %234 = vector.broadcast %c0_i32_90 : i32 to vector<8x128xi32>
    %235 = arith.cmpi eq, %213, %234 : vector<8x128xi32>
    %c2_i32_91 = arith.constant 2 : i32
    %236 = vector.broadcast %c2_i32_91 : i32 to vector<8x128xi32>
    %237 = arith.cmpi eq, %214, %236 : vector<8x128xi32>
    %238 = arith.andi %235, %237 : vector<8x128xi1>
    %cst_92 = arith.constant 0.000000e+00 : f32
    %239 = vector.shape_cast %212 : vector<1x1xf32> to vector<1x1xf32>
    %240 = vector.broadcast %239 : vector<1x1xf32> to vector<8x128xf32>
    %241 = vector.broadcast %cst_92 : f32 to vector<8x128xf32>
    %242 = arith.select %238, %240, %241 : vector<8x128xi1>, vector<8x128xf32>
    %243 = arith.addf %233, %242 : vector<8x128xf32>
    %c0_93 = arith.constant 0 : index
    %c0_94 = arith.constant 0 : index
    %244 = vector.load %arg10[%c0_93, %c0_94] : memref<8x128xf32, #tpu.memory_space<vmem>>, vector<8x128xf32>
    tpu.vector_store %arg10[%c0_93, %c0_94], %243 {strides = array<i32>} : memref<8x128xf32, #tpu.memory_space<vmem>>, vector<8x128xf32>,
    return
  }
  func.func @transform_0(%arg0: i32, %arg1: memref<1xi32, #tpu.memory_space<smem>>) -> (i32, i32) {
    %c0_i32 = arith.constant 0 : i32
    %c0_i32_0 = arith.constant 0 : i32
    return %arg0, %c0_i32 : i32, i32
  }
  func.func @transform_1(%arg0: i32, %arg1: memref<1xi32, #tpu.memory_space<smem>>) -> (i32, i32) {
    %c0_i32 = arith.constant 0 : i32
    %c0_i32_0 = arith.constant 0 : i32
    return %arg0, %c0_i32 : i32, i32
  }
  func.func @transform_2(%arg0: i32, %arg1: memref<1xi32, #tpu.memory_space<smem>>) -> (i32, i32) {
    %c0_i32 = arith.constant 0 : i32
    %c0_i32_0 = arith.constant 0 : i32
    return %arg0, %c0_i32 : i32, i32
  }
  func.func @transform_3(%arg0: i32, %arg1: memref<1xi32, #tpu.memory_space<smem>>) -> (i32, i32) {
    %c0_i32 = arith.constant 0 : i32
    %c0_i32_0 = arith.constant 0 : i32
    %c0_i32_1 = arith.constant 0 : i32
    return %c0_i32, %c0_i32_0 : i32, i32
  }
  func.func @transform_4(%arg0: i32, %arg1: memref<1xi32, #tpu.memory_space<smem>>) -> (i32, i32) {
    %c0_i32 = arith.constant 0 : i32
    %c0_i32_0 = arith.constant 0 : i32
    %c0_i32_1 = arith.constant 0 : i32
    return %c0_i32, %c0_i32_0 : i32, i32
  }
  func.func @transform_5(%arg0: i32, %arg1: memref<1xi32, #tpu.memory_space<smem>>) -> (i32, i32) {
    %c0_i32 = arith.constant 0 : i32
    %c0_i32_0 = arith.constant 0 : i32
    %c0_i32_1 = arith.constant 0 : i32
    return %c0_i32, %c0_i32_0 : i32, i32
  }
  func.func @transform_6(%arg0: i32, %arg1: memref<1xi32, #tpu.memory_space<smem>>) -> (i32, i32) {
    %c0_i32 = arith.constant 0 : i32
    %c0_i32_0 = arith.constant 0 : i32
    %c0_i32_1 = arith.constant 0 : i32
    return %c0_i32, %c0_i32_0 : i32, i32
  }
  func.func @transform_7(%arg0: i32, %arg1: memref<1xi32, #tpu.memory_space<smem>>) -> (i32, i32) {
    %c0_i32 = arith.constant 0 : i32
    %c0_i32_0 = arith.constant 0 : i32
    %c0_i32_1 = arith.constant 0 : i32
    return %c0_i32, %c0_i32_0 : i32, i32
  }
  func.func @transform_8(%arg0: i32, %arg1: memref<1xi32, #tpu.memory_space<smem>>) -> (i32, i32) {
    %c0_i32 = arith.constant 0 : i32
    %c0_i32_0 = arith.constant 0 : i32
    return %arg0, %c0_i32 : i32, i32
  }
}

</mosaic_0001>

<llo_original>
// kernel: attention_loss.1
$region0: #{attention_loss.1}
  #allocation0 [shape = 'u32[]', space=smem, size = 0x4, offset = 0x4, fixed_abs, tag = 'smem constant byte address 0x4 - core index']
  #allocation1 [shape = 'u32[144,128]{1,0:T(1,128)}', space=vmem, size = 0x12000, scoped, tag = 'internal scratch']
  #allocation2 [shape = 's32[1]{0}', space=sflag, size = 0x4, scoped, tag = 'scoped memory for attention_loss.1']
  #allocation3 [shape = 's32[1]{0:T(128)S(6)}', space=smem, size = 0x200, scoped, tag = 'prefetched SMEM operand 0']
  %s0 = inlined_call_operand.<no memory space> [shape: s32[1], index: 0, kind: input, shape index: {}]
  %s1 = inlined_call_operand.vmem [shape: bf16[2,2048], index: 1, kind: input, shape index: {}]
  %s2 = inlined_call_operand.vmem [shape: bf16[2,2048], index: 2, kind: input, shape index: {}]
  %s3 = inlined_call_operand.vmem [shape: bf16[2,2048], index: 3, kind: input, shape index: {}]
  %s4 = inlined_call_operand.vmem [shape: bf16[2048,128], index: 4, kind: input, shape index: {}]
  %s5 = inlined_call_operand.vmem [shape: f32[1,128], index: 5, kind: input, shape index: {}]
  %s6 = inlined_call_operand.vmem [shape: bf16[128,2048], index: 6, kind: input, shape index: {}]
  %s7 = inlined_call_operand.vmem [shape: f32[1,2048], index: 7, kind: input, shape index: {}]
  %s8 = inlined_call_operand.vmem [shape: f32[8,128], index: 8, kind: input, shape index: {}]
  %s9 = inlined_call_operand.vmem [shape: f32[8,128], index: 9, kind: output, shape index: {}]
  %s10 = sld [smem:[#allocation0]]
  $region42: #{attention_loss.1} parent=0
    _
  %s12 = ssub.s32 1, %s10
  %s13 = scalar_select 0, %s12, %s10
  %14 = sst [smem:[#allocation3]] %s0
  // Predicated region
  $region2: #{attention_loss.1} parent=0 // pred_check
    _
  $region3: #{attention_loss.1} parent=0 // pred_check_branch
    %16 = sbr.rel (0) target = $region5
  $region4: #{attention_loss.1} parent=0 // pred_region
    _
  $region5: #{attention_loss.1} parent=0 // pred_fallthru
    _
  // Predicated region
  $region6: #{attention_loss.1} parent=0 // pred_check
    _
  $region7: #{attention_loss.1} parent=0 // pred_check_branch
    %18 = sbr.rel (0) target = $region9
  $region8: #{attention_loss.1} parent=0 // pred_region
    _
  $region9: #{attention_loss.1} parent=0 // pred_fallthru
    _
  // Predicated region
  $region10: #{attention_loss.1} parent=0 // pred_check
    _
  $region11: #{attention_loss.1} parent=0 // pred_check_branch
    %20 = sbr.rel (0) target = $region13
  $region12: #{attention_loss.1} parent=0 // pred_region
    _
  $region13: #{attention_loss.1} parent=0 // pred_fallthru
    _
  // Predicated region
  $region14: #{attention_loss.1} parent=0 // pred_check
    _
  $region15: #{attention_loss.1} parent=0 // pred_check_branch
    %22 = sbr.rel (0) target = $region17
  $region16: #{attention_loss.1} parent=0 // pred_region
    _
  $region17: #{attention_loss.1} parent=0 // pred_fallthru
    _
  // Predicated region
  $region18: #{attention_loss.1} parent=0 // pred_check
    _
  $region19: #{attention_loss.1} parent=0 // pred_check_branch
    %24 = sbr.rel (0) target = $region21
  $region20: #{attention_loss.1} parent=0 // pred_region
    _
  $region21: #{attention_loss.1} parent=0 // pred_fallthru
    _
  // Predicated region
  $region22: #{attention_loss.1} parent=0 // pred_check
    _
  $region23: #{attention_loss.1} parent=0 // pred_check_branch
    %26 = sbr.rel (0) target = $region25
  $region24: #{attention_loss.1} parent=0 // pred_region
    _
  $region25: #{attention_loss.1} parent=0 // pred_fallthru
    _
  // Predicated region
  $region26: #{attention_loss.1} parent=0 // pred_check
    _
  $region27: #{attention_loss.1} parent=0 // pred_check_branch
    %28 = sbr.rel (0) target = $region29
  $region28: #{attention_loss.1} parent=0 // pred_region
    _
  $region29: #{attention_loss.1} parent=0 // pred_fallthru
    _
  // Predicated region
  $region30: #{attention_loss.1} parent=0 // pred_check
    _
  $region31: #{attention_loss.1} parent=0 // pred_check_branch
    %30 = sbr.rel (0) target = $region33
  $region32: #{attention_loss.1} parent=0 // pred_region
    _
  $region33: #{attention_loss.1} parent=0 // pred_fallthru
    _
  %v32 = vld [vmem:[%s3] sm:$0xff]
  %v33 = vld [vmem:[%s3 + $0x8] sm:$0xff]
  %v34 = vld [vmem:[%s4] sm:$0xf]
  %v35 = vld [vmem:[%s4 + $0x4] sm:$0xf]
  %v36 = vld [vmem:[%s4 + $0x8] sm:$0xf]
  %v37 = vld [vmem:[%s4 + $0xc] sm:$0xf]
  %v38 = vld [vmem:[%s4 + $0x10] sm:$0xf]
  %v39 = vld [vmem:[%s4 + $0x14] sm:$0xf]
  %v40 = vld [vmem:[%s4 + $0x18] sm:$0xf]
  %v41 = vld [vmem:[%s4 + $0x1c] sm:$0xf]
  %v42 = vld [vmem:[%s4 + $0x20] sm:$0xf]
  %v43 = vld [vmem:[%s4 + $0x24] sm:$0xf]
  %v44 = vld [vmem:[%s4 + $0x28] sm:$0xf]
  %v45 = vld [vmem:[%s4 + $0x2c] sm:$0xf]
  %v46 = vld [vmem:[%s4 + $0x30] sm:$0xf]
  %v47 = vld [vmem:[%s4 + $0x34] sm:$0xf]
  %v48 = vld [vmem:[%s4 + $0x38] sm:$0xf]
  %v49 = vld [vmem:[%s4 + $0x3c] sm:$0xf]
  %v50 = vld [vmem:[%s4 + $0x40] sm:$0xf]
  %v51 = vld [vmem:[%s4 + $0x44] sm:$0xf]
  %v52 = vld [vmem:[%s4 + $0x48] sm:$0xf]
  %v53 = vld [vmem:[%s4 + $0x4c] sm:$0xf]
  %v54 = vld [vmem:[%s4 + $0x50] sm:$0xf]
  %v55 = vld [vmem:[%s4 + $0x54] sm:$0xf]
  %v56 = vld [vmem:[%s4 + $0x58] sm:$0xf]
  %v57 = vld [vmem:[%s4 + $0x5c] sm:$0xf]
  %v58 = vld [vmem:[%s4 + $0x60] sm:$0xf]
  %v59 = vld [vmem:[%s4 + $0x64] sm:$0xf]
  %v60 = vld [vmem:[%s4 + $0x68] sm:$0xf]
  %v61 = vld [vmem:[%s4 + $0x6c] sm:$0xf]
  %v62 = vld [vmem:[%s4 + $0x70] sm:$0xf]
  %v63 = vld [vmem:[%s4 + $0x74] sm:$0xf]
  %v64 = vld [vmem:[%s4 + $0x78] sm:$0xf]
  %v65 = vld [vmem:[%s4 + $0x7c] sm:$0xf]
  %v66 = vld [vmem:[%s4 + $0x80] sm:$0xf]
  %v67 = vld [vmem:[%s4 + $0x84] sm:$0xf]
  %v68 = vld [vmem:[%s4 + $0x88] sm:$0xf]
  %v69 = vld [vmem:[%s4 + $0x8c] sm:$0xf]
  %v70 = vld [vmem:[%s4 + $0x90] sm:$0xf]
  %v71 = vld [vmem:[%s4 + $0x94] sm:$0xf]
  %v72 = vld [vmem:[%s4 + $0x98] sm:$0xf]
  %v73 = vld [vmem:[%s4 + $0x9c] sm:$0xf]
  %v74 = vld [vmem:[%s4 + $0xa0] sm:$0xf]
  %v75 = vld [vmem:[%s4 + $0xa4] sm:$0xf]
  %v76 = vld [vmem:[%s4 + $0xa8] sm:$0xf]
  %v77 = vld [vmem:[%s4 + $0xac] sm:$0xf]
  %v78 = vld [vmem:[%s4 + $0xb0] sm:$0xf]
  %v79 = vld [vmem:[%s4 + $0xb4] sm:$0xf]
  %v80 = vld [vmem:[%s4 + $0xb8] sm:$0xf]
  %v81 = vld [vmem:[%s4 + $0xbc] sm:$0xf]
  %v82 = vld [vmem:[%s4 + $0xc0] sm:$0xf]
  %v83 = vld [vmem:[%s4 + $0xc4] sm:$0xf]
  %v84 = vld [vmem:[%s4 + $0xc8] sm:$0xf]
  %v85 = vld [vmem:[%s4 + $0xcc] sm:$0xf]
  %v86 = vld [vmem:[%s4 + $0xd0] sm:$0xf]
  %v87 = vld [vmem:[%s4 + $0xd4] sm:$0xf]
  %v88 = vld [vmem:[%s4 + $0xd8] sm:$0xf]
  %v89 = vld [vmem:[%s4 + $0xdc] sm:$0xf]
  %v90 = vld [vmem:[%s4 + $0xe0] sm:$0xf]
  %v91 = vld [vmem:[%s4 + $0xe4] sm:$0xf]
  %v92 = vld [vmem:[%s4 + $0xe8] sm:$0xf]
  %v93 = vld [vmem:[%s4 + $0xec] sm:$0xf]
  %v94 = vld [vmem:[%s4 + $0xf0] sm:$0xf]
  %v95 = vld [vmem:[%s4 + $0xf4] sm:$0xf]
  %v96 = vld [vmem:[%s4 + $0xf8] sm:$0xf]
  %v97 = vld [vmem:[%s4 + $0xfc] sm:$0xf]
  %v98 = vld [vmem:[%s4 + $0x100] sm:$0xf]
  %v99 = vld [vmem:[%s4 + $0x104] sm:$0xf]
  %v100 = vld [vmem:[%s4 + $0x108] sm:$0xf]
  %v101 = vld [vmem:[%s4 + $0x10c] sm:$0xf]
  %v102 = vld [vmem:[%s4 + $0x110] sm:$0xf]
  %v103 = vld [vmem:[%s4 + $0x114] sm:$0xf]
  %v104 = vld [vmem:[%s4 + $0x118] sm:$0xf]
  %v105 = vld [vmem:[%s4 + $0x11c] sm:$0xf]
  %v106 = vld [vmem:[%s4 + $0x120] sm:$0xf]
  %v107 = vld [vmem:[%s4 + $0x124] sm:$0xf]
  %v108 = vld [vmem:[%s4 + $0x128] sm:$0xf]
  %v109 = vld [vmem:[%s4 + $0x12c] sm:$0xf]
  %v110 = vld [vmem:[%s4 + $0x130] sm:$0xf]
  %v111 = vld [vmem:[%s4 + $0x134] sm:$0xf]
  %v112 = vld [vmem:[%s4 + $0x138] sm:$0xf]
  %v113 = vld [vmem:[%s4 + $0x13c] sm:$0xf]
  %v114 = vld [vmem:[%s4 + $0x140] sm:$0xf]
  %v115 = vld [vmem:[%s4 + $0x144] sm:$0xf]
  %v116 = vld [vmem:[%s4 + $0x148] sm:$0xf]
  %v117 = vld [vmem:[%s4 + $0x14c] sm:$0xf]
  %v118 = vld [vmem:[%s4 + $0x150] sm:$0xf]
  %v119 = vld [vmem:[%s4 + $0x154] sm:$0xf]
  %v120 = vld [vmem:[%s4 + $0x158] sm:$0xf]
  %v121 = vld [vmem:[%s4 + $0x15c] sm:$0xf]
  %v122 = vld [vmem:[%s4 + $0x160] sm:$0xf]
  %v123 = vld [vmem:[%s4 + $0x164] sm:$0xf]
  %v124 = vld [vmem:[%s4 + $0x168] sm:$0xf]
  %v125 = vld [vmem:[%s4 + $0x16c] sm:$0xf]
  %v126 = vld [vmem:[%s4 + $0x170] sm:$0xf]
  %v127 = vld [vmem:[%s4 + $0x174] sm:$0xf]
  %v128 = vld [vmem:[%s4 + $0x178] sm:$0xf]
  %v129 = vld [vmem:[%s4 + $0x17c] sm:$0xf]
  %v130 = vld [vmem:[%s4 + $0x180] sm:$0xf]
  %v131 = vld [vmem:[%s4 + $0x184] sm:$0xf]
  %v132 = vld [vmem:[%s4 + $0x188] sm:$0xf]
  %v133 = vld [vmem:[%s4 + $0x18c] sm:$0xf]
  %v134 = vld [vmem:[%s4 + $0x190] sm:$0xf]
  %v135 = vld [vmem:[%s4 + $0x194] sm:$0xf]
  %v136 = vld [vmem:[%s4 + $0x198] sm:$0xf]
  %v137 = vld [vmem:[%s4 + $0x19c] sm:$0xf]
  %v138 = vld [vmem:[%s4 + $0x1a0] sm:$0xf]
  %v139 = vld [vmem:[%s4 + $0x1a4] sm:$0xf]
  %v140 = vld [vmem:[%s4 + $0x1a8] sm:$0xf]
  %v141 = vld [vmem:[%s4 + $0x1ac] sm:$0xf]
  %v142 = vld [vmem:[%s4 + $0x1b0] sm:$0xf]
  %v143 = vld [vmem:[%s4 + $0x1b4] sm:$0xf]
  %v144 = vld [vmem:[%s4 + $0x1b8] sm:$0xf]
  %v145 = vld [vmem:[%s4 + $0x1bc] sm:$0xf]
  %v146 = vld [vmem:[%s4 + $0x1c0] sm:$0xf]
  %v147 = vld [vmem:[%s4 + $0x1c4] sm:$0xf]
  %v148 = vld [vmem:[%s4 + $0x1c8] sm:$0xf]
  %v149 = vld [vmem:[%s4 + $0x1cc] sm:$0xf]
  %v150 = vld [vmem:[%s4 + $0x1d0] sm:$0xf]
  %v151 = vld [vmem:[%s4 + $0x1d4] sm:$0xf]
  %v152 = vld [vmem:[%s4 + $0x1d8] sm:$0xf]
  %v153 = vld [vmem:[%s4 + $0x1dc] sm:$0xf]
  %v154 = vld [vmem:[%s4 + $0x1e0] sm:$0xf]
  %v155 = vld [vmem:[%s4 + $0x1e4] sm:$0xf]
  %v156 = vld [vmem:[%s4 + $0x1e8] sm:$0xf]
  %v157 = vld [vmem:[%s4 + $0x1ec] sm:$0xf]
  %v158 = vld [vmem:[%s4 + $0x1f0] sm:$0xf]
  %v159 = vld [vmem:[%s4 + $0x1f4] sm:$0xf]
  %v160 = vld [vmem:[%s4 + $0x1f8] sm:$0xf]
  %v161 = vld [vmem:[%s4 + $0x1fc] sm:$0xf]
  %v162 = vld [vmem:[%s4 + $0x200] sm:$0xf]
  %v163 = vld [vmem:[%s4 + $0x204] sm:$0xf]
  %v164 = vld [vmem:[%s4 + $0x208] sm:$0xf]
  %v165 = vld [vmem:[%s4 + $0x20c] sm:$0xf]
  %v166 = vld [vmem:[%s4 + $0x210] sm:$0xf]
  %v167 = vld [vmem:[%s4 + $0x214] sm:$0xf]
  %v168 = vld [vmem:[%s4 + $0x218] sm:$0xf]
  %v169 = vld [vmem:[%s4 + $0x21c] sm:$0xf]
  %v170 = vld [vmem:[%s4 + $0x220] sm:$0xf]
  %v171 = vld [vmem:[%s4 + $0x224] sm:$0xf]
  %v172 = vld [vmem:[%s4 + $0x228] sm:$0xf]
  %v173 = vld [vmem:[%s4 + $0x22c] sm:$0xf]
  %v174 = vld [vmem:[%s4 + $0x230] sm:$0xf]
  %v175 = vld [vmem:[%s4 + $0x234] sm:$0xf]
  %v176 = vld [vmem:[%s4 + $0x238] sm:$0xf]
  %v177 = vld [vmem:[%s4 + $0x23c] sm:$0xf]
  %v178 = vld [vmem:[%s4 + $0x240] sm:$0xf]
  %v179 = vld [vmem:[%s4 + $0x244] sm:$0xf]
  %v180 = vld [vmem:[%s4 + $0x248] sm:$0xf]
  %v181 = vld [vmem:[%s4 + $0x24c] sm:$0xf]
  %v182 = vld [vmem:[%s4 + $0x250] sm:$0xf]
  %v183 = vld [vmem:[%s4 + $0x254] sm:$0xf]
  %v184 = vld [vmem:[%s4 + $0x258] sm:$0xf]
  %v185 = vld [vmem:[%s4 + $0x25c] sm:$0xf]
  %v186 = vld [vmem:[%s4 + $0x260] sm:$0xf]
  %v187 = vld [vmem:[%s4 + $0x264] sm:$0xf]
  %v188 = vld [vmem:[%s4 + $0x268] sm:$0xf]
  %v189 = vld [vmem:[%s4 + $0x26c] sm:$0xf]
  %v190 = vld [vmem:[%s4 + $0x270] sm:$0xf]
  %v191 = vld [vmem:[%s4 + $0x274] sm:$0xf]
  %v192 = vld [vmem:[%s4 + $0x278] sm:$0xf]
  %v193 = vld [vmem:[%s4 + $0x27c] sm:$0xf]
  %v194 = vld [vmem:[%s4 + $0x280] sm:$0xf]
  %v195 = vld [vmem:[%s4 + $0x284] sm:$0xf]
  %v196 = vld [vmem:[%s4 + $0x288] sm:$0xf]
  %v197 = vld [vmem:[%s4 + $0x28c] sm:$0xf]
  %v198 = vld [vmem:[%s4 + $0x290] sm:$0xf]
  %v199 = vld [vmem:[%s4 + $0x294] sm:$0xf]
  %v200 = vld [vmem:[%s4 + $0x298] sm:$0xf]
  %v201 = vld [vmem:[%s4 + $0x29c] sm:$0xf]
  %v202 = vld [vmem:[%s4 + $0x2a0] sm:$0xf]
  %v203 = vld [vmem:[%s4 + $0x2a4] sm:$0xf]
  %v204 = vld [vmem:[%s4 + $0x2a8] sm:$0xf]
  %v205 = vld [vmem:[%s4 + $0x2ac] sm:$0xf]
  %v206 = vld [vmem:[%s4 + $0x2b0] sm:$0xf]
  %v207 = vld [vmem:[%s4 + $0x2b4] sm:$0xf]
  %v208 = vld [vmem:[%s4 + $0x2b8] sm:$0xf]
  %v209 = vld [vmem:[%s4 + $0x2bc] sm:$0xf]
  %v210 = vld [vmem:[%s4 + $0x2c0] sm:$0xf]
  %v211 = vld [vmem:[%s4 + $0x2c4] sm:$0xf]
  %v212 = vld [vmem:[%s4 + $0x2c8] sm:$0xf]
  %v213 = vld [vmem:[%s4 + $0x2cc] sm:$0xf]
  %v214 = vld [vmem:[%s4 + $0x2d0] sm:$0xf]
  %v215 = vld [vmem:[%s4 + $0x2d4] sm:$0xf]
  %v216 = vld [vmem:[%s4 + $0x2d8] sm:$0xf]
  %v217 = vld [vmem:[%s4 + $0x2dc] sm:$0xf]
  %v218 = vld [vmem:[%s4 + $0x2e0] sm:$0xf]
  %v219 = vld [vmem:[%s4 + $0x2e4] sm:$0xf]
  %v220 = vld [vmem:[%s4 + $0x2e8] sm:$0xf]
  %v221 = vld [vmem:[%s4 + $0x2ec] sm:$0xf]
  %v222 = vld [vmem:[%s4 + $0x2f0] sm:$0xf]
  %v223 = vld [vmem:[%s4 + $0x2f4] sm:$0xf]
  %v224 = vld [vmem:[%s4 + $0x2f8] sm:$0xf]
  %v225 = vld [vmem:[%s4 + $0x2fc] sm:$0xf]
  %v226 = vld [vmem:[%s4 + $0x300] sm:$0xf]
  %v227 = vld [vmem:[%s4 + $0x304] sm:$0xf]
  %v228 = vld [vmem:[%s4 + $0x308] sm:$0xf]
  %v229 = vld [vmem:[%s4 + $0x30c] sm:$0xf]
  %v230 = vld [vmem:[%s4 + $0x310] sm:$0xf]
  %v231 = vld [vmem:[%s4 + $0x314] sm:$0xf]
  %v232 = vld [vmem:[%s4 + $0x318] sm:$0xf]
  %v233 = vld [vmem:[%s4 + $0x31c] sm:$0xf]
  %v234 = vld [vmem:[%s4 + $0x320] sm:$0xf]
  %v235 = vld [vmem:[%s4 + $0x324] sm:$0xf]
  %v236 = vld [vmem:[%s4 + $0x328] sm:$0xf]
  %v237 = vld [vmem:[%s4 + $0x32c] sm:$0xf]
  %v238 = vld [vmem:[%s4 + $0x330] sm:$0xf]
  %v239 = vld [vmem:[%s4 + $0x334] sm:$0xf]
  %v240 = vld [vmem:[%s4 + $0x338] sm:$0xf]
  %v241 = vld [vmem:[%s4 + $0x33c] sm:$0xf]
  %v242 = vld [vmem:[%s4 + $0x340] sm:$0xf]
  %v243 = vld [vmem:[%s4 + $0x344] sm:$0xf]
  %v244 = vld [vmem:[%s4 + $0x348] sm:$0xf]
  %v245 = vld [vmem:[%s4 + $0x34c] sm:$0xf]
  %v246 = vld [vmem:[%s4 + $0x350] sm:$0xf]
  %v247 = vld [vmem:[%s4 + $0x354] sm:$0xf]
  %v248 = vld [vmem:[%s4 + $0x358] sm:$0xf]
  %v249 = vld [vmem:[%s4 + $0x35c] sm:$0xf]
  %v250 = vld [vmem:[%s4 + $0x360] sm:$0xf]
  %v251 = vld [vmem:[%s4 + $0x364] sm:$0xf]
  %v252 = vld [vmem:[%s4 + $0x368] sm:$0xf]
  %v253 = vld [vmem:[%s4 + $0x36c] sm:$0xf]
  %v254 = vld [vmem:[%s4 + $0x370] sm:$0xf]
  %v255 = vld [vmem:[%s4 + $0x374] sm:$0xf]
  %v256 = vld [vmem:[%s4 + $0x378] sm:$0xf]
  %v257 = vld [vmem:[%s4 + $0x37c] sm:$0xf]
  %v258 = vld [vmem:[%s4 + $0x380] sm:$0xf]
  %v259 = vld [vmem:[%s4 + $0x384] sm:$0xf]
  %v260 = vld [vmem:[%s4 + $0x388] sm:$0xf]
  %v261 = vld [vmem:[%s4 + $0x38c] sm:$0xf]
  %v262 = vld [vmem:[%s4 + $0x390] sm:$0xf]
  %v263 = vld [vmem:[%s4 + $0x394] sm:$0xf]
  %v264 = vld [vmem:[%s4 + $0x398] sm:$0xf]
  %v265 = vld [vmem:[%s4 + $0x39c] sm:$0xf]
  %v266 = vld [vmem:[%s4 + $0x3a0] sm:$0xf]
  %v267 = vld [vmem:[%s4 + $0x3a4] sm:$0xf]
  %v268 = vld [vmem:[%s4 + $0x3a8] sm:$0xf]
  %v269 = vld [vmem:[%s4 + $0x3ac] sm:$0xf]
  %v270 = vld [vmem:[%s4 + $0x3b0] sm:$0xf]
  %v271 = vld [vmem:[%s4 + $0x3b4] sm:$0xf]
  %v272 = vld [vmem:[%s4 + $0x3b8] sm:$0xf]
  %v273 = vld [vmem:[%s4 + $0x3bc] sm:$0xf]
  %v274 = vld [vmem:[%s4 + $0x3c0] sm:$0xf]
  %v275 = vld [vmem:[%s4 + $0x3c4] sm:$0xf]
  %v276 = vld [vmem:[%s4 + $0x3c8] sm:$0xf]
  %v277 = vld [vmem:[%s4 + $0x3cc] sm:$0xf]
  %v278 = vld [vmem:[%s4 + $0x3d0] sm:$0xf]
  %v279 = vld [vmem:[%s4 + $0x3d4] sm:$0xf]
  %v280 = vld [vmem:[%s4 + $0x3d8] sm:$0xf]
  %v281 = vld [vmem:[%s4 + $0x3dc] sm:$0xf]
  %v282 = vld [vmem:[%s4 + $0x3e0] sm:$0xf]
  %v283 = vld [vmem:[%s4 + $0x3e4] sm:$0xf]
  %v284 = vld [vmem:[%s4 + $0x3e8] sm:$0xf]
  %v285 = vld [vmem:[%s4 + $0x3ec] sm:$0xf]
  %v286 = vld [vmem:[%s4 + $0x3f0] sm:$0xf]
  %v287 = vld [vmem:[%s4 + $0x3f4] sm:$0xf]
  %v288 = vld [vmem:[%s4 + $0x3f8] sm:$0xf]
  %v289 = vld [vmem:[%s4 + $0x3fc] sm:$0xf]
  %v290 = vld [vmem:[%s5] sm:$0x1]
  %v292 = vlaneseq
  %v293 = vshrl.u32 %v292, 7
  %v294 = vsub.s32 0, %v293
  %v295 = vrot.slane %v290, %v294
  %v299 = vcombine.high %v32, %v32
  %v301 = vunpack.c.l.s4 1966171168
  %v302 = vunpack.c.0.s8 %v301
  %v303 = vlaneseq
  %v304 = vshrl.u32 %v303, 7
  %v305 = vsub.s32 %v302, %v304
  %v306 = vrot.slane %v32, %v305
  %v308 = vunpack.c.l.s4 1966171168
  %v309 = vunpack.c.0.s8 %v308
  %v310 = vlaneseq
  %v311 = vshrl.u32 %v310, 7
  %v312 = vsub.s32 %v309, %v311
  %v313 = vrot.slane %v299, %v312
  %v314 = vcombine.high %v306, %v306
  %v315 = vcombine.high %v313, %v313
  %v317 = vunpack.c.l.s4 1966171168
  %v318 = vunpack.c.0.s8 %v317
  %v319 = vlaneseq
  %v320 = vshrl.u32 %v319, 7
  %v321 = vsub.s32 %v318, %v320
  %v322 = vrot.slane %v306, %v321
  %v324 = vunpack.c.l.s4 1966171168
  %v325 = vunpack.c.0.s8 %v324
  %v326 = vlaneseq
  %v327 = vshrl.u32 %v326, 7
  %v328 = vsub.s32 %v325, %v327
  %v329 = vrot.slane %v313, %v328
  %v331 = vunpack.c.l.s4 1966171168
  %v332 = vunpack.c.0.s8 %v331
  %v333 = vlaneseq
  %v334 = vshrl.u32 %v333, 7
  %v335 = vsub.s32 %v332, %v334
  %v336 = vrot.slane %v314, %v335
  %v338 = vunpack.c.l.s4 1966171168
  %v339 = vunpack.c.0.s8 %v338
  %v340 = vlaneseq
  %v341 = vshrl.u32 %v340, 7
  %v342 = vsub.s32 %v339, %v341
  %v343 = vrot.slane %v315, %v342
  %v344 = vcombine.high %v322, %v322
  %v345 = vcombine.high %v329, %v329
  %v346 = vcombine.high %v336, %v336
  %v347 = vcombine.high %v343, %v343
  %v348 = vcombine.high %v33, %v33
  %v350 = vunpack.c.l.s4 1966171168
  %v351 = vunpack.c.0.s8 %v350
  %v352 = vlaneseq
  %v353 = vshrl.u32 %v352, 7
  %v354 = vsub.s32 %v351, %v353
  %v355 = vrot.slane %v33, %v354
  %v357 = vunpack.c.l.s4 1966171168
  %v358 = vunpack.c.0.s8 %v357
  %v359 = vlaneseq
  %v360 = vshrl.u32 %v359, 7
  %v361 = vsub.s32 %v358, %v360
  %v362 = vrot.slane %v348, %v361
  %v363 = vcombine.high %v355, %v355
  %v364 = vcombine.high %v362, %v362
  %v366 = vunpack.c.l.s4 1966171168
  %v367 = vunpack.c.0.s8 %v366
  %v368 = vlaneseq
  %v369 = vshrl.u32 %v368, 7
  %v370 = vsub.s32 %v367, %v369
  %v371 = vrot.slane %v355, %v370
  %v373 = vunpack.c.l.s4 1966171168
  %v374 = vunpack.c.0.s8 %v373
  %v375 = vlaneseq
  %v376 = vshrl.u32 %v375, 7
  %v377 = vsub.s32 %v374, %v376
  %v378 = vrot.slane %v362, %v377
  %v380 = vunpack.c.l.s4 1966171168
  %v381 = vunpack.c.0.s8 %v380
  %v382 = vlaneseq
  %v383 = vshrl.u32 %v382, 7
  %v384 = vsub.s32 %v381, %v383
  %v385 = vrot.slane %v363, %v384
  %v387 = vunpack.c.l.s4 1966171168
  %v388 = vunpack.c.0.s8 %v387
  %v389 = vlaneseq
  %v390 = vshrl.u32 %v389, 7
  %v391 = vsub.s32 %v388, %v390
  %v392 = vrot.slane %v364, %v391
  %v393 = vcombine.high %v371, %v371
  %v394 = vcombine.high %v378, %v378
  %v395 = vcombine.high %v385, %v385
  %v396 = vcombine.high %v392, %v392
  %v669 = vunpack.c.l.b16 %v34
  %v670 = vunpack.c.l.b16 %v35
  %v671 = vunpack.c.l.b16 %v36
  %v672 = vunpack.c.l.b16 %v37
  %v673 = vunpack.c.l.b16 %v38
  %v674 = vunpack.c.l.b16 %v39
  %v675 = vunpack.c.l.b16 %v40
  %v676 = vunpack.c.l.b16 %v41
  %v677 = vunpack.c.l.b16 %v42
  %v678 = vunpack.c.l.b16 %v43
  %v679 = vunpack.c.l.b16 %v44
  %v680 = vunpack.c.l.b16 %v45
  %v681 = vunpack.c.l.b16 %v46
  %v682 = vunpack.c.l.b16 %v47
  %v683 = vunpack.c.l.b16 %v48
  %v684 = vunpack.c.l.b16 %v49
  %v685 = vunpack.c.l.b16 %v50
  %v686 = vunpack.c.l.b16 %v51
  %v687 = vunpack.c.l.b16 %v52
  %v688 = vunpack.c.l.b16 %v53
  %v689 = vunpack.c.l.b16 %v54
  %v690 = vunpack.c.l.b16 %v55
  %v691 = vunpack.c.l.b16 %v56
  %v692 = vunpack.c.l.b16 %v57
  %v693 = vunpack.c.l.b16 %v58
  %v694 = vunpack.c.l.b16 %v59
  %v695 = vunpack.c.l.b16 %v60
  %v696 = vunpack.c.l.b16 %v61
  %v697 = vunpack.c.l.b16 %v62
  %v698 = vunpack.c.l.b16 %v63
  %v699 = vunpack.c.l.b16 %v64
  %v700 = vunpack.c.l.b16 %v65
  %v701 = vunpack.c.l.b16 %v66
  %v702 = vunpack.c.l.b16 %v67
  %v703 = vunpack.c.l.b16 %v68
  %v704 = vunpack.c.l.b16 %v69
  %v705 = vunpack.c.l.b16 %v70
  %v706 = vunpack.c.l.b16 %v71
  %v707 = vunpack.c.l.b16 %v72
  %v708 = vunpack.c.l.b16 %v73
  %v709 = vunpack.c.l.b16 %v74
  %v710 = vunpack.c.l.b16 %v75
  %v711 = vunpack.c.l.b16 %v76
  %v712 = vunpack.c.l.b16 %v77
  %v713 = vunpack.c.l.b16 %v78
  %v714 = vunpack.c.l.b16 %v79
  %v715 = vunpack.c.l.b16 %v80
  %v716 = vunpack.c.l.b16 %v81
  %v717 = vunpack.c.l.b16 %v82
  %v718 = vunpack.c.l.b16 %v83
  %v719 = vunpack.c.l.b16 %v84
  %v720 = vunpack.c.l.b16 %v85
  %v721 = vunpack.c.l.b16 %v86
  %v722 = vunpack.c.l.b16 %v87
  %v723 = vunpack.c.l.b16 %v88
  %v724 = vunpack.c.l.b16 %v89
  %v725 = vunpack.c.l.b16 %v90
  %v726 = vunpack.c.l.b16 %v91
  %v727 = vunpack.c.l.b16 %v92
  %v728 = vunpack.c.l.b16 %v93
  %v729 = vunpack.c.l.b16 %v94
  %v730 = vunpack.c.l.b16 %v95
  %v731 = vunpack.c.l.b16 %v96
  %v732 = vunpack.c.l.b16 %v97
  %v733 = vunpack.c.l.b16 %v98
  %v734 = vunpack.c.l.b16 %v99
  %v735 = vunpack.c.l.b16 %v100
  %v736 = vunpack.c.l.b16 %v101
  %v737 = vunpack.c.l.b16 %v102
  %v738 = vunpack.c.l.b16 %v103
  %v739 = vunpack.c.l.b16 %v104
  %v740 = vunpack.c.l.b16 %v105
  %v741 = vunpack.c.l.b16 %v106
  %v742 = vunpack.c.l.b16 %v107
  %v743 = vunpack.c.l.b16 %v108
  %v744 = vunpack.c.l.b16 %v109
  %v745 = vunpack.c.l.b16 %v110
  %v746 = vunpack.c.l.b16 %v111
  %v747 = vunpack.c.l.b16 %v112
  %v748 = vunpack.c.l.b16 %v113
  %v749 = vunpack.c.l.b16 %v114
  %v750 = vunpack.c.l.b16 %v115
  %v751 = vunpack.c.l.b16 %v116
  %v752 = vunpack.c.l.b16 %v117
  %v753 = vunpack.c.l.b16 %v118
  %v754 = vunpack.c.l.b16 %v119
  %v755 = vunpack.c.l.b16 %v120
  %v756 = vunpack.c.l.b16 %v121
  %v757 = vunpack.c.l.b16 %v122
  %v758 = vunpack.c.l.b16 %v123
  %v759 = vunpack.c.l.b16 %v124
  %v760 = vunpack.c.l.b16 %v125
  %v761 = vunpack.c.l.b16 %v126
  %v762 = vunpack.c.l.b16 %v127
  %v763 = vunpack.c.l.b16 %v128
  %v764 = vunpack.c.l.b16 %v129
  %v765 = vunpack.c.l.b16 %v130
  %v766 = vunpack.c.l.b16 %v131
  %v767 = vunpack.c.l.b16 %v132
  %v768 = vunpack.c.l.b16 %v133
  %v769 = vunpack.c.l.b16 %v134
  %v770 = vunpack.c.l.b16 %v135
  %v771 = vunpack.c.l.b16 %v136
  %v772 = vunpack.c.l.b16 %v137
  %v773 = vunpack.c.l.b16 %v138
  %v774 = vunpack.c.l.b16 %v139
  %v775 = vunpack.c.l.b16 %v140
  %v776 = vunpack.c.l.b16 %v141
  %v777 = vunpack.c.l.b16 %v142
  %v778 = vunpack.c.l.b16 %v143
  %v779 = vunpack.c.l.b16 %v144
  %v780 = vunpack.c.l.b16 %v145
  %v781 = vunpack.c.l.b16 %v146
  %v782 = vunpack.c.l.b16 %v147
  %v783 = vunpack.c.l.b16 %v148
  %v784 = vunpack.c.l.b16 %v149
  %v785 = vunpack.c.l.b16 %v150
  %v786 = vunpack.c.l.b16 %v151
  %v787 = vunpack.c.l.b16 %v152
  %v788 = vunpack.c.l.b16 %v153
  %v789 = vunpack.c.l.b16 %v154
  %v790 = vunpack.c.l.b16 %v155
  %v791 = vunpack.c.l.b16 %v156
  %v792 = vunpack.c.l.b16 %v157
  %v793 = vunpack.c.l.b16 %v158
  %v794 = vunpack.c.l.b16 %v159
  %v795 = vunpack.c.l.b16 %v160
  %v796 = vunpack.c.l.b16 %v161
  %v797 = vunpack.c.l.b16 %v162
  %v798 = vunpack.c.l.b16 %v163
  %v799 = vunpack.c.l.b16 %v164
  %v800 = vunpack.c.l.b16 %v165
  %v801 = vunpack.c.l.b16 %v166
  %v802 = vunpack.c.l.b16 %v167
  %v803 = vunpack.c.l.b16 %v168
  %v804 = vunpack.c.l.b16 %v169
  %v805 = vunpack.c.l.b16 %v170
  %v806 = vunpack.c.l.b16 %v171
  %v807 = vunpack.c.l.b16 %v172
  %v808 = vunpack.c.l.b16 %v173
  %v809 = vunpack.c.l.b16 %v174
  %v810 = vunpack.c.l.b16 %v175
  %v811 = vunpack.c.l.b16 %v176
  %v812 = vunpack.c.l.b16 %v177
  %v813 = vunpack.c.l.b16 %v178
  %v814 = vunpack.c.l.b16 %v179
  %v815 = vunpack.c.l.b16 %v180
  %v816 = vunpack.c.l.b16 %v181
  %v817 = vunpack.c.l.b16 %v182
  %v818 = vunpack.c.l.b16 %v183
  %v819 = vunpack.c.l.b16 %v184
  %v820 = vunpack.c.l.b16 %v185
  %v821 = vunpack.c.l.b16 %v186
  %v822 = vunpack.c.l.b16 %v187
  %v823 = vunpack.c.l.b16 %v188
  %v824 = vunpack.c.l.b16 %v189
  %v825 = vunpack.c.l.b16 %v190
  %v826 = vunpack.c.l.b16 %v191
  %v827 = vunpack.c.l.b16 %v192
  %v828 = vunpack.c.l.b16 %v193
  %v829 = vunpack.c.l.b16 %v194
  %v830 = vunpack.c.l.b16 %v195
  %v831 = vunpack.c.l.b16 %v196
  %v832 = vunpack.c.l.b16 %v197
  %v833 = vunpack.c.l.b16 %v198
  %v834 = vunpack.c.l.b16 %v199
  %v835 = vunpack.c.l.b16 %v200
  %v836 = vunpack.c.l.b16 %v201
  %v837 = vunpack.c.l.b16 %v202
  %v838 = vunpack.c.l.b16 %v203
  %v839 = vunpack.c.l.b16 %v204
  %v840 = vunpack.c.l.b16 %v205
  %v841 = vunpack.c.l.b16 %v206
  %v842 = vunpack.c.l.b16 %v207
  %v843 = vunpack.c.l.b16 %v208
  %v844 = vunpack.c.l.b16 %v209
  %v845 = vunpack.c.l.b16 %v210
  %v846 = vunpack.c.l.b16 %v211
  %v847 = vunpack.c.l.b16 %v212
  %v848 = vunpack.c.l.b16 %v213
  %v849 = vunpack.c.l.b16 %v214
  %v850 = vunpack.c.l.b16 %v215
  %v851 = vunpack.c.l.b16 %v216
  %v852 = vunpack.c.l.b16 %v217
  %v853 = vunpack.c.l.b16 %v218
  %v854 = vunpack.c.l.b16 %v219
  %v855 = vunpack.c.l.b16 %v220
  %v856 = vunpack.c.l.b16 %v221
  %v857 = vunpack.c.l.b16 %v222
  %v858 = vunpack.c.l.b16 %v223
  %v859 = vunpack.c.l.b16 %v224
  %v860 = vunpack.c.l.b16 %v225
  %v861 = vunpack.c.l.b16 %v226
  %v862 = vunpack.c.l.b16 %v227
  %v863 = vunpack.c.l.b16 %v228
  %v864 = vunpack.c.l.b16 %v229
  %v865 = vunpack.c.l.b16 %v230
  %v866 = vunpack.c.l.b16 %v231
  %v867 = vunpack.c.l.b16 %v232
  %v868 = vunpack.c.l.b16 %v233
  %v869 = vunpack.c.l.b16 %v234
  %v870 = vunpack.c.l.b16 %v235
  %v871 = vunpack.c.l.b16 %v236
  %v872 = vunpack.c.l.b16 %v237
  %v873 = vunpack.c.l.b16 %v238
  %v874 = vunpack.c.l.b16 %v239
  %v875 = vunpack.c.l.b16 %v240
  %v876 = vunpack.c.l.b16 %v241
  %v877 = vunpack.c.l.b16 %v242
  %v878 = vunpack.c.l.b16 %v243
  %v879 = vunpack.c.l.b16 %v244
  %v880 = vunpack.c.l.b16 %v245
  %v881 = vunpack.c.l.b16 %v246
  %v882 = vunpack.c.l.b16 %v247
  %v883 = vunpack.c.l.b16 %v248
  %v884 = vunpack.c.l.b16 %v249
  %v885 = vunpack.c.l.b16 %v250
  %v886 = vunpack.c.l.b16 %v251
  %v887 = vunpack.c.l.b16 %v252
  %v888 = vunpack.c.l.b16 %v253
  %v889 = vunpack.c.l.b16 %v254
  %v890 = vunpack.c.l.b16 %v255
  %v891 = vunpack.c.l.b16 %v256
  %v892 = vunpack.c.l.b16 %v257
  %v893 = vunpack.c.l.b16 %v258
  %v894 = vunpack.c.l.b16 %v259
  %v895 = vunpack.c.l.b16 %v260
  %v896 = vunpack.c.l.b16 %v261
  %v897 = vunpack.c.l.b16 %v262
  %v898 = vunpack.c.l.b16 %v263
  %v899 = vunpack.c.l.b16 %v264
  %v900 = vunpack.c.l.b16 %v265
  %v901 = vunpack.c.l.b16 %v266
  %v902 = vunpack.c.l.b16 %v267
  %v903 = vunpack.c.l.b16 %v268
  %v904 = vunpack.c.l.b16 %v269
  %v905 = vunpack.c.l.b16 %v270
  %v906 = vunpack.c.l.b16 %v271
  %v907 = vunpack.c.l.b16 %v272
  %v908 = vunpack.c.l.b16 %v273
  %v909 = vunpack.c.l.b16 %v274
  %v910 = vunpack.c.l.b16 %v275
  %v911 = vunpack.c.l.b16 %v276
  %v912 = vunpack.c.l.b16 %v277
  %v913 = vunpack.c.l.b16 %v278
  %v914 = vunpack.c.l.b16 %v279
  %v915 = vunpack.c.l.b16 %v280
  %v916 = vunpack.c.l.b16 %v281
  %v917 = vunpack.c.l.b16 %v282
  %v918 = vunpack.c.l.b16 %v283
  %v919 = vunpack.c.l.b16 %v284
  %v920 = vunpack.c.l.b16 %v285
  %v921 = vunpack.c.l.b16 %v286
  %v922 = vunpack.c.l.b16 %v287
  %v923 = vunpack.c.l.b16 %v288
  %v924 = vunpack.c.l.b16 %v289
  %v925 = vpack.c.b16 %v670, %v669
  %v926 = vpack.c.b16 %v672, %v671
  %v927 = vpack.c.b16 %v674, %v673
  %v928 = vpack.c.b16 %v676, %v675
  %v929 = vpack.c.b16 %v678, %v677
  %v930 = vpack.c.b16 %v680, %v679
  %v931 = vpack.c.b16 %v682, %v681
  %v932 = vpack.c.b16 %v684, %v683
  %v933 = vpack.c.b16 %v686, %v685
  %v934 = vpack.c.b16 %v688, %v687
  %v935 = vpack.c.b16 %v690, %v689
  %v936 = vpack.c.b16 %v692, %v691
  %v937 = vpack.c.b16 %v694, %v693
  %v938 = vpack.c.b16 %v696, %v695
  %v939 = vpack.c.b16 %v698, %v697
  %v940 = vpack.c.b16 %v700, %v699
  %v941 = vpack.c.b16 %v702, %v701
  %v942 = vpack.c.b16 %v704, %v703
  %v943 = vpack.c.b16 %v706, %v705
  %v944 = vpack.c.b16 %v708, %v707
  %v945 = vpack.c.b16 %v710, %v709
  %v946 = vpack.c.b16 %v712, %v711
  %v947 = vpack.c.b16 %v714, %v713
  %v948 = vpack.c.b16 %v716, %v715
  %v949 = vpack.c.b16 %v718, %v717
  %v950 = vpack.c.b16 %v720, %v719
  %v951 = vpack.c.b16 %v722, %v721
  %v952 = vpack.c.b16 %v724, %v723
  %v953 = vpack.c.b16 %v726, %v725
  %v954 = vpack.c.b16 %v728, %v727
  %v955 = vpack.c.b16 %v730, %v729
  %v956 = vpack.c.b16 %v732, %v731
  %v957 = vpack.c.b16 %v734, %v733
  %v958 = vpack.c.b16 %v736, %v735
  %v959 = vpack.c.b16 %v738, %v737
  %v960 = vpack.c.b16 %v740, %v739
  %v961 = vpack.c.b16 %v742, %v741
  %v962 = vpack.c.b16 %v744, %v743
  %v963 = vpack.c.b16 %v746, %v745
  %v964 = vpack.c.b16 %v748, %v747
  %v965 = vpack.c.b16 %v750, %v749
  %v966 = vpack.c.b16 %v752, %v751
  %v967 = vpack.c.b16 %v754, %v753
  %v968 = vpack.c.b16 %v756, %v755
  %v969 = vpack.c.b16 %v758, %v757
  %v970 = vpack.c.b16 %v760, %v759
  %v971 = vpack.c.b16 %v762, %v761
  %v972 = vpack.c.b16 %v764, %v763
  %v973 = vpack.c.b16 %v766, %v765
  %v974 = vpack.c.b16 %v768, %v767
  %v975 = vpack.c.b16 %v770, %v769
  %v976 = vpack.c.b16 %v772, %v771
  %v977 = vpack.c.b16 %v774, %v773
  %v978 = vpack.c.b16 %v776, %v775
  %v979 = vpack.c.b16 %v778, %v777
  %v980 = vpack.c.b16 %v780, %v779
  %v981 = vpack.c.b16 %v782, %v781
  %v982 = vpack.c.b16 %v784, %v783
  %v983 = vpack.c.b16 %v786, %v785
  %v984 = vpack.c.b16 %v788, %v787
  %v985 = vpack.c.b16 %v790, %v789
  %v986 = vpack.c.b16 %v792, %v791
  %v987 = vpack.c.b16 %v794, %v793
  %v988 = vpack.c.b16 %v796, %v795
  %v989 = vpack.c.b16 %v798, %v797
  %v990 = vpack.c.b16 %v800, %v799
  %v991 = vpack.c.b16 %v802, %v801
  %v992 = vpack.c.b16 %v804, %v803
  %v993 = vpack.c.b16 %v806, %v805
  %v994 = vpack.c.b16 %v808, %v807
  %v995 = vpack.c.b16 %v810, %v809
  %v996 = vpack.c.b16 %v812, %v811
  %v997 = vpack.c.b16 %v814, %v813
  %v998 = vpack.c.b16 %v816, %v815
  %v999 = vpack.c.b16 %v818, %v817
  %v1000 = vpack.c.b16 %v820, %v819
  %v1001 = vpack.c.b16 %v822, %v821
  %v1002 = vpack.c.b16 %v824, %v823
  %v1003 = vpack.c.b16 %v826, %v825
  %v1004 = vpack.c.b16 %v828, %v827
  %v1005 = vpack.c.b16 %v830, %v829
  %v1006 = vpack.c.b16 %v832, %v831
  %v1007 = vpack.c.b16 %v834, %v833
  %v1008 = vpack.c.b16 %v836, %v835
  %v1009 = vpack.c.b16 %v838, %v837
  %v1010 = vpack.c.b16 %v840, %v839
  %v1011 = vpack.c.b16 %v842, %v841
  %v1012 = vpack.c.b16 %v844, %v843
  %v1013 = vpack.c.b16 %v846, %v845
  %v1014 = vpack.c.b16 %v848, %v847
  %v1015 = vpack.c.b16 %v850, %v849
  %v1016 = vpack.c.b16 %v852, %v851
  %v1017 = vpack.c.b16 %v854, %v853
  %v1018 = vpack.c.b16 %v856, %v855
  %v1019 = vpack.c.b16 %v858, %v857
  %v1020 = vpack.c.b16 %v860, %v859
  %v1021 = vpack.c.b16 %v862, %v861
  %v1022 = vpack.c.b16 %v864, %v863
  %v1023 = vpack.c.b16 %v866, %v865
  %v1024 = vpack.c.b16 %v868, %v867
  %v1025 = vpack.c.b16 %v870, %v869
  %v1026 = vpack.c.b16 %v872, %v871
  %v1027 = vpack.c.b16 %v874, %v873
  %v1028 = vpack.c.b16 %v876, %v875
  %v1029 = vpack.c.b16 %v878, %v877
  %v1030 = vpack.c.b16 %v880, %v879
  %v1031 = vpack.c.b16 %v882, %v881
  %v1032 = vpack.c.b16 %v884, %v883
  %v1033 = vpack.c.b16 %v886, %v885
  %v1034 = vpack.c.b16 %v888, %v887
  %v1035 = vpack.c.b16 %v890, %v889
  %v1036 = vpack.c.b16 %v892, %v891
  %v1037 = vpack.c.b16 %v894, %v893
  %v1038 = vpack.c.b16 %v896, %v895
  %v1039 = vpack.c.b16 %v898, %v897
  %v1040 = vpack.c.b16 %v900, %v899
  %v1041 = vpack.c.b16 %v902, %v901
  %v1042 = vpack.c.b16 %v904, %v903
  %v1043 = vpack.c.b16 %v906, %v905
  %v1044 = vpack.c.b16 %v908, %v907
  %v1045 = vpack.c.b16 %v910, %v909
  %v1046 = vpack.c.b16 %v912, %v911
  %v1047 = vpack.c.b16 %v914, %v913
  %v1048 = vpack.c.b16 %v916, %v915
  %v1049 = vpack.c.b16 %v918, %v917
  %v1050 = vpack.c.b16 %v920, %v919
  %v1051 = vpack.c.b16 %v922, %v921
  %v1052 = vpack.c.b16 %v924, %v923
  %1181 = vmatprep.subr.bf16.mxu0 0
  %1182 = vmatpush1.bf16.msra.mxu0 %v925
  %1183 = vmatprep.subr.bf16.mxu0 0
  %1184 = vmatpush1.bf16.msra.mxu0 %v926
  %1185 = vmatprep.subr.bf16.mxu0 0
  %1186 = vmatpush1.bf16.msra.mxu0 %v927
  %1187 = vmatprep.subr.bf16.mxu0 0
  %1188 = vmatpush1.bf16.msra.mxu0 %v928
  %1189 = vmatprep.subr.bf16.mxu0 0
  %1190 = vmatpush1.bf16.msra.mxu0 %v929
  %1191 = vmatprep.subr.bf16.mxu0 0
  %1192 = vmatpush1.bf16.msra.mxu0 %v930
  %1193 = vmatprep.subr.bf16.mxu0 0
  %1194 = vmatpush1.bf16.msra.mxu0 %v931
  %1195 = vmatprep.subr.bf16.mxu0 0
  %1196 = vmatpush1.bf16.msra.mxu0 %v932
  %1197 = vmatprep.subr.bf16.mxu0 0
  %1198 = vmatpush1.bf16.msra.mxu0 %v933
  %1199 = vmatprep.subr.bf16.mxu0 0
  %1200 = vmatpush1.bf16.msra.mxu0 %v934
  %1201 = vmatprep.subr.bf16.mxu0 0
  %1202 = vmatpush1.bf16.msra.mxu0 %v935
  %1203 = vmatprep.subr.bf16.mxu0 0
  %1204 = vmatpush1.bf16.msra.mxu0 %v936
  %1205 = vmatprep.subr.bf16.mxu0 0
  %1206 = vmatpush1.bf16.msra.mxu0 %v937
  %1207 = vmatprep.subr.bf16.mxu0 0
  %1208 = vmatpush1.bf16.msra.mxu0 %v938
  %1209 = vmatprep.subr.bf16.mxu0 0
  %1210 = vmatpush1.bf16.msra.mxu0 %v939
  %1211 = vmatprep.subr.bf16.mxu0 0
  %1212 = vmatpush1.bf16.msra.mxu0 %v940
  %1213 = vmatprep.mubr.bf16.mxu0 %v336
  %1214 = vmatmul.mubr.bf16.gmra.mrb[0].mxu0 %v322
  %v1215 = vpop.f32.mrb[0].mxu0
  %v1216 = vadd.f32 %v295, %v1215
  %v1217 = vpop.f32.mrb[0].mxu0
  %v1218 = vpop.f32.mrb[0].mxu0
  %v1219 = vpop.f32.mrb[0].mxu0
  %1220 = vdwg.mxu0
  %1221 = vmatprep.subr.bf16.mxu0 0
  %1222 = vmatpush1.bf16.msra.mxu0 %v941
  %1223 = vmatprep.subr.bf16.mxu0 0
  %1224 = vmatpush1.bf16.msra.mxu0 %v942
  %1225 = vmatprep.subr.bf16.mxu0 0
  %1226 = vmatpush1.bf16.msra.mxu0 %v943
  %1227 = vmatprep.subr.bf16.mxu0 0
  %1228 = vmatpush1.bf16.msra.mxu0 %v944
  %1229 = vmatprep.subr.bf16.mxu0 0
  %1230 = vmatpush1.bf16.msra.mxu0 %v945
  %1231 = vmatprep.subr.bf16.mxu0 0
  %1232 = vmatpush1.bf16.msra.mxu0 %v946
  %1233 = vmatprep.subr.bf16.mxu0 0
  %1234 = vmatpush1.bf16.msra.mxu0 %v947
  %1235 = vmatprep.subr.bf16.mxu0 0
  %1236 = vmatpush1.bf16.msra.mxu0 %v948
  %1237 = vmatprep.subr.bf16.mxu0 0
  %1238 = vmatpush1.bf16.msra.mxu0 %v949
  %1239 = vmatprep.subr.bf16.mxu0 0
  %1240 = vmatpush1.bf16.msra.mxu0 %v950
  %1241 = vmatprep.subr.bf16.mxu0 0
  %1242 = vmatpush1.bf16.msra.mxu0 %v951
  %1243 = vmatprep.subr.bf16.mxu0 0
  %1244 = vmatpush1.bf16.msra.mxu0 %v952
  %1245 = vmatprep.subr.bf16.mxu0 0
  %1246 = vmatpush1.bf16.msra.mxu0 %v953
  %1247 = vmatprep.subr.bf16.mxu0 0
  %1248 = vmatpush1.bf16.msra.mxu0 %v954
  %1249 = vmatprep.subr.bf16.mxu0 0
  %1250 = vmatpush1.bf16.msra.mxu0 %v955
  %1251 = vmatprep.subr.bf16.mxu0 0
  %1252 = vmatpush1.bf16.msra.mxu0 %v956
  %1253 = vmatprep.mubr.bf16.mxu0 %v346
  %1254 = vmatmul.mubr.bf16.gmra.mrb[0].mxu0 %v344
  %v1255 = vpop.f32.mrb[0].mxu0
  %v1256 = vadd.f32 %v1216, %v1255
  %v1257 = vpop.f32.mrb[0].mxu0
  %v1258 = vpop.f32.mrb[0].mxu0
  %v1259 = vpop.f32.mrb[0].mxu0
  %1260 = vdwg.mxu0
  %1261 = vmatprep.subr.bf16.mxu0 0
  %1262 = vmatpush1.bf16.msra.mxu0 %v957
  %1263 = vmatprep.subr.bf16.mxu0 0
  %1264 = vmatpush1.bf16.msra.mxu0 %v958
  %1265 = vmatprep.subr.bf16.mxu0 0
  %1266 = vmatpush1.bf16.msra.mxu0 %v959
  %1267 = vmatprep.subr.bf16.mxu0 0
  %1268 = vmatpush1.bf16.msra.mxu0 %v960
  %1269 = vmatprep.subr.bf16.mxu0 0
  %1270 = vmatpush1.bf16.msra.mxu0 %v961
  %1271 = vmatprep.subr.bf16.mxu0 0
  %1272 = vmatpush1.bf16.msra.mxu0 %v962
  %1273 = vmatprep.subr.bf16.mxu0 0
  %1274 = vmatpush1.bf16.msra.mxu0 %v963
  %1275 = vmatprep.subr.bf16.mxu0 0
  %1276 = vmatpush1.bf16.msra.mxu0 %v964
  %1277 = vmatprep.subr.bf16.mxu0 0
  %1278 = vmatpush1.bf16.msra.mxu0 %v965
  %1279 = vmatprep.subr.bf16.mxu0 0
  %1280 = vmatpush1.bf16.msra.mxu0 %v966
  %1281 = vmatprep.subr.bf16.mxu0 0
  %1282 = vmatpush1.bf16.msra.mxu0 %v967
  %1283 = vmatprep.subr.bf16.mxu0 0
  %1284 = vmatpush1.bf16.msra.mxu0 %v968
  %1285 = vmatprep.subr.bf16.mxu0 0
  %1286 = vmatpush1.bf16.msra.mxu0 %v969
  %1287 = vmatprep.subr.bf16.mxu0 0
  %1288 = vmatpush1.bf16.msra.mxu0 %v970
  %1289 = vmatprep.subr.bf16.mxu0 0
  %1290 = vmatpush1.bf16.msra.mxu0 %v971
  %1291 = vmatprep.subr.bf16.mxu0 0
  %1292 = vmatpush1.bf16.msra.mxu0 %v972
  %1293 = vmatprep.mubr.bf16.mxu0 %v343
  %1294 = vmatmul.mubr.bf16.gmra.mrb[0].mxu0 %v329
  %v1295 = vpop.f32.mrb[0].mxu0
  %v1296 = vadd.f32 %v1256, %v1295
  %v1297 = vpop.f32.mrb[0].mxu0
  %v1298 = vpop.f32.mrb[0].mxu0
  %v1299 = vpop.f32.mrb[0].mxu0
  %1300 = vdwg.mxu0
  %1301 = vmatprep.subr.bf16.mxu0 0
  %1302 = vmatpush1.bf16.msra.mxu0 %v973
  %1303 = vmatprep.subr.bf16.mxu0 0
  %1304 = vmatpush1.bf16.msra.mxu0 %v974
  %1305 = vmatprep.subr.bf16.mxu0 0
  %1306 = vmatpush1.bf16.msra.mxu0 %v975
  %1307 = vmatprep.subr.bf16.mxu0 0
  %1308 = vmatpush1.bf16.msra.mxu0 %v976
  %1309 = vmatprep.subr.bf16.mxu0 0
  %1310 = vmatpush1.bf16.msra.mxu0 %v977
  %1311 = vmatprep.subr.bf16.mxu0 0
  %1312 = vmatpush1.bf16.msra.mxu0 %v978
  %1313 = vmatprep.subr.bf16.mxu0 0
  %1314 = vmatpush1.bf16.msra.mxu0 %v979
  %1315 = vmatprep.subr.bf16.mxu0 0
  %1316 = vmatpush1.bf16.msra.mxu0 %v980
  %1317 = vmatprep.subr.bf16.mxu0 0
  %1318 = vmatpush1.bf16.msra.mxu0 %v981
  %1319 = vmatprep.subr.bf16.mxu0 0
  %1320 = vmatpush1.bf16.msra.mxu0 %v982
  %1321 = vmatprep.subr.bf16.mxu0 0
  %1322 = vmatpush1.bf16.msra.mxu0 %v983
  %1323 = vmatprep.subr.bf16.mxu0 0
  %1324 = vmatpush1.bf16.msra.mxu0 %v984
  %1325 = vmatprep.subr.bf16.mxu0 0
  %1326 = vmatpush1.bf16.msra.mxu0 %v985
  %1327 = vmatprep.subr.bf16.mxu0 0
  %1328 = vmatpush1.bf16.msra.mxu0 %v986
  %1329 = vmatprep.subr.bf16.mxu0 0
  %1330 = vmatpush1.bf16.msra.mxu0 %v987
  %1331 = vmatprep.subr.bf16.mxu0 0
  %1332 = vmatpush1.bf16.msra.mxu0 %v988
  %1333 = vmatprep.mubr.bf16.mxu0 %v347
  %1334 = vmatmul.mubr.bf16.gmra.mrb[0].mxu0 %v345
  %v1335 = vpop.f32.mrb[0].mxu0
  %v1336 = vadd.f32 %v1296, %v1335
  %v1337 = vpop.f32.mrb[0].mxu0
  %v1338 = vpop.f32.mrb[0].mxu0
  %v1339 = vpop.f32.mrb[0].mxu0
  %1340 = vdwg.mxu0
  %1341 = vmatprep.subr.bf16.mxu0 0
  %1342 = vmatpush1.bf16.msra.mxu0 %v989
  %1343 = vmatprep.subr.bf16.mxu0 0
  %1344 = vmatpush1.bf16.msra.mxu0 %v990
  %1345 = vmatprep.subr.bf16.mxu0 0
  %1346 = vmatpush1.bf16.msra.mxu0 %v991
  %1347 = vmatprep.subr.bf16.mxu0 0
  %1348 = vmatpush1.bf16.msra.mxu0 %v992
  %1349 = vmatprep.subr.bf16.mxu0 0
  %1350 = vmatpush1.bf16.msra.mxu0 %v993
  %1351 = vmatprep.subr.bf16.mxu0 0
  %1352 = vmatpush1.bf16.msra.mxu0 %v994
  %1353 = vmatprep.subr.bf16.mxu0 0
  %1354 = vmatpush1.bf16.msra.mxu0 %v995
  %1355 = vmatprep.subr.bf16.mxu0 0
  %1356 = vmatpush1.bf16.msra.mxu0 %v996
  %1357 = vmatprep.subr.bf16.mxu0 0
  %1358 = vmatpush1.bf16.msra.mxu0 %v997
  %1359 = vmatprep.subr.bf16.mxu0 0
  %1360 = vmatpush1.bf16.msra.mxu0 %v998
  %1361 = vmatprep.subr.bf16.mxu0 0
  %1362 = vmatpush1.bf16.msra.mxu0 %v999
  %1363 = vmatprep.subr.bf16.mxu0 0
  %1364 = vmatpush1.bf16.msra.mxu0 %v1000
  %1365 = vmatprep.subr.bf16.mxu0 0
  %1366 = vmatpush1.bf16.msra.mxu0 %v1001
  %1367 = vmatprep.subr.bf16.mxu0 0
  %1368 = vmatpush1.bf16.msra.mxu0 %v1002
  %1369 = vmatprep.subr.bf16.mxu0 0
  %1370 = vmatpush1.bf16.msra.mxu0 %v1003
  %1371 = vmatprep.subr.bf16.mxu0 0
  %1372 = vmatpush1.bf16.msra.mxu0 %v1004
  %1373 = vmatprep.mubr.bf16.mxu0 %v385
  %1374 = vmatmul.mubr.bf16.gmra.mrb[0].mxu0 %v371
  %v1375 = vpop.f32.mrb[0].mxu0
  %v1376 = vadd.f32 %v1336, %v1375
  %v1377 = vpop.f32.mrb[0].mxu0
  %v1378 = vpop.f32.mrb[0].mxu0
  %v1379 = vpop.f32.mrb[0].mxu0
  %1380 = vdwg.mxu0
  %1381 = vmatprep.subr.bf16.mxu0 0
  %1382 = vmatpush1.bf16.msra.mxu0 %v1005
  %1383 = vmatprep.subr.bf16.mxu0 0
  %1384 = vmatpush1.bf16.msra.mxu0 %v1006
  %1385 = vmatprep.subr.bf16.mxu0 0
  %1386 = vmatpush1.bf16.msra.mxu0 %v1007
  %1387 = vmatprep.subr.bf16.mxu0 0
  %1388 = vmatpush1.bf16.msra.mxu0 %v1008
  %1389 = vmatprep.subr.bf16.mxu0 0
  %1390 = vmatpush1.bf16.msra.mxu0 %v1009
  %1391 = vmatprep.subr.bf16.mxu0 0
  %1392 = vmatpush1.bf16.msra.mxu0 %v1010
  %1393 = vmatprep.subr.bf16.mxu0 0
  %1394 = vmatpush1.bf16.msra.mxu0 %v1011
  %1395 = vmatprep.subr.bf16.mxu0 0
  %1396 = vmatpush1.bf16.msra.mxu0 %v1012
  %1397 = vmatprep.subr.bf16.mxu0 0
  %1398 = vmatpush1.bf16.msra.mxu0 %v1013
  %1399 = vmatprep.subr.bf16.mxu0 0
  %1400 = vmatpush1.bf16.msra.mxu0 %v1014
  %1401 = vmatprep.subr.bf16.mxu0 0
  %1402 = vmatpush1.bf16.msra.mxu0 %v1015
  %1403 = vmatprep.subr.bf16.mxu0 0
  %1404 = vmatpush1.bf16.msra.mxu0 %v1016
  %1405 = vmatprep.subr.bf16.mxu0 0
  %1406 = vmatpush1.bf16.msra.mxu0 %v1017
  %1407 = vmatprep.subr.bf16.mxu0 0
  %1408 = vmatpush1.bf16.msra.mxu0 %v1018
  %1409 = vmatprep.subr.bf16.mxu0 0
  %1410 = vmatpush1.bf16.msra.mxu0 %v1019
  %1411 = vmatprep.subr.bf16.mxu0 0
  %1412 = vmatpush1.bf16.msra.mxu0 %v1020
  %1413 = vmatprep.mubr.bf16.mxu0 %v395
  %1414 = vmatmul.mubr.bf16.gmra.mrb[0].mxu0 %v393
  %v1415 = vpop.f32.mrb[0].mxu0
  %v1416 = vadd.f32 %v1376, %v1415
  %v1417 = vpop.f32.mrb[0].mxu0
  %v1418 = vpop.f32.mrb[0].mxu0
  %v1419 = vpop.f32.mrb[0].mxu0
  %1420 = vdwg.mxu0
  %1421 = vmatprep.subr.bf16.mxu0 0
  %1422 = vmatpush1.bf16.msra.mxu0 %v1021
  %1423 = vmatprep.subr.bf16.mxu0 0
  %1424 = vmatpush1.bf16.msra.mxu0 %v1022
  %1425 = vmatprep.subr.bf16.mxu0 0
  %1426 = vmatpush1.bf16.msra.mxu0 %v1023
  %1427 = vmatprep.subr.bf16.mxu0 0
  %1428 = vmatpush1.bf16.msra.mxu0 %v1024
  %1429 = vmatprep.subr.bf16.mxu0 0
  %1430 = vmatpush1.bf16.msra.mxu0 %v1025
  %1431 = vmatprep.subr.bf16.mxu0 0
  %1432 = vmatpush1.bf16.msra.mxu0 %v1026
  %1433 = vmatprep.subr.bf16.mxu0 0
  %1434 = vmatpush1.bf16.msra.mxu0 %v1027
  %1435 = vmatprep.subr.bf16.mxu0 0
  %1436 = vmatpush1.bf16.msra.mxu0 %v1028
  %1437 = vmatprep.subr.bf16.mxu0 0
  %1438 = vmatpush1.bf16.msra.mxu0 %v1029
  %1439 = vmatprep.subr.bf16.mxu0 0
  %1440 = vmatpush1.bf16.msra.mxu0 %v1030
  %1441 = vmatprep.subr.bf16.mxu0 0
  %1442 = vmatpush1.bf16.msra.mxu0 %v1031
  %1443 = vmatprep.subr.bf16.mxu0 0
  %1444 = vmatpush1.bf16.msra.mxu0 %v1032
  %1445 = vmatprep.subr.bf16.mxu0 0
  %1446 = vmatpush1.bf16.msra.mxu0 %v1033
  %1447 = vmatprep.subr.bf16.mxu0 0
  %1448 = vmatpush1.bf16.msra.mxu0 %v1034
  %1449 = vmatprep.subr.bf16.mxu0 0
  %1450 = vmatpush1.bf16.msra.mxu0 %v1035
  %1451 = vmatprep.subr.bf16.mxu0 0
  %1452 = vmatpush1.bf16.msra.mxu0 %v1036
  %1453 = vmatprep.mubr.bf16.mxu0 %v392
  %1454 = vmatmul.mubr.bf16.gmra.mrb[0].mxu0 %v378
  %v1455 = vpop.f32.mrb[0].mxu0
  %v1456 = vadd.f32 %v1416, %v1455
  %v1457 = vpop.f32.mrb[0].mxu0
  %v1458 = vpop.f32.mrb[0].mxu0
  %v1459 = vpop.f32.mrb[0].mxu0
  %1460 = vdwg.mxu0
  %1461 = vmatprep.subr.bf16.mxu0 0
  %1462 = vmatpush1.bf16.msra.mxu0 %v1037
  %1463 = vmatprep.subr.bf16.mxu0 0
  %1464 = vmatpush1.bf16.msra.mxu0 %v1038
  %1465 = vmatprep.subr.bf16.mxu0 0
  %1466 = vmatpush1.bf16.msra.mxu0 %v1039
  %1467 = vmatprep.subr.bf16.mxu0 0
  %1468 = vmatpush1.bf16.msra.mxu0 %v1040
  %1469 = vmatprep.subr.bf16.mxu0 0
  %1470 = vmatpush1.bf16.msra.mxu0 %v1041
  %1471 = vmatprep.subr.bf16.mxu0 0
  %1472 = vmatpush1.bf16.msra.mxu0 %v1042
  %1473 = vmatprep.subr.bf16.mxu0 0
  %1474 = vmatpush1.bf16.msra.mxu0 %v1043
  %1475 = vmatprep.subr.bf16.mxu0 0
  %1476 = vmatpush1.bf16.msra.mxu0 %v1044
  %1477 = vmatprep.subr.bf16.mxu0 0
  %1478 = vmatpush1.bf16.msra.mxu0 %v1045
  %1479 = vmatprep.subr.bf16.mxu0 0
  %1480 = vmatpush1.bf16.msra.mxu0 %v1046
  %1481 = vmatprep.subr.bf16.mxu0 0
  %1482 = vmatpush1.bf16.msra.mxu0 %v1047
  %1483 = vmatprep.subr.bf16.mxu0 0
  %1484 = vmatpush1.bf16.msra.mxu0 %v1048
  %1485 = vmatprep.subr.bf16.mxu0 0
  %1486 = vmatpush1.bf16.msra.mxu0 %v1049
  %1487 = vmatprep.subr.bf16.mxu0 0
  %1488 = vmatpush1.bf16.msra.mxu0 %v1050
  %1489 = vmatprep.subr.bf16.mxu0 0
  %1490 = vmatpush1.bf16.msra.mxu0 %v1051
  %1491 = vmatprep.subr.bf16.mxu0 0
  %1492 = vmatpush1.bf16.msra.mxu0 %v1052
  %1493 = vmatprep.mubr.bf16.mxu0 %v396
  %1494 = vmatmul.mubr.bf16.gmra.mrb[0].mxu0 %v394
  %v1495 = vpop.f32.mrb[0].mxu0
  %v1496 = vadd.f32 %v1456, %v1495
  %v1497 = vpop.f32.mrb[0].mxu0
  %v1498 = vpop.f32.mrb[0].mxu0
  %v1499 = vpop.f32.mrb[0].mxu0
  %1500 = vdwg.mxu0
  %v1501 = vmax.f32 %v1496, 0.0
  %v1502 = vpack.c.bf16 %v1501, %v1501
  %v1503 = vld [vmem:[%s6] sm:$0xff]
  %v1504 = vld [vmem:[%s6 + $0x8] sm:$0xff]
  %v1505 = vld [vmem:[%s6 + $0x40] sm:$0xff]
  %v1506 = vld [vmem:[%s6 + $0x48] sm:$0xff]
  %v1507 = vld [vmem:[%s6 + $0x80] sm:$0xff]
  %v1508 = vld [vmem:[%s6 + $0x88] sm:$0xff]
  %v1509 = vld [vmem:[%s6 + $0xc0] sm:$0xff]
  %v1510 = vld [vmem:[%s6 + $0xc8] sm:$0xff]
  %v1511 = vld [vmem:[%s6 + $0x100] sm:$0xff]
  %v1512 = vld [vmem:[%s6 + $0x108] sm:$0xff]
  %v1513 = vld [vmem:[%s6 + $0x140] sm:$0xff]
  %v1514 = vld [vmem:[%s6 + $0x148] sm:$0xff]
  %v1515 = vld [vmem:[%s6 + $0x180] sm:$0xff]
  %v1516 = vld [vmem:[%s6 + $0x188] sm:$0xff]
  %v1517 = vld [vmem:[%s6 + $0x1c0] sm:$0xff]
  %v1518 = vld [vmem:[%s6 + $0x1c8] sm:$0xff]
  %v1519 = vld [vmem:[%s6 + $0x200] sm:$0xff]
  %v1520 = vld [vmem:[%s6 + $0x208] sm:$0xff]
  %v1521 = vld [vmem:[%s6 + $0x240] sm:$0xff]
  %v1522 = vld [vmem:[%s6 + $0x248] sm:$0xff]
  %v1523 = vld [vmem:[%s6 + $0x280] sm:$0xff]
  %v1524 = vld [vmem:[%s6 + $0x288] sm:$0xff]
  %v1525 = vld [vmem:[%s6 + $0x2c0] sm:$0xff]
  %v1526 = vld [vmem:[%s6 + $0x2c8] sm:$0xff]
  %v1527 = vld [vmem:[%s6 + $0x300] sm:$0xff]
  %v1528 = vld [vmem:[%s6 + $0x308] sm:$0xff]
  %v1529 = vld [vmem:[%s6 + $0x340] sm:$0xff]
  %v1530 = vld [vmem:[%s6 + $0x348] sm:$0xff]
  %v1531 = vld [vmem:[%s6 + $0x380] sm:$0xff]
  %v1532 = vld [vmem:[%s6 + $0x388] sm:$0xff]
  %v1533 = vld [vmem:[%s6 + $0x3c0] sm:$0xff]
  %v1534 = vld [vmem:[%s6 + $0x3c8] sm:$0xff]
  %v1535 = vld [vmem:[%s7] sm:$0xf]
  %v1537 = vlaneseq
  %v1538 = vshrl.u32 %v1537, 7
  %v1539 = vsub.s32 0, %v1538
  %v1540 = vrot.slane %v1535, %v1539
  %v1541 = vlaneseq
  %v1542 = vshrl.u32 %v1541, 7
  %v1543 = vsub.s32 1, %v1542
  %v1544 = vrot.slane %v1535, %v1543
  %v1545 = vlaneseq
  %v1546 = vshrl.u32 %v1545, 7
  %v1547 = vsub.s32 2, %v1546
  %v1548 = vrot.slane %v1535, %v1547
  %v1549 = vlaneseq
  %v1550 = vshrl.u32 %v1549, 7
  %v1551 = vsub.s32 3, %v1550
  %v1552 = vrot.slane %v1535, %v1551
  %v1589 = vunpack.c.l.b16 %v1503
  %v1590 = vunpack.c.h.b16 %v1503
  %v1591 = vunpack.c.l.b16 %v1504
  %v1592 = vunpack.c.h.b16 %v1504
  %v1593 = vunpack.c.l.b16 %v1505
  %v1594 = vunpack.c.h.b16 %v1505
  %v1595 = vunpack.c.l.b16 %v1506
  %v1596 = vunpack.c.h.b16 %v1506
  %v1597 = vunpack.c.l.b16 %v1507
  %v1598 = vunpack.c.h.b16 %v1507
  %v1599 = vunpack.c.l.b16 %v1508
  %v1600 = vunpack.c.h.b16 %v1508
  %v1601 = vunpack.c.l.b16 %v1509
  %v1602 = vunpack.c.h.b16 %v1509
  %v1603 = vunpack.c.l.b16 %v1510
  %v1604 = vunpack.c.h.b16 %v1510
  %v1605 = vunpack.c.l.b16 %v1511
  %v1606 = vunpack.c.h.b16 %v1511
  %v1607 = vunpack.c.l.b16 %v1512
  %v1608 = vunpack.c.h.b16 %v1512
  %v1609 = vunpack.c.l.b16 %v1513
  %v1610 = vunpack.c.h.b16 %v1513
  %v1611 = vunpack.c.l.b16 %v1514
  %v1612 = vunpack.c.h.b16 %v1514
  %v1613 = vunpack.c.l.b16 %v1515
  %v1614 = vunpack.c.h.b16 %v1515
  %v1615 = vunpack.c.l.b16 %v1516
  %v1616 = vunpack.c.h.b16 %v1516
  %v1617 = vunpack.c.l.b16 %v1517
  %v1618 = vunpack.c.h.b16 %v1517
  %v1619 = vunpack.c.l.b16 %v1518
  %v1620 = vunpack.c.h.b16 %v1518
  %v1621 = vunpack.c.l.b16 %v1519
  %v1622 = vunpack.c.h.b16 %v1519
  %v1623 = vunpack.c.l.b16 %v1520
  %v1624 = vunpack.c.h.b16 %v1520
  %v1625 = vunpack.c.l.b16 %v1521
  %v1626 = vunpack.c.h.b16 %v1521
  %v1627 = vunpack.c.l.b16 %v1522
  %v1628 = vunpack.c.h.b16 %v1522
  %v1629 = vunpack.c.l.b16 %v1523
  %v1630 = vunpack.c.h.b16 %v1523
  %v1631 = vunpack.c.l.b16 %v1524
  %v1632 = vunpack.c.h.b16 %v1524
  %v1633 = vunpack.c.l.b16 %v1525
  %v1634 = vunpack.c.h.b16 %v1525
  %v1635 = vunpack.c.l.b16 %v1526
  %v1636 = vunpack.c.h.b16 %v1526
  %v1637 = vunpack.c.l.b16 %v1527
  %v1638 = vunpack.c.h.b16 %v1527
  %v1639 = vunpack.c.l.b16 %v1528
  %v1640 = vunpack.c.h.b16 %v1528
  %v1641 = vunpack.c.l.b16 %v1529
  %v1642 = vunpack.c.h.b16 %v1529
  %v1643 = vunpack.c.l.b16 %v1530
  %v1644 = vunpack.c.h.b16 %v1530
  %v1645 = vunpack.c.l.b16 %v1531
  %v1646 = vunpack.c.h.b16 %v1531
  %v1647 = vunpack.c.l.b16 %v1532
  %v1648 = vunpack.c.h.b16 %v1532
  %v1649 = vunpack.c.l.b16 %v1533
  %v1650 = vunpack.c.h.b16 %v1533
  %v1651 = vunpack.c.l.b16 %v1534
  %v1652 = vunpack.c.h.b16 %v1534
  %v1653 = vpack.c.b16 %v1593, %v1589
  %v1654 = vpack.c.b16 %v1594, %v1590
  %v1655 = vpack.c.b16 %v1595, %v1591
  %v1656 = vpack.c.b16 %v1596, %v1592
  %v1657 = vpack.c.b16 %v1601, %v1597
  %v1658 = vpack.c.b16 %v1602, %v1598
  %v1659 = vpack.c.b16 %v1603, %v1599
  %v1660 = vpack.c.b16 %v1604, %v1600
  %v1661 = vpack.c.b16 %v1609, %v1605
  %v1662 = vpack.c.b16 %v1610, %v1606
  %v1663 = vpack.c.b16 %v1611, %v1607
  %v1664 = vpack.c.b16 %v1612, %v1608
  %v1665 = vpack.c.b16 %v1617, %v1613
  %v1666 = vpack.c.b16 %v1618, %v1614
  %v1667 = vpack.c.b16 %v1619, %v1615
  %v1668 = vpack.c.b16 %v1620, %v1616
  %v1669 = vpack.c.b16 %v1625, %v1621
  %v1670 = vpack.c.b16 %v1626, %v1622
  %v1671 = vpack.c.b16 %v1627, %v1623
  %v1672 = vpack.c.b16 %v1628, %v1624
  %v1673 = vpack.c.b16 %v1633, %v1629
  %v1674 = vpack.c.b16 %v1634, %v1630
  %v1675 = vpack.c.b16 %v1635, %v1631
  %v1676 = vpack.c.b16 %v1636, %v1632
  %v1677 = vpack.c.b16 %v1641, %v1637
  %v1678 = vpack.c.b16 %v1642, %v1638
  %v1679 = vpack.c.b16 %v1643, %v1639
  %v1680 = vpack.c.b16 %v1644, %v1640
  %v1681 = vpack.c.b16 %v1649, %v1645
  %v1682 = vpack.c.b16 %v1650, %v1646
  %v1683 = vpack.c.b16 %v1651, %v1647
  %v1684 = vpack.c.b16 %v1652, %v1648
  %1717 = vmatprep.subr.bf16.mxu0 %v1654
  %1718 = vmatpush1.bf16.msra.mxu0 %v1653
  %1719 = vmatprep.subr.bf16.mxu0 %v1658
  %1720 = vmatpush1.bf16.msra.mxu0 %v1657
  %1721 = vmatprep.subr.bf16.mxu0 %v1662
  %1722 = vmatpush1.bf16.msra.mxu0 %v1661
  %1723 = vmatprep.subr.bf16.mxu0 %v1666
  %1724 = vmatpush1.bf16.msra.mxu0 %v1665
  %1725 = vmatprep.subr.bf16.mxu0 %v1670
  %1726 = vmatpush1.bf16.msra.mxu0 %v1669
  %1727 = vmatprep.subr.bf16.mxu0 %v1674
  %1728 = vmatpush1.bf16.msra.mxu0 %v1673
  %1729 = vmatprep.subr.bf16.mxu0 %v1678
  %1730 = vmatpush1.bf16.msra.mxu0 %v1677
  %1731 = vmatprep.subr.bf16.mxu0 %v1682
  %1732 = vmatpush1.bf16.msra.mxu0 %v1681
  %1733 = vmatprep.subr.bf16.mxu0 0
  %1734 = vmatpush1.bf16.msra.mxu0 0
  %1735 = vmatprep.subr.bf16.mxu0 0
  %1736 = vmatpush1.bf16.msra.mxu0 0
  %1737 = vmatprep.subr.bf16.mxu0 0
  %1738 = vmatpush1.bf16.msra.mxu0 0
  %1739 = vmatprep.subr.bf16.mxu0 0
  %1740 = vmatpush1.bf16.msra.mxu0 0
  %1741 = vmatprep.subr.bf16.mxu0 0
  %1742 = vmatpush1.bf16.msra.mxu0 0
  %1743 = vmatprep.subr.bf16.mxu0 0
  %1744 = vmatpush1.bf16.msra.mxu0 0
  %1745 = vmatprep.subr.bf16.mxu0 0
  %1746 = vmatpush1.bf16.msra.mxu0 0
  %1747 = vmatprep.subr.bf16.mxu0 0
  %1748 = vmatpush1.bf16.msra.mxu0 0
  %1749 = vmatprep.mubr.bf16.mxu0 0
  %1750 = vmatmul.mubr.bf16.gmra.mrb[0].mxu0 %v1502
  %v1751 = vpop.f32.mrb[0].mxu0
  %v1752 = vadd.f32 %v1540, %v1751
  %v1753 = vpop.f32.mrb[0].mxu0
  %v1754 = vadd.f32 %v1544, %v1753
  %v1755 = vpop.f32.mrb[0].mxu0
  %v1756 = vpop.f32.mrb[0].mxu0
  %1757 = vdwg.mxu0
  %1758 = vmatprep.subr.bf16.mxu0 %v1656
  %1759 = vmatpush1.bf16.msra.mxu0 %v1655
  %1760 = vmatprep.subr.bf16.mxu0 %v1660
  %1761 = vmatpush1.bf16.msra.mxu0 %v1659
  %1762 = vmatprep.subr.bf16.mxu0 %v1664
  %1763 = vmatpush1.bf16.msra.mxu0 %v1663
  %1764 = vmatprep.subr.bf16.mxu0 %v1668
  %1765 = vmatpush1.bf16.msra.mxu0 %v1667
  %1766 = vmatprep.subr.bf16.mxu0 %v1672
  %1767 = vmatpush1.bf16.msra.mxu0 %v1671
  %1768 = vmatprep.subr.bf16.mxu0 %v1676
  %1769 = vmatpush1.bf16.msra.mxu0 %v1675
  %1770 = vmatprep.subr.bf16.mxu0 %v1680
  %1771 = vmatpush1.bf16.msra.mxu0 %v1679
  %1772 = vmatprep.subr.bf16.mxu0 %v1684
  %1773 = vmatpush1.bf16.msra.mxu0 %v1683
  %1774 = vmatprep.subr.bf16.mxu0 0
  %1775 = vmatpush1.bf16.msra.mxu0 0
  %1776 = vmatprep.subr.bf16.mxu0 0
  %1777 = vmatpush1.bf16.msra.mxu0 0
  %1778 = vmatprep.subr.bf16.mxu0 0
  %1779 = vmatpush1.bf16.msra.mxu0 0
  %1780 = vmatprep.subr.bf16.mxu0 0
  %1781 = vmatpush1.bf16.msra.mxu0 0
  %1782 = vmatprep.subr.bf16.mxu0 0
  %1783 = vmatpush1.bf16.msra.mxu0 0
  %1784 = vmatprep.subr.bf16.mxu0 0
  %1785 = vmatpush1.bf16.msra.mxu0 0
  %1786 = vmatprep.subr.bf16.mxu0 0
  %1787 = vmatpush1.bf16.msra.mxu0 0
  %1788 = vmatprep.subr.bf16.mxu0 0
  %1789 = vmatpush1.bf16.msra.mxu0 0
  %1790 = vmatprep.mubr.bf16.mxu0 0
  %1791 = vmatmul.mubr.bf16.gmra.mrb[0].mxu0 %v1502
  %v1792 = vpop.f32.mrb[0].mxu0
  %v1793 = vadd.f32 %v1548, %v1792
  %v1794 = vpop.f32.mrb[0].mxu0
  %v1795 = vadd.f32 %v1552, %v1794
  %v1796 = vpop.f32.mrb[0].mxu0
  %v1797 = vpop.f32.mrb[0].mxu0
  %1798 = vdwg.mxu0
  %v1799 = vxor.u32 %v1752, 2147483648
  %v1800 = vxor.u32 %v1754, 2147483648
  %v1801 = vxor.u32 %v1793, 2147483648
  %v1802 = vxor.u32 %v1795, 2147483648
  %v1803 = vmul.f32 %v1799, 1.442695
  %v1804 = vpow.pop %v1803
  %v1805 = vmul.f32 %v1800, 1.442695
  %v1806 = vpow.pop %v1805
  %v1807 = vmul.f32 %v1801, 1.442695
  %v1808 = vpow.pop %v1807
  %v1809 = vmul.f32 %v1802, 1.442695
  %v1810 = vpow.pop %v1809
  %v1811 = vadd.f32 %v1804, 1.0
  %v1812 = vadd.f32 %v1806, 1.0
  %v1813 = vadd.f32 %v1808, 1.0
  %v1814 = vadd.f32 %v1810, 1.0
  %v1815 = vrcp.pop %v1811
  %v1816 = vmul.f32 1.0, %v1815
  %v1817 = vrcp.pop %v1812
  %v1818 = vmul.f32 1.0, %v1817
  %v1819 = vrcp.pop %v1813
  %v1820 = vmul.f32 1.0, %v1819
  %v1821 = vrcp.pop %v1814
  %v1822 = vmul.f32 1.0, %v1821
  %v1823 = vld [vmem:[%s3] sm:$0xf]
  %v1824 = vunpack.c.l.bf16 %v1823
  %v1829 = vcombine.low %v1816, %v1818
  %v1830 = vcombine.low %v1820, %v1822
  %v1832 = vunpack.c.l.s4 1983009808
  %v1833 = vunpack.c.0.s8 %v1832
  %v1834 = vlaneseq
  %v1835 = vshrl.u32 %v1834, 7
  %v1836 = vsub.s32 %v1833, %v1835
  %v1837 = vrot.slane %v1829, %v1836
  %v1839 = vunpack.c.l.s4 1983009808
  %v1840 = vunpack.c.0.s8 %v1839
  %v1841 = vlaneseq
  %v1842 = vshrl.u32 %v1841, 7
  %v1843 = vsub.s32 %v1840, %v1842
  %v1844 = vrot.slane %v1830, %v1843
  %v1845 = vcombine.low %v1837, %v1844
  %v1847 = vmul.f32 %v1824, %v1845
  %v1848 = vld [vmem:[%s2] sm:$0xf]
  %v1849 = vunpack.c.l.bf16 %v1848
  %v1850 = vsub.f32 %v1824, %v1849
  %v1851 = vld [vmem:[%s1] sm:$0xf]
  %v1852 = vunpack.c.l.bf16 %v1851
  %v1853 = vsub.f32 %v1824, %v1852
  %v1854 = vmul.f32 %v1850, %v1847
  %v1855 = vmul.f32 %v1853, %v1847
  %v1856 = vmul.f32 %v1854, %v1854
  %v1858 = vcombine.high %v1856, %v1856
  %v1860 = vunpack.c.l.s4 1983009808
  %v1861 = vunpack.c.0.s8 %v1860
  %v1862 = vlaneseq
  %v1863 = vshrl.u32 %v1862, 7
  %v1864 = vsub.s32 %v1861, %v1863
  %v1865 = vrot.slane %v1856, %v1864
  %v1867 = vunpack.c.l.s4 1983009808
  %v1868 = vunpack.c.0.s8 %v1867
  %v1869 = vlaneseq
  %v1870 = vshrl.u32 %v1869, 7
  %v1871 = vsub.s32 %v1868, %v1870
  %v1872 = vrot.slane %v1858, %v1871
  %v1873 = vcombine.high %v1865, %v1865
  %v1874 = vcombine.high %v1872, %v1872
  %vm1879 = vcmask 1041408
  %v1880 = vsel %vm1879, %v1865, 0.0
  %v1881 = vsel %vm1879, %v1873, 0.0
  %v1882 = vadd.f32 %v1880, %v1881
  %v1883 = vsel %vm1879, %v1872, 0.0
  %v1884 = vadd.f32 %v1882, %v1883
  %v1885 = vsel %vm1879, %v1874, 0.0
  %v1886 = vadd.f32 %v1884, %v1885
  %1887 = vadd.xlane.f32.xlu0 %v1886
  %v1888 = vpop.xlane.xlu0 %1887
  %v1889 = vadd.f32 %v1888, 0.0
  %v1890 = vmul.f32 %v1855, %v1855
  %v1892 = vcombine.high %v1890, %v1890
  %v1894 = vunpack.c.l.s4 1983009808
  %v1895 = vunpack.c.0.s8 %v1894
  %v1896 = vlaneseq
  %v1897 = vshrl.u32 %v1896, 7
  %v1898 = vsub.s32 %v1895, %v1897
  %v1899 = vrot.slane %v1890, %v1898
  %v1901 = vunpack.c.l.s4 1983009808
  %v1902 = vunpack.c.0.s8 %v1901
  %v1903 = vlaneseq
  %v1904 = vshrl.u32 %v1903, 7
  %v1905 = vsub.s32 %v1902, %v1904
  %v1906 = vrot.slane %v1892, %v1905
  %v1907 = vcombine.high %v1899, %v1899
  %v1908 = vcombine.high %v1906, %v1906
  %v1913 = vsel %vm1879, %v1899, 0.0
  %v1914 = vsel %vm1879, %v1907, 0.0
  %v1915 = vadd.f32 %v1913, %v1914
  %v1916 = vsel %vm1879, %v1906, 0.0
  %v1917 = vadd.f32 %v1915, %v1916
  %v1918 = vsel %vm1879, %v1908, 0.0
  %v1919 = vadd.f32 %v1917, %v1918
  %1920 = vadd.xlane.f32.xlu0 %v1919
  %v1921 = vpop.xlane.xlu0 %1920
  %v1922 = vadd.f32 %v1921, 0.0
  %v1923 = vmul.f32 %v1850, %v1850
  %v1925 = vcombine.high %v1923, %v1923
  %v1927 = vunpack.c.l.s4 1983009808
  %v1928 = vunpack.c.0.s8 %v1927
  %v1929 = vlaneseq
  %v1930 = vshrl.u32 %v1929, 7
  %v1931 = vsub.s32 %v1928, %v1930
  %v1932 = vrot.slane %v1923, %v1931
  %v1934 = vunpack.c.l.s4 1983009808
  %v1935 = vunpack.c.0.s8 %v1934
  %v1936 = vlaneseq
  %v1937 = vshrl.u32 %v1936, 7
  %v1938 = vsub.s32 %v1935, %v1937
  %v1939 = vrot.slane %v1925, %v1938
  %v1940 = vcombine.high %v1932, %v1932
  %v1941 = vcombine.high %v1939, %v1939
  %v1946 = vsel %vm1879, %v1932, 0.0
  %v1947 = vsel %vm1879, %v1940, 0.0
  %v1948 = vadd.f32 %v1946, %v1947
  %v1949 = vsel %vm1879, %v1939, 0.0
  %v1950 = vadd.f32 %v1948, %v1949
  %v1951 = vsel %vm1879, %v1941, 0.0
  %v1952 = vadd.f32 %v1950, %v1951
  %1953 = vadd.xlane.f32.xlu0 %v1952
  %v1954 = vpop.xlane.xlu0 %1953
  %v1955 = vadd.f32 %v1954, 0.0
  %v1957 = vcombine.high %v1847, %v1847
  %v1959 = vunpack.c.l.s4 1983009808
  %v1960 = vunpack.c.0.s8 %v1959
  %v1961 = vlaneseq
  %v1962 = vshrl.u32 %v1961, 7
  %v1963 = vsub.s32 %v1960, %v1962
  %v1964 = vrot.slane %v1847, %v1963
  %v1966 = vunpack.c.l.s4 1983009808
  %v1967 = vunpack.c.0.s8 %v1966
  %v1968 = vlaneseq
  %v1969 = vshrl.u32 %v1968, 7
  %v1970 = vsub.s32 %v1967, %v1969
  %v1971 = vrot.slane %v1957, %v1970
  %v1972 = vcombine.high %v1964, %v1964
  %v1973 = vcombine.high %v1971, %v1971
  %v1978 = vsel %vm1879, %v1964, 0.0
  %v1979 = vsel %vm1879, %v1972, 0.0
  %v1980 = vadd.f32 %v1978, %v1979
  %v1981 = vsel %vm1879, %v1971, 0.0
  %v1982 = vadd.f32 %v1980, %v1981
  %v1983 = vsel %vm1879, %v1973, 0.0
  %v1984 = vadd.f32 %v1982, %v1983
  %1985 = vadd.xlane.f32.xlu0 %v1984
  %v1986 = vpop.xlane.xlu0 %1985
  %v1987 = vadd.f32 %v1986, 0.0
  %v1988 = vsel %vm1879, %v1964, -inf
  %v1989 = vsel %vm1879, %v1972, -inf
  %v1990 = vsel %vm1879, %v1971, -inf
  %v1991 = vsel %vm1879, %v1973, -inf
  %v1992 = vmax.f32 %v1988, %v1989
  %v1993 = vmax.f32 %v1990, %v1991
  %v1994 = vmax.f32 %v1992, %v1993
  %1995 = vmax.xlane.f32.xlu0 %v1994
  %v1996 = vpop.xlane.xlu0 %1995
  %v1997 = vld [vmem:[%s6 + $0x10] sm:$0xff]
  %v1998 = vld [vmem:[%s6 + $0x18] sm:$0xff]
  %v1999 = vld [vmem:[%s6 + $0x50] sm:$0xff]
  %v2000 = vld [vmem:[%s6 + $0x58] sm:$0xff]
  %v2001 = vld [vmem:[%s6 + $0x90] sm:$0xff]
  %v2002 = vld [vmem:[%s6 + $0x98] sm:$0xff]
  %v2003 = vld [vmem:[%s6 + $0xd0] sm:$0xff]
  %v2004 = vld [vmem:[%s6 + $0xd8] sm:$0xff]
  %v2005 = vld [vmem:[%s6 + $0x110] sm:$0xff]
  %v2006 = vld [vmem:[%s6 + $0x118] sm:$0xff]
  %v2007 = vld [vmem:[%s6 + $0x150] sm:$0xff]
  %v2008 = vld [vmem:[%s6 + $0x158] sm:$0xff]
  %v2009 = vld [vmem:[%s6 + $0x190] sm:$0xff]
  %v2010 = vld [vmem:[%s6 + $0x198] sm:$0xff]
  %v2011 = vld [vmem:[%s6 + $0x1d0] sm:$0xff]
  %v2012 = vld [vmem:[%s6 + $0x1d8] sm:$0xff]
  %v2013 = vld [vmem:[%s6 + $0x210] sm:$0xff]
  %v2014 = vld [vmem:[%s6 + $0x218] sm:$0xff]
  %v2015 = vld [vmem:[%s6 + $0x250] sm:$0xff]
  %v2016 = vld [vmem:[%s6 + $0x258] sm:$0xff]
  %v2017 = vld [vmem:[%s6 + $0x290] sm:$0xff]
  %v2018 = vld [vmem:[%s6 + $0x298] sm:$0xff]
  %v2019 = vld [vmem:[%s6 + $0x2d0] sm:$0xff]
  %v2020 = vld [vmem:[%s6 + $0x2d8] sm:$0xff]
  %v2021 = vld [vmem:[%s6 + $0x310] sm:$0xff]
  %v2022 = vld [vmem:[%s6 + $0x318] sm:$0xff]
  %v2023 = vld [vmem:[%s6 + $0x350] sm:$0xff]
  %v2024 = vld [vmem:[%s6 + $0x358] sm:$0xff]
  %v2025 = vld [vmem:[%s6 + $0x390] sm:$0xff]
  %v2026 = vld [vmem:[%s6 + $0x398] sm:$0xff]
  %v2027 = vld [vmem:[%s6 + $0x3d0] sm:$0xff]
  %v2028 = vld [vmem:[%s6 + $0x3d8] sm:$0xff]
  %v2029 = vld [vmem:[%s7 + $0x4] sm:$0xf]
  %v2031 = vlaneseq
  %v2032 = vshrl.u32 %v2031, 7
  %v2033 = vsub.s32 0, %v2032
  %v2034 = vrot.slane %v2029, %v2033
  %v2035 = vlaneseq
  %v2036 = vshrl.u32 %v2035, 7
  %v2037 = vsub.s32 1, %v2036
  %v2038 = vrot.slane %v2029, %v2037
  %v2039 = vlaneseq
  %v2040 = vshrl.u32 %v2039, 7
  %v2041 = vsub.s32 2, %v2040
  %v2042 = vrot.slane %v2029, %v2041
  %v2043 = vlaneseq
  %v2044 = vshrl.u32 %v2043, 7
  %v2045 = vsub.s32 3, %v2044
  %v2046 = vrot.slane %v2029, %v2045
  %v2083 = vunpack.c.l.b16 %v1997
  %v2084 = vunpack.c.h.b16 %v1997
  %v2085 = vunpack.c.l.b16 %v1998
  %v2086 = vunpack.c.h.b16 %v1998
  %v2087 = vunpack.c.l.b16 %v1999
  %v2088 = vunpack.c.h.b16 %v1999
  %v2089 = vunpack.c.l.b16 %v2000
  %v2090 = vunpack.c.h.b16 %v2000
  %v2091 = vunpack.c.l.b16 %v2001
  %v2092 = vunpack.c.h.b16 %v2001
  %v2093 = vunpack.c.l.b16 %v2002
  %v2094 = vunpack.c.h.b16 %v2002
  %v2095 = vunpack.c.l.b16 %v2003
  %v2096 = vunpack.c.h.b16 %v2003
  %v2097 = vunpack.c.l.b16 %v2004
  %v2098 = vunpack.c.h.b16 %v2004
  %v2099 = vunpack.c.l.b16 %v2005
  %v2100 = vunpack.c.h.b16 %v2005
  %v2101 = vunpack.c.l.b16 %v2006
  %v2102 = vunpack.c.h.b16 %v2006
  %v2103 = vunpack.c.l.b16 %v2007
  %v2104 = vunpack.c.h.b16 %v2007
  %v2105 = vunpack.c.l.b16 %v2008
  %v2106 = vunpack.c.h.b16 %v2008
  %v2107 = vunpack.c.l.b16 %v2009
  %v2108 = vunpack.c.h.b16 %v2009
  %v2109 = vunpack.c.l.b16 %v2010
  %v2110 = vunpack.c.h.b16 %v2010
  %v2111 = vunpack.c.l.b16 %v2011
  %v2112 = vunpack.c.h.b16 %v2011
  %v2113 = vunpack.c.l.b16 %v2012
  %v2114 = vunpack.c.h.b16 %v2012
  %v2115 = vunpack.c.l.b16 %v2013
  %v2116 = vunpack.c.h.b16 %v2013
  %v2117 = vunpack.c.l.b16 %v2014
  %v2118 = vunpack.c.h.b16 %v2014
  %v2119 = vunpack.c.l.b16 %v2015
  %v2120 = vunpack.c.h.b16 %v2015
  %v2121 = vunpack.c.l.b16 %v2016
  %v2122 = vunpack.c.h.b16 %v2016
  %v2123 = vunpack.c.l.b16 %v2017
  %v2124 = vunpack.c.h.b16 %v2017
  %v2125 = vunpack.c.l.b16 %v2018
  %v2126 = vunpack.c.h.b16 %v2018
  %v2127 = vunpack.c.l.b16 %v2019
  %v2128 = vunpack.c.h.b16 %v2019
  %v2129 = vunpack.c.l.b16 %v2020
  %v2130 = vunpack.c.h.b16 %v2020
  %v2131 = vunpack.c.l.b16 %v2021
  %v2132 = vunpack.c.h.b16 %v2021
  %v2133 = vunpack.c.l.b16 %v2022
  %v2134 = vunpack.c.h.b16 %v2022
  %v2135 = vunpack.c.l.b16 %v2023
  %v2136 = vunpack.c.h.b16 %v2023
  %v2137 = vunpack.c.l.b16 %v2024
  %v2138 = vunpack.c.h.b16 %v2024
  %v2139 = vunpack.c.l.b16 %v2025
  %v2140 = vunpack.c.h.b16 %v2025
  %v2141 = vunpack.c.l.b16 %v2026
  %v2142 = vunpack.c.h.b16 %v2026
  %v2143 = vunpack.c.l.b16 %v2027
  %v2144 = vunpack.c.h.b16 %v2027
  %v2145 = vunpack.c.l.b16 %v2028
  %v2146 = vunpack.c.h.b16 %v2028
  %v2147 = vpack.c.b16 %v2087, %v2083
  %v2148 = vpack.c.b16 %v2088, %v2084
  %v2149 = vpack.c.b16 %v2089, %v2085
  %v2150 = vpack.c.b16 %v2090, %v2086
  %v2151 = vpack.c.b16 %v2095, %v2091
  %v2152 = vpack.c.b16 %v2096, %v2092
  %v2153 = vpack.c.b16 %v2097, %v2093
  %v2154 = vpack.c.b16 %v2098, %v2094
  %v2155 = vpack.c.b16 %v2103, %v2099
  %v2156 = vpack.c.b16 %v2104, %v2100
  %v2157 = vpack.c.b16 %v2105, %v2101
  %v2158 = vpack.c.b16 %v2106, %v2102
  %v2159 = vpack.c.b16 %v2111, %v2107
  %v2160 = vpack.c.b16 %v2112, %v2108
  %v2161 = vpack.c.b16 %v2113, %v2109
  %v2162 = vpack.c.b16 %v2114, %v2110
  %v2163 = vpack.c.b16 %v2119, %v2115
  %v2164 = vpack.c.b16 %v2120, %v2116
  %v2165 = vpack.c.b16 %v2121, %v2117
  %v2166 = vpack.c.b16 %v2122, %v2118
  %v2167 = vpack.c.b16 %v2127, %v2123
  %v2168 = vpack.c.b16 %v2128, %v2124
  %v2169 = vpack.c.b16 %v2129, %v2125
  %v2170 = vpack.c.b16 %v2130, %v2126
  %v2171 = vpack.c.b16 %v2135, %v2131
  %v2172 = vpack.c.b16 %v2136, %v2132
  %v2173 = vpack.c.b16 %v2137, %v2133
  %v2174 = vpack.c.b16 %v2138, %v2134
  %v2175 = vpack.c.b16 %v2143, %v2139
  %v2176 = vpack.c.b16 %v2144, %v2140
  %v2177 = vpack.c.b16 %v2145, %v2141
  %v2178 = vpack.c.b16 %v2146, %v2142
  %2211 = vmatprep.subr.bf16.mxu0 %v2148
  %2212 = vmatpush1.bf16.msra.mxu0 %v2147
  %2213 = vmatprep.subr.bf16.mxu0 %v2152
  %2214 = vmatpush1.bf16.msra.mxu0 %v2151
  %2215 = vmatprep.subr.bf16.mxu0 %v2156
  %2216 = vmatpush1.bf16.msra.mxu0 %v2155
  %2217 = vmatprep.subr.bf16.mxu0 %v2160
  %2218 = vmatpush1.bf16.msra.mxu0 %v2159
  %2219 = vmatprep.subr.bf16.mxu0 %v2164
  %2220 = vmatpush1.bf16.msra.mxu0 %v2163
  %2221 = vmatprep.subr.bf16.mxu0 %v2168
  %2222 = vmatpush1.bf16.msra.mxu0 %v2167
  %2223 = vmatprep.subr.bf16.mxu0 %v2172
  %2224 = vmatpush1.bf16.msra.mxu0 %v2171
  %2225 = vmatprep.subr.bf16.mxu0 %v2176
  %2226 = vmatpush1.bf16.msra.mxu0 %v2175
  %2227 = vmatprep.subr.bf16.mxu0 0
  %2228 = vmatpush1.bf16.msra.mxu0 0
  %2229 = vmatprep.subr.bf16.mxu0 0
  %2230 = vmatpush1.bf16.msra.mxu0 0
  %2231 = vmatprep.subr.bf16.mxu0 0
  %2232 = vmatpush1.bf16.msra.mxu0 0
  %2233 = vmatprep.subr.bf16.mxu0 0
  %2234 = vmatpush1.bf16.msra.mxu0 0
  %2235 = vmatprep.subr.bf16.mxu0 0
  %2236 = vmatpush1.bf16.msra.mxu0 0
  %2237 = vmatprep.subr.bf16.mxu0 0
  %2238 = vmatpush1.bf16.msra.mxu0 0
  %2239 = vmatprep.subr.bf16.mxu0 0
  %2240 = vmatpush1.bf16.msra.mxu0 0
  %2241 = vmatprep.subr.bf16.mxu0 0
  %2242 = vmatpush1.bf16.msra.mxu0 0
  %2243 = vmatprep.mubr.bf16.mxu0 0
  %2244 = vmatmul.mubr.bf16.gmra.mrb[0].mxu0 %v1502
  %v2245 = vpop.f32.mrb[0].mxu0
  %v2246 = vadd.f32 %v2034, %v2245
  %v2247 = vpop.f32.mrb[0].mxu0
  %v2248 = vadd.f32 %v2038, %v2247
  %v2249 = vpop.f32.mrb[0].mxu0
  %v2250 = vpop.f32.mrb[0].mxu0
  %2251 = vdwg.mxu0
  %2252 = vmatprep.subr.bf16.mxu0 %v2150
  %2253 = vmatpush1.bf16.msra.mxu0 %v2149
  %2254 = vmatprep.subr.bf16.mxu0 %v2154
  %2255 = vmatpush1.bf16.msra.mxu0 %v2153
  %2256 = vmatprep.subr.bf16.mxu0 %v2158
  %2257 = vmatpush1.bf16.msra.mxu0 %v2157
  %2258 = vmatprep.subr.bf16.mxu0 %v2162
  %2259 = vmatpush1.bf16.msra.mxu0 %v2161
  %2260 = vmatprep.subr.bf16.mxu0 %v2166
  %2261 = vmatpush1.bf16.msra.mxu0 %v2165
  %2262 = vmatprep.subr.bf16.mxu0 %v2170
  %2263 = vmatpush1.bf16.msra.mxu0 %v2169
  %2264 = vmatprep.subr.bf16.mxu0 %v2174
  %2265 = vmatpush1.bf16.msra.mxu0 %v2173
  %2266 = vmatprep.subr.bf16.mxu0 %v2178
  %2267 = vmatpush1.bf16.msra.mxu0 %v2177
  %2268 = vmatprep.subr.bf16.mxu0 0
  %2269 = vmatpush1.bf16.msra.mxu0 0
  %2270 = vmatprep.subr.bf16.mxu0 0
  %2271 = vmatpush1.bf16.msra.mxu0 0
  %2272 = vmatprep.subr.bf16.mxu0 0
  %2273 = vmatpush1.bf16.msra.mxu0 0
  %2274 = vmatprep.subr.bf16.mxu0 0
  %2275 = vmatpush1.bf16.msra.mxu0 0
  %2276 = vmatprep.subr.bf16.mxu0 0
  %2277 = vmatpush1.bf16.msra.mxu0 0
  %2278 = vmatprep.subr.bf16.mxu0 0
  %2279 = vmatpush1.bf16.msra.mxu0 0
  %2280 = vmatprep.subr.bf16.mxu0 0
  %2281 = vmatpush1.bf16.msra.mxu0 0
  %2282 = vmatprep.subr.bf16.mxu0 0
  %2283 = vmatpush1.bf16.msra.mxu0 0
  %2284 = vmatprep.mubr.bf16.mxu0 0
  %2285 = vmatmul.mubr.bf16.gmra.mrb[0].mxu0 %v1502
  %v2286 = vpop.f32.mrb[0].mxu0
  %v2287 = vadd.f32 %v2042, %v2286
  %v2288 = vpop.f32.mrb[0].mxu0
  %v2289 = vadd.f32 %v2046, %v2288
  %v2290 = vpop.f32.mrb[0].mxu0
  %v2291 = vpop.f32.mrb[0].mxu0
  %2292 = vdwg.mxu0
  %v2293 = vxor.u32 %v2246, 2147483648
  %v2294 = vxor.u32 %v2248, 2147483648
  %v2295 = vxor.u32 %v2287, 2147483648
  %v2296 = vxor.u32 %v2289, 2147483648
  %v2297 = vmul.f32 %v2293, 1.442695
  %v2298 = vpow.pop %v2297
  %v2299 = vmul.f32 %v2294, 1.442695
  %v2300 = vpow.pop %v2299
  %v2301 = vmul.f32 %v2295, 1.442695
  %v2302 = vpow.pop %v2301
  %v2303 = vmul.f32 %v2296, 1.442695
  %v2304 = vpow.pop %v2303
  %v2305 = vadd.f32 %v2298, 1.0
  %v2306 = vadd.f32 %v2300, 1.0
  %v2307 = vadd.f32 %v2302, 1.0
  %v2308 = vadd.f32 %v2304, 1.0
  %v2309 = vrcp.pop %v2305
  %v2310 = vmul.f32 1.0, %v2309
  %v2311 = vrcp.pop %v2306
  %v2312 = vmul.f32 1.0, %v2311
  %v2313 = vrcp.pop %v2307
  %v2314 = vmul.f32 1.0, %v2313
  %v2315 = vrcp.pop %v2308
  %v2316 = vmul.f32 1.0, %v2315
  %v2317 = vld [vmem:[%s3 + $0x4] sm:$0xf]
  %v2318 = vunpack.c.l.bf16 %v2317
  %v2323 = vcombine.low %v2310, %v2312
  %v2324 = vcombine.low %v2314, %v2316
  %v2326 = vunpack.c.l.s4 1983009808
  %v2327 = vunpack.c.0.s8 %v2326
  %v2328 = vlaneseq
  %v2329 = vshrl.u32 %v2328, 7
  %v2330 = vsub.s32 %v2327, %v2329
  %v2331 = vrot.slane %v2323, %v2330
  %v2333 = vunpack.c.l.s4 1983009808
  %v2334 = vunpack.c.0.s8 %v2333
  %v2335 = vlaneseq
  %v2336 = vshrl.u32 %v2335, 7
  %v2337 = vsub.s32 %v2334, %v2336
  %v2338 = vrot.slane %v2324, %v2337
  %v2339 = vcombine.low %v2331, %v2338
  %v2341 = vmul.f32 %v2318, %v2339
  %v2342 = vld [vmem:[%s2 + $0x4] sm:$0xf]
  %v2343 = vunpack.c.l.bf16 %v2342
  %v2344 = vsub.f32 %v2318, %v2343
  %v2345 = vld [vmem:[%s1 + $0x4] sm:$0xf]
  %v2346 = vunpack.c.l.bf16 %v2345
  %v2347 = vsub.f32 %v2318, %v2346
  %v2348 = vmul.f32 %v2344, %v2341
  %v2349 = vmul.f32 %v2347, %v2341
  %v2350 = vmul.f32 %v2348, %v2348
  %v2352 = vcombine.high %v2350, %v2350
  %v2354 = vunpack.c.l.s4 1983009808
  %v2355 = vunpack.c.0.s8 %v2354
  %v2356 = vlaneseq
  %v2357 = vshrl.u32 %v2356, 7
  %v2358 = vsub.s32 %v2355, %v2357
  %v2359 = vrot.slane %v2350, %v2358
  %v2361 = vunpack.c.l.s4 1983009808
  %v2362 = vunpack.c.0.s8 %v2361
  %v2363 = vlaneseq
  %v2364 = vshrl.u32 %v2363, 7
  %v2365 = vsub.s32 %v2362, %v2364
  %v2366 = vrot.slane %v2352, %v2365
  %v2367 = vcombine.high %v2359, %v2359
  %v2368 = vcombine.high %v2366, %v2366
  %v2373 = vsel %vm1879, %v2359, 0.0
  %v2374 = vsel %vm1879, %v2367, 0.0
  %v2375 = vadd.f32 %v2373, %v2374
  %v2376 = vsel %vm1879, %v2366, 0.0
  %v2377 = vadd.f32 %v2375, %v2376
  %v2378 = vsel %vm1879, %v2368, 0.0
  %v2379 = vadd.f32 %v2377, %v2378
  %2380 = vadd.xlane.f32.xlu0 %v2379
  %v2381 = vpop.xlane.xlu0 %2380
  %v2382 = vadd.f32 %v1889, %v2381
  %v2383 = vmul.f32 %v2349, %v2349
  %v2385 = vcombine.high %v2383, %v2383
  %v2387 = vunpack.c.l.s4 1983009808
  %v2388 = vunpack.c.0.s8 %v2387
  %v2389 = vlaneseq
  %v2390 = vshrl.u32 %v2389, 7
  %v2391 = vsub.s32 %v2388, %v2390
  %v2392 = vrot.slane %v2383, %v2391
  %v2394 = vunpack.c.l.s4 1983009808
  %v2395 = vunpack.c.0.s8 %v2394
  %v2396 = vlaneseq
  %v2397 = vshrl.u32 %v2396, 7
  %v2398 = vsub.s32 %v2395, %v2397
  %v2399 = vrot.slane %v2385, %v2398
  %v2400 = vcombine.high %v2392, %v2392
  %v2401 = vcombine.high %v2399, %v2399
  %v2406 = vsel %vm1879, %v2392, 0.0
  %v2407 = vsel %vm1879, %v2400, 0.0
  %v2408 = vadd.f32 %v2406, %v2407
  %v2409 = vsel %vm1879, %v2399, 0.0
  %v2410 = vadd.f32 %v2408, %v2409
  %v2411 = vsel %vm1879, %v2401, 0.0
  %v2412 = vadd.f32 %v2410, %v2411
  %2413 = vadd.xlane.f32.xlu0 %v2412
  %v2414 = vpop.xlane.xlu0 %2413
  %v2415 = vadd.f32 %v1922, %v2414
  %v2416 = vmul.f32 %v2344, %v2344
  %v2418 = vcombine.high %v2416, %v2416
  %v2420 = vunpack.c.l.s4 1983009808
  %v2421 = vunpack.c.0.s8 %v2420
  %v2422 = vlaneseq
  %v2423 = vshrl.u32 %v2422, 7
  %v2424 = vsub.s32 %v2421, %v2423
  %v2425 = vrot.slane %v2416, %v2424
  %v2427 = vunpack.c.l.s4 1983009808
  %v2428 = vunpack.c.0.s8 %v2427
  %v2429 = vlaneseq
  %v2430 = vshrl.u32 %v2429, 7
  %v2431 = vsub.s32 %v2428, %v2430
  %v2432 = vrot.slane %v2418, %v2431
  %v2433 = vcombine.high %v2425, %v2425
  %v2434 = vcombine.high %v2432, %v2432
  %v2439 = vsel %vm1879, %v2425, 0.0
  %v2440 = vsel %vm1879, %v2433, 0.0
  %v2441 = vadd.f32 %v2439, %v2440
  %v2442 = vsel %vm1879, %v2432, 0.0
  %v2443 = vadd.f32 %v2441, %v2442
  %v2444 = vsel %vm1879, %v2434, 0.0
  %v2445 = vadd.f32 %v2443, %v2444
  %2446 = vadd.xlane.f32.xlu0 %v2445
  %v2447 = vpop.xlane.xlu0 %2446
  %v2448 = vadd.f32 %v1955, %v2447
  %v2450 = vcombine.high %v2341, %v2341
  %v2452 = vunpack.c.l.s4 1983009808
  %v2453 = vunpack.c.0.s8 %v2452
  %v2454 = vlaneseq
  %v2455 = vshrl.u32 %v2454, 7
  %v2456 = vsub.s32 %v2453, %v2455
  %v2457 = vrot.slane %v2341, %v2456
  %v2459 = vunpack.c.l.s4 1983009808
  %v2460 = vunpack.c.0.s8 %v2459
  %v2461 = vlaneseq
  %v2462 = vshrl.u32 %v2461, 7
  %v2463 = vsub.s32 %v2460, %v2462
  %v2464 = vrot.slane %v2450, %v2463
  %v2465 = vcombine.high %v2457, %v2457
  %v2466 = vcombine.high %v2464, %v2464
  %v2471 = vsel %vm1879, %v2457, 0.0
  %v2472 = vsel %vm1879, %v2465, 0.0
  %v2473 = vadd.f32 %v2471, %v2472
  %v2474 = vsel %vm1879, %v2464, 0.0
  %v2475 = vadd.f32 %v2473, %v2474
  %v2476 = vsel %vm1879, %v2466, 0.0
  %v2477 = vadd.f32 %v2475, %v2476
  %2478 = vadd.xlane.f32.xlu0 %v2477
  %v2479 = vpop.xlane.xlu0 %2478
  %v2480 = vadd.f32 %v1987, %v2479
  %v2481 = vsel %vm1879, %v2457, -inf
  %v2482 = vsel %vm1879, %v2465, -inf
  %v2483 = vsel %vm1879, %v2464, -inf
  %v2484 = vsel %vm1879, %v2466, -inf
  %v2485 = vmax.f32 %v2481, %v2482
  %v2486 = vmax.f32 %v2483, %v2484
  %v2487 = vmax.f32 %v2485, %v2486
  %2488 = vmax.xlane.f32.xlu0 %v2487
  %v2489 = vpop.xlane.xlu0 %2488
  %v2490 = vmax.f32 %v1996, %v2489
  %v2491 = vld [vmem:[%s6 + $0x20] sm:$0xff]
  %v2492 = vld [vmem:[%s6 + $0x28] sm:$0xff]
  %v2493 = vld [vmem:[%s6 + $0x60] sm:$0xff]
  %v2494 = vld [vmem:[%s6 + $0x68] sm:$0xff]
  %v2495 = vld [vmem:[%s6 + $0xa0] sm:$0xff]
  %v2496 = vld [vmem:[%s6 + $0xa8] sm:$0xff]
  %v2497 = vld [vmem:[%s6 + $0xe0] sm:$0xff]
  %v2498 = vld [vmem:[%s6 + $0xe8] sm:$0xff]
  %v2499 = vld [vmem:[%s6 + $0x120] sm:$0xff]
  %v2500 = vld [vmem:[%s6 + $0x128] sm:$0xff]
  %v2501 = vld [vmem:[%s6 + $0x160] sm:$0xff]
  %v2502 = vld [vmem:[%s6 + $0x168] sm:$0xff]
  %v2503 = vld [vmem:[%s6 + $0x1a0] sm:$0xff]
  %v2504 = vld [vmem:[%s6 + $0x1a8] sm:$0xff]
  %v2505 = vld [vmem:[%s6 + $0x1e0] sm:$0xff]
  %v2506 = vld [vmem:[%s6 + $0x1e8] sm:$0xff]
  %v2507 = vld [vmem:[%s6 + $0x220] sm:$0xff]
  %v2508 = vld [vmem:[%s6 + $0x228] sm:$0xff]
  %v2509 = vld [vmem:[%s6 + $0x260] sm:$0xff]
  %v2510 = vld [vmem:[%s6 + $0x268] sm:$0xff]
  %v2511 = vld [vmem:[%s6 + $0x2a0] sm:$0xff]
  %v2512 = vld [vmem:[%s6 + $0x2a8] sm:$0xff]
  %v2513 = vld [vmem:[%s6 + $0x2e0] sm:$0xff]
  %v2514 = vld [vmem:[%s6 + $0x2e8] sm:$0xff]
  %v2515 = vld [vmem:[%s6 + $0x320] sm:$0xff]
  %v2516 = vld [vmem:[%s6 + $0x328] sm:$0xff]
  %v2517 = vld [vmem:[%s6 + $0x360] sm:$0xff]
  %v2518 = vld [vmem:[%s6 + $0x368] sm:$0xff]
  %v2519 = vld [vmem:[%s6 + $0x3a0] sm:$0xff]
  %v2520 = vld [vmem:[%s6 + $0x3a8] sm:$0xff]
  %v2521 = vld [vmem:[%s6 + $0x3e0] sm:$0xff]
  %v2522 = vld [vmem:[%s6 + $0x3e8] sm:$0xff]
  %v2523 = vld [vmem:[%s7 + $0x8] sm:$0xf]
  %v2525 = vlaneseq
  %v2526 = vshrl.u32 %v2525, 7
  %v2527 = vsub.s32 0, %v2526
  %v2528 = vrot.slane %v2523, %v2527
  %v2529 = vlaneseq
  %v2530 = vshrl.u32 %v2529, 7
  %v2531 = vsub.s32 1, %v2530
  %v2532 = vrot.slane %v2523, %v2531
  %v2533 = vlaneseq
  %v2534 = vshrl.u32 %v2533, 7
  %v2535 = vsub.s32 2, %v2534
  %v2536 = vrot.slane %v2523, %v2535
  %v2537 = vlaneseq
  %v2538 = vshrl.u32 %v2537, 7
  %v2539 = vsub.s32 3, %v2538
  %v2540 = vrot.slane %v2523, %v2539
  %v2577 = vunpack.c.l.b16 %v2491
  %v2578 = vunpack.c.h.b16 %v2491
  %v2579 = vunpack.c.l.b16 %v2492
  %v2580 = vunpack.c.h.b16 %v2492
  %v2581 = vunpack.c.l.b16 %v2493
  %v2582 = vunpack.c.h.b16 %v2493
  %v2583 = vunpack.c.l.b16 %v2494
  %v2584 = vunpack.c.h.b16 %v2494
  %v2585 = vunpack.c.l.b16 %v2495
  %v2586 = vunpack.c.h.b16 %v2495
  %v2587 = vunpack.c.l.b16 %v2496
  %v2588 = vunpack.c.h.b16 %v2496
  %v2589 = vunpack.c.l.b16 %v2497
  %v2590 = vunpack.c.h.b16 %v2497
  %v2591 = vunpack.c.l.b16 %v2498
  %v2592 = vunpack.c.h.b16 %v2498
  %v2593 = vunpack.c.l.b16 %v2499
  %v2594 = vunpack.c.h.b16 %v2499
  %v2595 = vunpack.c.l.b16 %v2500
  %v2596 = vunpack.c.h.b16 %v2500
  %v2597 = vunpack.c.l.b16 %v2501
  %v2598 = vunpack.c.h.b16 %v2501
  %v2599 = vunpack.c.l.b16 %v2502
  %v2600 = vunpack.c.h.b16 %v2502
  %v2601 = vunpack.c.l.b16 %v2503
  %v2602 = vunpack.c.h.b16 %v2503
  %v2603 = vunpack.c.l.b16 %v2504
  %v2604 = vunpack.c.h.b16 %v2504
  %v2605 = vunpack.c.l.b16 %v2505
  %v2606 = vunpack.c.h.b16 %v2505
  %v2607 = vunpack.c.l.b16 %v2506
  %v2608 = vunpack.c.h.b16 %v2506
  %v2609 = vunpack.c.l.b16 %v2507
  %v2610 = vunpack.c.h.b16 %v2507
  %v2611 = vunpack.c.l.b16 %v2508
  %v2612 = vunpack.c.h.b16 %v2508
  %v2613 = vunpack.c.l.b16 %v2509
  %v2614 = vunpack.c.h.b16 %v2509
  %v2615 = vunpack.c.l.b16 %v2510
  %v2616 = vunpack.c.h.b16 %v2510
  %v2617 = vunpack.c.l.b16 %v2511
  %v2618 = vunpack.c.h.b16 %v2511
  %v2619 = vunpack.c.l.b16 %v2512
  %v2620 = vunpack.c.h.b16 %v2512
  %v2621 = vunpack.c.l.b16 %v2513
  %v2622 = vunpack.c.h.b16 %v2513
  %v2623 = vunpack.c.l.b16 %v2514
  %v2624 = vunpack.c.h.b16 %v2514
  %v2625 = vunpack.c.l.b16 %v2515
  %v2626 = vunpack.c.h.b16 %v2515
  %v2627 = vunpack.c.l.b16 %v2516
  %v2628 = vunpack.c.h.b16 %v2516
  %v2629 = vunpack.c.l.b16 %v2517
  %v2630 = vunpack.c.h.b16 %v2517
  %v2631 = vunpack.c.l.b16 %v2518
  %v2632 = vunpack.c.h.b16 %v2518
  %v2633 = vunpack.c.l.b16 %v2519
  %v2634 = vunpack.c.h.b16 %v2519
  %v2635 = vunpack.c.l.b16 %v2520
  %v2636 = vunpack.c.h.b16 %v2520
  %v2637 = vunpack.c.l.b16 %v2521
  %v2638 = vunpack.c.h.b16 %v2521
  %v2639 = vunpack.c.l.b16 %v2522
  %v2640 = vunpack.c.h.b16 %v2522
  %v2641 = vpack.c.b16 %v2581, %v2577
  %v2642 = vpack.c.b16 %v2582, %v2578
  %v2643 = vpack.c.b16 %v2583, %v2579
  %v2644 = vpack.c.b16 %v2584, %v2580
  %v2645 = vpack.c.b16 %v2589, %v2585
  %v2646 = vpack.c.b16 %v2590, %v2586
  %v2647 = vpack.c.b16 %v2591, %v2587
  %v2648 = vpack.c.b16 %v2592, %v2588
  %v2649 = vpack.c.b16 %v2597, %v2593
  %v2650 = vpack.c.b16 %v2598, %v2594
  %v2651 = vpack.c.b16 %v2599, %v2595
  %v2652 = vpack.c.b16 %v2600, %v2596
  %v2653 = vpack.c.b16 %v2605, %v2601
  %v2654 = vpack.c.b16 %v2606, %v2602
  %v2655 = vpack.c.b16 %v2607, %v2603
  %v2656 = vpack.c.b16 %v2608, %v2604
  %v2657 = vpack.c.b16 %v2613, %v2609
  %v2658 = vpack.c.b16 %v2614, %v2610
  %v2659 = vpack.c.b16 %v2615, %v2611
  %v2660 = vpack.c.b16 %v2616, %v2612
  %v2661 = vpack.c.b16 %v2621, %v2617
  %v2662 = vpack.c.b16 %v2622, %v2618
  %v2663 = vpack.c.b16 %v2623, %v2619
  %v2664 = vpack.c.b16 %v2624, %v2620
  %v2665 = vpack.c.b16 %v2629, %v2625
  %v2666 = vpack.c.b16 %v2630, %v2626
  %v2667 = vpack.c.b16 %v2631, %v2627
  %v2668 = vpack.c.b16 %v2632, %v2628
  %v2669 = vpack.c.b16 %v2637, %v2633
  %v2670 = vpack.c.b16 %v2638, %v2634
  %v2671 = vpack.c.b16 %v2639, %v2635
  %v2672 = vpack.c.b16 %v2640, %v2636
  %2705 = vmatprep.subr.bf16.mxu0 %v2642
  %2706 = vmatpush1.bf16.msra.mxu0 %v2641
  %2707 = vmatprep.subr.bf16.mxu0 %v2646
  %2708 = vmatpush1.bf16.msra.mxu0 %v2645
  %2709 = vmatprep.subr.bf16.mxu0 %v2650
  %2710 = vmatpush1.bf16.msra.mxu0 %v2649
  %2711 = vmatprep.subr.bf16.mxu0 %v2654
  %2712 = vmatpush1.bf16.msra.mxu0 %v2653
  %2713 = vmatprep.subr.bf16.mxu0 %v2658
  %2714 = vmatpush1.bf16.msra.mxu0 %v2657
  %2715 = vmatprep.subr.bf16.mxu0 %v2662
  %2716 = vmatpush1.bf16.msra.mxu0 %v2661
  %2717 = vmatprep.subr.bf16.mxu0 %v2666
  %2718 = vmatpush1.bf16.msra.mxu0 %v2665
  %2719 = vmatprep.subr.bf16.mxu0 %v2670
  %2720 = vmatpush1.bf16.msra.mxu0 %v2669
  %2721 = vmatprep.subr.bf16.mxu0 0
  %2722 = vmatpush1.bf16.msra.mxu0 0
  %2723 = vmatprep.subr.bf16.mxu0 0
  %2724 = vmatpush1.bf16.msra.mxu0 0
  %2725 = vmatprep.subr.bf16.mxu0 0
  %2726 = vmatpush1.bf16.msra.mxu0 0
  %2727 = vmatprep.subr.bf16.mxu0 0
  %2728 = vmatpush1.bf16.msra.mxu0 0
  %2729 = vmatprep.subr.bf16.mxu0 0
  %2730 = vmatpush1.bf16.msra.mxu0 0
  %2731 = vmatprep.subr.bf16.mxu0 0
  %2732 = vmatpush1.bf16.msra.mxu0 0
  %2733 = vmatprep.subr.bf16.mxu0 0
  %2734 = vmatpush1.bf16.msra.mxu0 0
  %2735 = vmatprep.subr.bf16.mxu0 0
  %2736 = vmatpush1.bf16.msra.mxu0 0
  %2737 = vmatprep.mubr.bf16.mxu0 0
  %2738 = vmatmul.mubr.bf16.gmra.mrb[0].mxu0 %v1502
  %v2739 = vpop.f32.mrb[0].mxu0
  %v2740 = vadd.f32 %v2528, %v2739
  %v2741 = vpop.f32.mrb[0].mxu0
  %v2742 = vadd.f32 %v2532, %v2741
  %v2743 = vpop.f32.mrb[0].mxu0
  %v2744 = vpop.f32.mrb[0].mxu0
  %2745 = vdwg.mxu0
  %2746 = vmatprep.subr.bf16.mxu0 %v2644
  %2747 = vmatpush1.bf16.msra.mxu0 %v2643
  %2748 = vmatprep.subr.bf16.mxu0 %v2648
  %2749 = vmatpush1.bf16.msra.mxu0 %v2647
  %2750 = vmatprep.subr.bf16.mxu0 %v2652
  %2751 = vmatpush1.bf16.msra.mxu0 %v2651
  %2752 = vmatprep.subr.bf16.mxu0 %v2656
  %2753 = vmatpush1.bf16.msra.mxu0 %v2655
  %2754 = vmatprep.subr.bf16.mxu0 %v2660
  %2755 = vmatpush1.bf16.msra.mxu0 %v2659
  %2756 = vmatprep.subr.bf16.mxu0 %v2664
  %2757 = vmatpush1.bf16.msra.mxu0 %v2663
  %2758 = vmatprep.subr.bf16.mxu0 %v2668
  %2759 = vmatpush1.bf16.msra.mxu0 %v2667
  %2760 = vmatprep.subr.bf16.mxu0 %v2672
  %2761 = vmatpush1.bf16.msra.mxu0 %v2671
  %2762 = vmatprep.subr.bf16.mxu0 0
  %2763 = vmatpush1.bf16.msra.mxu0 0
  %2764 = vmatprep.subr.bf16.mxu0 0
  %2765 = vmatpush1.bf16.msra.mxu0 0
  %2766 = vmatprep.subr.bf16.mxu0 0
  %2767 = vmatpush1.bf16.msra.mxu0 0
  %2768 = vmatprep.subr.bf16.mxu0 0
  %2769 = vmatpush1.bf16.msra.mxu0 0
  %2770 = vmatprep.subr.bf16.mxu0 0
  %2771 = vmatpush1.bf16.msra.mxu0 0
  %2772 = vmatprep.subr.bf16.mxu0 0
  %2773 = vmatpush1.bf16.msra.mxu0 0
  %2774 = vmatprep.subr.bf16.mxu0 0
  %2775 = vmatpush1.bf16.msra.mxu0 0
  %2776 = vmatprep.subr.bf16.mxu0 0
  %2777 = vmatpush1.bf16.msra.mxu0 0
  %2778 = vmatprep.mubr.bf16.mxu0 0
  %2779 = vmatmul.mubr.bf16.gmra.mrb[0].mxu0 %v1502
  %v2780 = vpop.f32.mrb[0].mxu0
  %v2781 = vadd.f32 %v2536, %v2780
  %v2782 = vpop.f32.mrb[0].mxu0
  %v2783 = vadd.f32 %v2540, %v2782
  %v2784 = vpop.f32.mrb[0].mxu0
  %v2785 = vpop.f32.mrb[0].mxu0
  %2786 = vdwg.mxu0
  %v2787 = vxor.u32 %v2740, 2147483648
  %v2788 = vxor.u32 %v2742, 2147483648
  %v2789 = vxor.u32 %v2781, 2147483648
  %v2790 = vxor.u32 %v2783, 2147483648
  %v2791 = vmul.f32 %v2787, 1.442695
  %v2792 = vpow.pop %v2791
  %v2793 = vmul.f32 %v2788, 1.442695
  %v2794 = vpow.pop %v2793
  %v2795 = vmul.f32 %v2789, 1.442695
  %v2796 = vpow.pop %v2795
  %v2797 = vmul.f32 %v2790, 1.442695
  %v2798 = vpow.pop %v2797
  %v2799 = vadd.f32 %v2792, 1.0
  %v2800 = vadd.f32 %v2794, 1.0
  %v2801 = vadd.f32 %v2796, 1.0
  %v2802 = vadd.f32 %v2798, 1.0
  %v2803 = vrcp.pop %v2799
  %v2804 = vmul.f32 1.0, %v2803
  %v2805 = vrcp.pop %v2800
  %v2806 = vmul.f32 1.0, %v2805
  %v2807 = vrcp.pop %v2801
  %v2808 = vmul.f32 1.0, %v2807
  %v2809 = vrcp.pop %v2802
  %v2810 = vmul.f32 1.0, %v2809
  %v2811 = vld [vmem:[%s3 + $0x8] sm:$0xf]
  %v2812 = vunpack.c.l.bf16 %v2811
  %v2817 = vcombine.low %v2804, %v2806
  %v2818 = vcombine.low %v2808, %v2810
  %v2820 = vunpack.c.l.s4 1983009808
  %v2821 = vunpack.c.0.s8 %v2820
  %v2822 = vlaneseq
  %v2823 = vshrl.u32 %v2822, 7
  %v2824 = vsub.s32 %v2821, %v2823
  %v2825 = vrot.slane %v2817, %v2824
  %v2827 = vunpack.c.l.s4 1983009808
  %v2828 = vunpack.c.0.s8 %v2827
  %v2829 = vlaneseq
  %v2830 = vshrl.u32 %v2829, 7
  %v2831 = vsub.s32 %v2828, %v2830
  %v2832 = vrot.slane %v2818, %v2831
  %v2833 = vcombine.low %v2825, %v2832
  %v2835 = vmul.f32 %v2812, %v2833
  %v2836 = vld [vmem:[%s2 + $0x8] sm:$0xf]
  %v2837 = vunpack.c.l.bf16 %v2836
  %v2838 = vsub.f32 %v2812, %v2837
  %v2839 = vld [vmem:[%s1 + $0x8] sm:$0xf]
  %v2840 = vunpack.c.l.bf16 %v2839
  %v2841 = vsub.f32 %v2812, %v2840
  %v2842 = vmul.f32 %v2838, %v2835
  %v2843 = vmul.f32 %v2841, %v2835
  %v2844 = vmul.f32 %v2842, %v2842
  %v2846 = vcombine.high %v2844, %v2844
  %v2848 = vunpack.c.l.s4 1983009808
  %v2849 = vunpack.c.0.s8 %v2848
  %v2850 = vlaneseq
  %v2851 = vshrl.u32 %v2850, 7
  %v2852 = vsub.s32 %v2849, %v2851
  %v2853 = vrot.slane %v2844, %v2852
  %v2855 = vunpack.c.l.s4 1983009808
  %v2856 = vunpack.c.0.s8 %v2855
  %v2857 = vlaneseq
  %v2858 = vshrl.u32 %v2857, 7
  %v2859 = vsub.s32 %v2856, %v2858
  %v2860 = vrot.slane %v2846, %v2859
  %v2861 = vcombine.high %v2853, %v2853
  %v2862 = vcombine.high %v2860, %v2860
  %v2867 = vsel %vm1879, %v2853, 0.0
  %v2868 = vsel %vm1879, %v2861, 0.0
  %v2869 = vadd.f32 %v2867, %v2868
  %v2870 = vsel %vm1879, %v2860, 0.0
  %v2871 = vadd.f32 %v2869, %v2870
  %v2872 = vsel %vm1879, %v2862, 0.0
  %v2873 = vadd.f32 %v2871, %v2872
  %2874 = vadd.xlane.f32.xlu0 %v2873
  %v2875 = vpop.xlane.xlu0 %2874
  %v2876 = vadd.f32 %v2382, %v2875
  %v2877 = vmul.f32 %v2843, %v2843
  %v2879 = vcombine.high %v2877, %v2877
  %v2881 = vunpack.c.l.s4 1983009808
  %v2882 = vunpack.c.0.s8 %v2881
  %v2883 = vlaneseq
  %v2884 = vshrl.u32 %v2883, 7
  %v2885 = vsub.s32 %v2882, %v2884
  %v2886 = vrot.slane %v2877, %v2885
  %v2888 = vunpack.c.l.s4 1983009808
  %v2889 = vunpack.c.0.s8 %v2888
  %v2890 = vlaneseq
  %v2891 = vshrl.u32 %v2890, 7
  %v2892 = vsub.s32 %v2889, %v2891
  %v2893 = vrot.slane %v2879, %v2892
  %v2894 = vcombine.high %v2886, %v2886
  %v2895 = vcombine.high %v2893, %v2893
  %v2900 = vsel %vm1879, %v2886, 0.0
  %v2901 = vsel %vm1879, %v2894, 0.0
  %v2902 = vadd.f32 %v2900, %v2901
  %v2903 = vsel %vm1879, %v2893, 0.0
  %v2904 = vadd.f32 %v2902, %v2903
  %v2905 = vsel %vm1879, %v2895, 0.0
  %v2906 = vadd.f32 %v2904, %v2905
  %2907 = vadd.xlane.f32.xlu0 %v2906
  %v2908 = vpop.xlane.xlu0 %2907
  %v2909 = vadd.f32 %v2415, %v2908
  %v2910 = vmul.f32 %v2838, %v2838
  %v2912 = vcombine.high %v2910, %v2910
  %v2914 = vunpack.c.l.s4 1983009808
  %v2915 = vunpack.c.0.s8 %v2914
  %v2916 = vlaneseq
  %v2917 = vshrl.u32 %v2916, 7
  %v2918 = vsub.s32 %v2915, %v2917
  %v2919 = vrot.slane %v2910, %v2918
  %v2921 = vunpack.c.l.s4 1983009808
  %v2922 = vunpack.c.0.s8 %v2921
  %v2923 = vlaneseq
  %v2924 = vshrl.u32 %v2923, 7
  %v2925 = vsub.s32 %v2922, %v2924
  %v2926 = vrot.slane %v2912, %v2925
  %v2927 = vcombine.high %v2919, %v2919
  %v2928 = vcombine.high %v2926, %v2926
  %v2933 = vsel %vm1879, %v2919, 0.0
  %v2934 = vsel %vm1879, %v2927, 0.0
  %v2935 = vadd.f32 %v2933, %v2934
  %v2936 = vsel %vm1879, %v2926, 0.0
  %v2937 = vadd.f32 %v2935, %v2936
  %v2938 = vsel %vm1879, %v2928, 0.0
  %v2939 = vadd.f32 %v2937, %v2938
  %2940 = vadd.xlane.f32.xlu0 %v2939
  %v2941 = vpop.xlane.xlu0 %2940
  %v2942 = vadd.f32 %v2448, %v2941
  %v2944 = vcombine.high %v2835, %v2835
  %v2946 = vunpack.c.l.s4 1983009808
  %v2947 = vunpack.c.0.s8 %v2946
  %v2948 = vlaneseq
  %v2949 = vshrl.u32 %v2948, 7
  %v2950 = vsub.s32 %v2947, %v2949
  %v2951 = vrot.slane %v2835, %v2950
  %v2953 = vunpack.c.l.s4 1983009808
  %v2954 = vunpack.c.0.s8 %v2953
  %v2955 = vlaneseq
  %v2956 = vshrl.u32 %v2955, 7
  %v2957 = vsub.s32 %v2954, %v2956
  %v2958 = vrot.slane %v2944, %v2957
  %v2959 = vcombine.high %v2951, %v2951
  %v2960 = vcombine.high %v2958, %v2958
  %v2965 = vsel %vm1879, %v2951, 0.0
  %v2966 = vsel %vm1879, %v2959, 0.0
  %v2967 = vadd.f32 %v2965, %v2966
  %v2968 = vsel %vm1879, %v2958, 0.0
  %v2969 = vadd.f32 %v2967, %v2968
  %v2970 = vsel %vm1879, %v2960, 0.0
  %v2971 = vadd.f32 %v2969, %v2970
  %2972 = vadd.xlane.f32.xlu0 %v2971
  %v2973 = vpop.xlane.xlu0 %2972
  %v2974 = vadd.f32 %v2480, %v2973
  %v2975 = vsel %vm1879, %v2951, -inf
  %v2976 = vsel %vm1879, %v2959, -inf
  %v2977 = vsel %vm1879, %v2958, -inf
  %v2978 = vsel %vm1879, %v2960, -inf
  %v2979 = vmax.f32 %v2975, %v2976
  %v2980 = vmax.f32 %v2977, %v2978
  %v2981 = vmax.f32 %v2979, %v2980
  %2982 = vmax.xlane.f32.xlu0 %v2981
  %v2983 = vpop.xlane.xlu0 %2982
  %v2984 = vmax.f32 %v2490, %v2983
  %v2985 = vld [vmem:[%s6 + $0x30] sm:$0xff]
  %v2986 = vld [vmem:[%s6 + $0x38] sm:$0xff]
  %v2987 = vld [vmem:[%s6 + $0x70] sm:$0xff]
  %v2988 = vld [vmem:[%s6 + $0x78] sm:$0xff]
  %v2989 = vld [vmem:[%s6 + $0xb0] sm:$0xff]
  %v2990 = vld [vmem:[%s6 + $0xb8] sm:$0xff]
  %v2991 = vld [vmem:[%s6 + $0xf0] sm:$0xff]
  %v2992 = vld [vmem:[%s6 + $0xf8] sm:$0xff]
  %v2993 = vld [vmem:[%s6 + $0x130] sm:$0xff]
  %v2994 = vld [vmem:[%s6 + $0x138] sm:$0xff]
  %v2995 = vld [vmem:[%s6 + $0x170] sm:$0xff]
  %v2996 = vld [vmem:[%s6 + $0x178] sm:$0xff]
  %v2997 = vld [vmem:[%s6 + $0x1b0] sm:$0xff]
  %v2998 = vld [vmem:[%s6 + $0x1b8] sm:$0xff]
  %v2999 = vld [vmem:[%s6 + $0x1f0] sm:$0xff]
  %v3000 = vld [vmem:[%s6 + $0x1f8] sm:$0xff]
  %v3001 = vld [vmem:[%s6 + $0x230] sm:$0xff]
  %v3002 = vld [vmem:[%s6 + $0x238] sm:$0xff]
  %v3003 = vld [vmem:[%s6 + $0x270] sm:$0xff]
  %v3004 = vld [vmem:[%s6 + $0x278] sm:$0xff]
  %v3005 = vld [vmem:[%s6 + $0x2b0] sm:$0xff]
  %v3006 = vld [vmem:[%s6 + $0x2b8] sm:$0xff]
  %v3007 = vld [vmem:[%s6 + $0x2f0] sm:$0xff]
  %v3008 = vld [vmem:[%s6 + $0x2f8] sm:$0xff]
  %v3009 = vld [vmem:[%s6 + $0x330] sm:$0xff]
  %v3010 = vld [vmem:[%s6 + $0x338] sm:$0xff]
  %v3011 = vld [vmem:[%s6 + $0x370] sm:$0xff]
  %v3012 = vld [vmem:[%s6 + $0x378] sm:$0xff]
  %v3013 = vld [vmem:[%s6 + $0x3b0] sm:$0xff]
  %v3014 = vld [vmem:[%s6 + $0x3b8] sm:$0xff]
  %v3015 = vld [vmem:[%s6 + $0x3f0] sm:$0xff]
  %v3016 = vld [vmem:[%s6 + $0x3f8] sm:$0xff]
  %v3017 = vld [vmem:[%s7 + $0xc] sm:$0xf]
  %v3019 = vlaneseq
  %v3020 = vshrl.u32 %v3019, 7
  %v3021 = vsub.s32 0, %v3020
  %v3022 = vrot.slane %v3017, %v3021
  %v3023 = vlaneseq
  %v3024 = vshrl.u32 %v3023, 7
  %v3025 = vsub.s32 1, %v3024
  %v3026 = vrot.slane %v3017, %v3025
  %v3027 = vlaneseq
  %v3028 = vshrl.u32 %v3027, 7
  %v3029 = vsub.s32 2, %v3028
  %v3030 = vrot.slane %v3017, %v3029
  %v3031 = vlaneseq
  %v3032 = vshrl.u32 %v3031, 7
  %v3033 = vsub.s32 3, %v3032
  %v3034 = vrot.slane %v3017, %v3033
  %v3071 = vunpack.c.l.b16 %v2985
  %v3072 = vunpack.c.h.b16 %v2985
  %v3073 = vunpack.c.l.b16 %v2986
  %v3074 = vunpack.c.h.b16 %v2986
  %v3075 = vunpack.c.l.b16 %v2987
  %v3076 = vunpack.c.h.b16 %v2987
  %v3077 = vunpack.c.l.b16 %v2988
  %v3078 = vunpack.c.h.b16 %v2988
  %v3079 = vunpack.c.l.b16 %v2989
  %v3080 = vunpack.c.h.b16 %v2989
  %v3081 = vunpack.c.l.b16 %v2990
  %v3082 = vunpack.c.h.b16 %v2990
  %v3083 = vunpack.c.l.b16 %v2991
  %v3084 = vunpack.c.h.b16 %v2991
  %v3085 = vunpack.c.l.b16 %v2992
  %v3086 = vunpack.c.h.b16 %v2992
  %v3087 = vunpack.c.l.b16 %v2993
  %v3088 = vunpack.c.h.b16 %v2993
  %v3089 = vunpack.c.l.b16 %v2994
  %v3090 = vunpack.c.h.b16 %v2994
  %v3091 = vunpack.c.l.b16 %v2995
  %v3092 = vunpack.c.h.b16 %v2995
  %v3093 = vunpack.c.l.b16 %v2996
  %v3094 = vunpack.c.h.b16 %v2996
  %v3095 = vunpack.c.l.b16 %v2997
  %v3096 = vunpack.c.h.b16 %v2997
  %v3097 = vunpack.c.l.b16 %v2998
  %v3098 = vunpack.c.h.b16 %v2998
  %v3099 = vunpack.c.l.b16 %v2999
  %v3100 = vunpack.c.h.b16 %v2999
  %v3101 = vunpack.c.l.b16 %v3000
  %v3102 = vunpack.c.h.b16 %v3000
  %v3103 = vunpack.c.l.b16 %v3001
  %v3104 = vunpack.c.h.b16 %v3001
  %v3105 = vunpack.c.l.b16 %v3002
  %v3106 = vunpack.c.h.b16 %v3002
  %v3107 = vunpack.c.l.b16 %v3003
  %v3108 = vunpack.c.h.b16 %v3003
  %v3109 = vunpack.c.l.b16 %v3004
  %v3110 = vunpack.c.h.b16 %v3004
  %v3111 = vunpack.c.l.b16 %v3005
  %v3112 = vunpack.c.h.b16 %v3005
  %v3113 = vunpack.c.l.b16 %v3006
  %v3114 = vunpack.c.h.b16 %v3006
  %v3115 = vunpack.c.l.b16 %v3007
  %v3116 = vunpack.c.h.b16 %v3007
  %v3117 = vunpack.c.l.b16 %v3008
  %v3118 = vunpack.c.h.b16 %v3008
  %v3119 = vunpack.c.l.b16 %v3009
  %v3120 = vunpack.c.h.b16 %v3009
  %v3121 = vunpack.c.l.b16 %v3010
  %v3122 = vunpack.c.h.b16 %v3010
  %v3123 = vunpack.c.l.b16 %v3011
  %v3124 = vunpack.c.h.b16 %v3011
  %v3125 = vunpack.c.l.b16 %v3012
  %v3126 = vunpack.c.h.b16 %v3012
  %v3127 = vunpack.c.l.b16 %v3013
  %v3128 = vunpack.c.h.b16 %v3013
  %v3129 = vunpack.c.l.b16 %v3014
  %v3130 = vunpack.c.h.b16 %v3014
  %v3131 = vunpack.c.l.b16 %v3015
  %v3132 = vunpack.c.h.b16 %v3015
  %v3133 = vunpack.c.l.b16 %v3016
  %v3134 = vunpack.c.h.b16 %v3016
  %v3135 = vpack.c.b16 %v3075, %v3071
  %v3136 = vpack.c.b16 %v3076, %v3072
  %v3137 = vpack.c.b16 %v3077, %v3073
  %v3138 = vpack.c.b16 %v3078, %v3074
  %v3139 = vpack.c.b16 %v3083, %v3079
  %v3140 = vpack.c.b16 %v3084, %v3080
  %v3141 = vpack.c.b16 %v3085, %v3081
  %v3142 = vpack.c.b16 %v3086, %v3082
  %v3143 = vpack.c.b16 %v3091, %v3087
  %v3144 = vpack.c.b16 %v3092, %v3088
  %v3145 = vpack.c.b16 %v3093, %v3089
  %v3146 = vpack.c.b16 %v3094, %v3090
  %v3147 = vpack.c.b16 %v3099, %v3095
  %v3148 = vpack.c.b16 %v3100, %v3096
  %v3149 = vpack.c.b16 %v3101, %v3097
  %v3150 = vpack.c.b16 %v3102, %v3098
  %v3151 = vpack.c.b16 %v3107, %v3103
  %v3152 = vpack.c.b16 %v3108, %v3104
  %v3153 = vpack.c.b16 %v3109, %v3105
  %v3154 = vpack.c.b16 %v3110, %v3106
  %v3155 = vpack.c.b16 %v3115, %v3111
  %v3156 = vpack.c.b16 %v3116, %v3112
  %v3157 = vpack.c.b16 %v3117, %v3113
  %v3158 = vpack.c.b16 %v3118, %v3114
  %v3159 = vpack.c.b16 %v3123, %v3119
  %v3160 = vpack.c.b16 %v3124, %v3120
  %v3161 = vpack.c.b16 %v3125, %v3121
  %v3162 = vpack.c.b16 %v3126, %v3122
  %v3163 = vpack.c.b16 %v3131, %v3127
  %v3164 = vpack.c.b16 %v3132, %v3128
  %v3165 = vpack.c.b16 %v3133, %v3129
  %v3166 = vpack.c.b16 %v3134, %v3130
  %3199 = vmatprep.subr.bf16.mxu0 %v3136
  %3200 = vmatpush1.bf16.msra.mxu0 %v3135
  %3201 = vmatprep.subr.bf16.mxu0 %v3140
  %3202 = vmatpush1.bf16.msra.mxu0 %v3139
  %3203 = vmatprep.subr.bf16.mxu0 %v3144
  %3204 = vmatpush1.bf16.msra.mxu0 %v3143
  %3205 = vmatprep.subr.bf16.mxu0 %v3148
  %3206 = vmatpush1.bf16.msra.mxu0 %v3147
  %3207 = vmatprep.subr.bf16.mxu0 %v3152
  %3208 = vmatpush1.bf16.msra.mxu0 %v3151
  %3209 = vmatprep.subr.bf16.mxu0 %v3156
  %3210 = vmatpush1.bf16.msra.mxu0 %v3155
  %3211 = vmatprep.subr.bf16.mxu0 %v3160
  %3212 = vmatpush1.bf16.msra.mxu0 %v3159
  %3213 = vmatprep.subr.bf16.mxu0 %v3164
  %3214 = vmatpush1.bf16.msra.mxu0 %v3163
  %3215 = vmatprep.subr.bf16.mxu0 0
  %3216 = vmatpush1.bf16.msra.mxu0 0
  %3217 = vmatprep.subr.bf16.mxu0 0
  %3218 = vmatpush1.bf16.msra.mxu0 0
  %3219 = vmatprep.subr.bf16.mxu0 0
  %3220 = vmatpush1.bf16.msra.mxu0 0
  %3221 = vmatprep.subr.bf16.mxu0 0
  %3222 = vmatpush1.bf16.msra.mxu0 0
  %3223 = vmatprep.subr.bf16.mxu0 0
  %3224 = vmatpush1.bf16.msra.mxu0 0
  %3225 = vmatprep.subr.bf16.mxu0 0
  %3226 = vmatpush1.bf16.msra.mxu0 0
  %3227 = vmatprep.subr.bf16.mxu0 0
  %3228 = vmatpush1.bf16.msra.mxu0 0
  %3229 = vmatprep.subr.bf16.mxu0 0
  %3230 = vmatpush1.bf16.msra.mxu0 0
  %3231 = vmatprep.mubr.bf16.mxu0 0
  %3232 = vmatmul.mubr.bf16.gmra.mrb[0].mxu0 %v1502
  %v3233 = vpop.f32.mrb[0].mxu0
  %v3234 = vadd.f32 %v3022, %v3233
  %v3235 = vpop.f32.mrb[0].mxu0
  %v3236 = vadd.f32 %v3026, %v3235
  %v3237 = vpop.f32.mrb[0].mxu0
  %v3238 = vpop.f32.mrb[0].mxu0
  %3239 = vdwg.mxu0
  %3240 = vmatprep.subr.bf16.mxu0 %v3138
  %3241 = vmatpush1.bf16.msra.mxu0 %v3137
  %3242 = vmatprep.subr.bf16.mxu0 %v3142
  %3243 = vmatpush1.bf16.msra.mxu0 %v3141
  %3244 = vmatprep.subr.bf16.mxu0 %v3146
  %3245 = vmatpush1.bf16.msra.mxu0 %v3145
  %3246 = vmatprep.subr.bf16.mxu0 %v3150
  %3247 = vmatpush1.bf16.msra.mxu0 %v3149
  %3248 = vmatprep.subr.bf16.mxu0 %v3154
  %3249 = vmatpush1.bf16.msra.mxu0 %v3153
  %3250 = vmatprep.subr.bf16.mxu0 %v3158
  %3251 = vmatpush1.bf16.msra.mxu0 %v3157
  %3252 = vmatprep.subr.bf16.mxu0 %v3162
  %3253 = vmatpush1.bf16.msra.mxu0 %v3161
  %3254 = vmatprep.subr.bf16.mxu0 %v3166
  %3255 = vmatpush1.bf16.msra.mxu0 %v3165
  %3256 = vmatprep.subr.bf16.mxu0 0
  %3257 = vmatpush1.bf16.msra.mxu0 0
  %3258 = vmatprep.subr.bf16.mxu0 0
  %3259 = vmatpush1.bf16.msra.mxu0 0
  %3260 = vmatprep.subr.bf16.mxu0 0
  %3261 = vmatpush1.bf16.msra.mxu0 0
  %3262 = vmatprep.subr.bf16.mxu0 0
  %3263 = vmatpush1.bf16.msra.mxu0 0
  %3264 = vmatprep.subr.bf16.mxu0 0
  %3265 = vmatpush1.bf16.msra.mxu0 0
  %3266 = vmatprep.subr.bf16.mxu0 0
  %3267 = vmatpush1.bf16.msra.mxu0 0
  %3268 = vmatprep.subr.bf16.mxu0 0
  %3269 = vmatpush1.bf16.msra.mxu0 0
  %3270 = vmatprep.subr.bf16.mxu0 0
  %3271 = vmatpush1.bf16.msra.mxu0 0
  %3272 = vmatprep.mubr.bf16.mxu0 0
  %3273 = vmatmul.mubr.bf16.gmra.mrb[0].mxu0 %v1502
  %v3274 = vpop.f32.mrb[0].mxu0
  %v3275 = vadd.f32 %v3030, %v3274
  %v3276 = vpop.f32.mrb[0].mxu0
  %v3277 = vadd.f32 %v3034, %v3276
  %v3278 = vpop.f32.mrb[0].mxu0
  %v3279 = vpop.f32.mrb[0].mxu0
  %3280 = vdwg.mxu0
  %v3281 = vxor.u32 %v3234, 2147483648
  %v3282 = vxor.u32 %v3236, 2147483648
  %v3283 = vxor.u32 %v3275, 2147483648
  %v3284 = vxor.u32 %v3277, 2147483648
  %v3285 = vmul.f32 %v3281, 1.442695
  %v3286 = vpow.pop %v3285
  %v3287 = vmul.f32 %v3282, 1.442695
  %v3288 = vpow.pop %v3287
  %v3289 = vmul.f32 %v3283, 1.442695
  %v3290 = vpow.pop %v3289
  %v3291 = vmul.f32 %v3284, 1.442695
  %v3292 = vpow.pop %v3291
  %v3293 = vadd.f32 %v3286, 1.0
  %v3294 = vadd.f32 %v3288, 1.0
  %v3295 = vadd.f32 %v3290, 1.0
  %v3296 = vadd.f32 %v3292, 1.0
  %v3297 = vrcp.pop %v3293
  %v3298 = vmul.f32 1.0, %v3297
  %v3299 = vrcp.pop %v3294
  %v3300 = vmul.f32 1.0, %v3299
  %v3301 = vrcp.pop %v3295
  %v3302 = vmul.f32 1.0, %v3301
  %v3303 = vrcp.pop %v3296
  %v3304 = vmul.f32 1.0, %v3303
  %v3305 = vld [vmem:[%s3 + $0xc] sm:$0xf]
  %v3306 = vunpack.c.l.bf16 %v3305
  %v3311 = vcombine.low %v3298, %v3300
  %v3312 = vcombine.low %v3302, %v3304
  %v3314 = vunpack.c.l.s4 1983009808
  %v3315 = vunpack.c.0.s8 %v3314
  %v3316 = vlaneseq
  %v3317 = vshrl.u32 %v3316, 7
  %v3318 = vsub.s32 %v3315, %v3317
  %v3319 = vrot.slane %v3311, %v3318
  %v3321 = vunpack.c.l.s4 1983009808
  %v3322 = vunpack.c.0.s8 %v3321
  %v3323 = vlaneseq
  %v3324 = vshrl.u32 %v3323, 7
  %v3325 = vsub.s32 %v3322, %v3324
  %v3326 = vrot.slane %v3312, %v3325
  %v3327 = vcombine.low %v3319, %v3326
  %v3329 = vmul.f32 %v3306, %v3327
  %v3330 = vld [vmem:[%s2 + $0xc] sm:$0xf]
  %v3331 = vunpack.c.l.bf16 %v3330
  %v3332 = vsub.f32 %v3306, %v3331
  %v3333 = vld [vmem:[%s1 + $0xc] sm:$0xf]
  %v3334 = vunpack.c.l.bf16 %v3333
  %v3335 = vsub.f32 %v3306, %v3334
  %v3336 = vmul.f32 %v3332, %v3329
  %v3337 = vmul.f32 %v3335, %v3329
  %v3338 = vmul.f32 %v3336, %v3336
  %v3340 = vcombine.high %v3338, %v3338
  %v3342 = vunpack.c.l.s4 1983009808
  %v3343 = vunpack.c.0.s8 %v3342
  %v3344 = vlaneseq
  %v3345 = vshrl.u32 %v3344, 7
  %v3346 = vsub.s32 %v3343, %v3345
  %v3347 = vrot.slane %v3338, %v3346
  %v3349 = vunpack.c.l.s4 1983009808
  %v3350 = vunpack.c.0.s8 %v3349
  %v3351 = vlaneseq
  %v3352 = vshrl.u32 %v3351, 7
  %v3353 = vsub.s32 %v3350, %v3352
  %v3354 = vrot.slane %v3340, %v3353
  %v3355 = vcombine.high %v3347, %v3347
  %v3356 = vcombine.high %v3354, %v3354
  %v3361 = vsel %vm1879, %v3347, 0.0
  %v3362 = vsel %vm1879, %v3355, 0.0
  %v3363 = vadd.f32 %v3361, %v3362
  %v3364 = vsel %vm1879, %v3354, 0.0
  %v3365 = vadd.f32 %v3363, %v3364
  %v3366 = vsel %vm1879, %v3356, 0.0
  %v3367 = vadd.f32 %v3365, %v3366
  %3368 = vadd.xlane.f32.xlu0 %v3367
  %v3369 = vpop.xlane.xlu0 %3368
  %v3370 = vadd.f32 %v2876, %v3369
  %v3371 = vmul.f32 %v3337, %v3337
  %v3373 = vcombine.high %v3371, %v3371
  %v3375 = vunpack.c.l.s4 1983009808
  %v3376 = vunpack.c.0.s8 %v3375
  %v3377 = vlaneseq
  %v3378 = vshrl.u32 %v3377, 7
  %v3379 = vsub.s32 %v3376, %v3378
  %v3380 = vrot.slane %v3371, %v3379
  %v3382 = vunpack.c.l.s4 1983009808
  %v3383 = vunpack.c.0.s8 %v3382
  %v3384 = vlaneseq
  %v3385 = vshrl.u32 %v3384, 7
  %v3386 = vsub.s32 %v3383, %v3385
  %v3387 = vrot.slane %v3373, %v3386
  %v3388 = vcombine.high %v3380, %v3380
  %v3389 = vcombine.high %v3387, %v3387
  %v3394 = vsel %vm1879, %v3380, 0.0
  %v3395 = vsel %vm1879, %v3388, 0.0
  %v3396 = vadd.f32 %v3394, %v3395
  %v3397 = vsel %vm1879, %v3387, 0.0
  %v3398 = vadd.f32 %v3396, %v3397
  %v3399 = vsel %vm1879, %v3389, 0.0
  %v3400 = vadd.f32 %v3398, %v3399
  %3401 = vadd.xlane.f32.xlu0 %v3400
  %v3402 = vpop.xlane.xlu0 %3401
  %v3403 = vadd.f32 %v2909, %v3402
  %v3404 = vmul.f32 %v3332, %v3332
  %v3406 = vcombine.high %v3404, %v3404
  %v3408 = vunpack.c.l.s4 1983009808
  %v3409 = vunpack.c.0.s8 %v3408
  %v3410 = vlaneseq
  %v3411 = vshrl.u32 %v3410, 7
  %v3412 = vsub.s32 %v3409, %v3411
  %v3413 = vrot.slane %v3404, %v3412
  %v3415 = vunpack.c.l.s4 1983009808
  %v3416 = vunpack.c.0.s8 %v3415
  %v3417 = vlaneseq
  %v3418 = vshrl.u32 %v3417, 7
  %v3419 = vsub.s32 %v3416, %v3418
  %v3420 = vrot.slane %v3406, %v3419
  %v3421 = vcombine.high %v3413, %v3413
  %v3422 = vcombine.high %v3420, %v3420
  %v3427 = vsel %vm1879, %v3413, 0.0
  %v3428 = vsel %vm1879, %v3421, 0.0
  %v3429 = vadd.f32 %v3427, %v3428
  %v3430 = vsel %vm1879, %v3420, 0.0
  %v3431 = vadd.f32 %v3429, %v3430
  %v3432 = vsel %vm1879, %v3422, 0.0
  %v3433 = vadd.f32 %v3431, %v3432
  %3434 = vadd.xlane.f32.xlu0 %v3433
  %v3435 = vpop.xlane.xlu0 %3434
  %v3436 = vadd.f32 %v2942, %v3435
  %v3438 = vcombine.high %v3329, %v3329
  %v3440 = vunpack.c.l.s4 1983009808
  %v3441 = vunpack.c.0.s8 %v3440
  %v3442 = vlaneseq
  %v3443 = vshrl.u32 %v3442, 7
  %v3444 = vsub.s32 %v3441, %v3443
  %v3445 = vrot.slane %v3329, %v3444
  %v3447 = vunpack.c.l.s4 1983009808
  %v3448 = vunpack.c.0.s8 %v3447
  %v3449 = vlaneseq
  %v3450 = vshrl.u32 %v3449, 7
  %v3451 = vsub.s32 %v3448, %v3450
  %v3452 = vrot.slane %v3438, %v3451
  %v3453 = vcombine.high %v3445, %v3445
  %v3454 = vcombine.high %v3452, %v3452
  %v3459 = vsel %vm1879, %v3445, 0.0
  %v3460 = vsel %vm1879, %v3453, 0.0
  %v3461 = vadd.f32 %v3459, %v3460
  %v3462 = vsel %vm1879, %v3452, 0.0
  %v3463 = vadd.f32 %v3461, %v3462
  %v3464 = vsel %vm1879, %v3454, 0.0
  %v3465 = vadd.f32 %v3463, %v3464
  %3466 = vadd.xlane.f32.xlu0 %v3465
  %v3467 = vpop.xlane.xlu0 %3466
  %v3468 = vadd.f32 %v2974, %v3467
  %v3469 = vsel %vm1879, %v3445, -inf
  %v3470 = vsel %vm1879, %v3453, -inf
  %v3471 = vsel %vm1879, %v3452, -inf
  %v3472 = vsel %vm1879, %v3454, -inf
  %v3473 = vmax.f32 %v3469, %v3470
  %v3474 = vmax.f32 %v3471, %v3472
  %v3475 = vmax.f32 %v3473, %v3474
  %3476 = vmax.xlane.f32.xlu0 %v3475
  %v3477 = vpop.xlane.xlu0 %3476
  %v3478 = vmax.f32 %v2984, %v3477
  %v3479 = vmul.f32 %v3468, 0.00048828125
  %v3480 = vld [vmem:[%s8] sm:$0xff]
  %v3481 = vlaneseq
  %v3482 = vshrl.u32 %v3481, 7
  %v3483 = vsub.s32 0, %v3482
  %v3484 = vrot.slane %v3480, %v3483
  %v3485 = vmul.f32 %v3478, %v3484
  %v3486 = vlaneseq
  %v3487 = vshrl.u32 %v3486, 7
  %v3488 = vsub.s32 1, %v3487
  %v3489 = vrot.slane %v3480, %v3488
  %v3490 = vmul.f32 %v3479, %v3489
  %v3491 = vadd.f32 %v3485, %v3490
  %v3492 = vlaneseq
  %v3493 = vshrl.u32 %v3492, 7
  %v3494 = vsub.s32 2, %v3493
  %v3495 = vrot.slane %v3480, %v3494
  %v3496 = vadd.f32 %v3491, %v3495
  %v3497 = vxor.u32 %v3496, 2147483648
  %v3498 = vmul.f32 %v3497, 1.442695
  %v3499 = vpow.pop %v3498
  %v3500 = vadd.f32 %v3499, 1.0
  %v3501 = vrcp.pop %v3500
  %v3502 = vmul.f32 1.0, %v3501
  %v3503 = vmul.f32 %v3502, %v3502
  %v3504 = vsel %vm1879, %v3503, 0.0
  %3505 = vadd.xlane.f32.xlu0 %v3504
  %v3506 = vpop.xlane.xlu0 %3505
  %s3507 = smul.u32 0, 2
  %v3508 = vlaneseq
  %v3509 = vshrl.u32 %v3508, 7
  %v3510 = vstv %s3507
  %v3511 = vadd.s32 %v3510, %v3509
  %s3512 = sld [smem:[#allocation3]]
  %v3513 = vstv %s3512
  %vm3514 = vcmp.lt.s32.totalorder %v3511, %v3513
  %v3515 = vmul.f32 %v3370, %v3506
  %v3516 = vsel %vm3514, %v3515, 0.0
  %v3517 = vsel %vm1879, %v3516, 0.0
  %v3518 = vrot.slane %v3517, 4
  %v3519 = vadd.f32 %v3517, %v3518
  %v3520 = vrot.slane %v3519, 2
  %v3521 = vadd.f32 %v3519, %v3520
  %v3522 = vrot.slane %v3521, 1
  %v3523 = vadd.f32 %v3521, %v3522
  %v3524 = vmul.f32 %v3403, %v3506
  %v3525 = vsel %vm3514, %v3524, 0.0
  %v3526 = vsel %vm1879, %v3525, 0.0
  %v3527 = vrot.slane %v3526, 4
  %v3528 = vadd.f32 %v3526, %v3527
  %v3529 = vrot.slane %v3528, 2
  %v3530 = vadd.f32 %v3528, %v3529
  %v3531 = vrot.slane %v3530, 1
  %v3532 = vadd.f32 %v3530, %v3531
  %v3533 = vmul.f32 %v3436, 49.0
  %v3534 = vsel %vm3514, %v3533, 0.0
  %v3535 = vsel %vm1879, %v3534, 0.0
  %v3536 = vrot.slane %v3535, 4
  %v3537 = vadd.f32 %v3535, %v3536
  %v3538 = vrot.slane %v3537, 2
  %v3539 = vadd.f32 %v3537, %v3538
  %v3540 = vrot.slane %v3539, 1
  %v3541 = vadd.f32 %v3539, %v3540
  %v3542 = vlaneseq
  %v3543 = vand.u32 %v3542, 127
  %vm3544 = vcmp.eq.s32.totalorder %v3509, 0
  %vm3545 = vcmp.eq.s32.totalorder %v3543, 0
  %vm3546 = vmand %vm3544, %vm3545
  %v3547 = vsel %vm3546, %v3523, 0.0
  %vm3548 = vcmp.eq.s32.totalorder %v3543, 1
  %vm3549 = vmand %vm3544, %vm3548
  %v3550 = vsel %vm3549, %v3532, 0.0
  %v3551 = vadd.f32 %v3547, %v3550
  %vm3552 = vcmp.eq.s32.totalorder %v3543, 2
  %vm3553 = vmand %vm3544, %vm3552
  %v3554 = vsel %vm3553, %v3541, 0.0
  %v3555 = vadd.f32 %v3551, %v3554
  %3556 = vst [vmem:[%s9] sm:$0xff] %v3555
  // Predicated region
  $region34: #{attention_loss.1} parent=0 // pred_check
    _
  $region35: #{attention_loss.1} parent=0 // pred_check_branch
    %3558 = sbr.rel (0) target = $region37
  $region36: #{attention_loss.1} parent=0 // pred_region
    _
  $region37: #{attention_loss.1} parent=0 // pred_fallthru
    _
  // Predicated region
  $region38: #{attention_loss.1} parent=0 // pred_check
    _
  $region39: #{attention_loss.1} parent=0 // pred_check_branch
    %3560 = sbr.rel (0) target = $region41
  $region40: #{attention_loss.1} parent=0 // pred_region
    _
  $region41: #{attention_loss.1} parent=0 // pred_fallthru
    _

</llo_original>
